<compile_context>
chip_gen: v6e
topology: v6e:2x2x1
jax: 0.10.0
libtpu: 0.0.40
codegen_flags: <defaults>
</compile_context>

<pallas_src>
import functools
import math

import jax
import jax.numpy as jnp
from jax import lax
from jax.experimental import pallas as pl
from jax.experimental.pallas import tpu as pltpu


# ---------------------------------------------------------------------------
# Fused Pallas kernel
# ---------------------------------------------------------------------------
def _attblock_kernel(x_ref, w1_ref, b1_ref, w2_ref, b2_ref, w3_ref,
                     a_ref, c_ref, sc_ref, o_ref,
                     xp, h1p, h2p):
    """One batch element per grid step; all intermediates live in VMEM.

    x_ref:  (1, H, W, Cin)   NHWC input tile
    w1_ref: (9, Cin, mid)    DoubleConv conv #1 weights (BN1 folded), tap = dy*3+dx
    b1_ref: (1, mid)
    w2_ref: (9, mid, mid)    DoubleConv conv #2 weights (BN2 folded)
    b2_ref: (1, mid)
    w3_ref: (9, mid)         AttBlock.conv1 (mid -> 1) weights
    a_ref:  (3, OH, H)       row-shifted row-interp matrices   S_dy @ ry
    c_ref:  (3, W, OW)       col-interp matrices with AttBlock.conv2 folded in
    sc_ref: (2,) in SMEM     [conv1 bias b3, conv2 bias b4]
    o_ref:  (1, OH, OW)      sigmoid(attention map), lane-dense on OW
    xp, h1p, h2p:            zero-padded VMEM planes for the 'same' convs
    """
    H, W, Cin = x_ref.shape[1], x_ref.shape[2], x_ref.shape[3]
    mid = w1_ref.shape[2]

    def conv3x3(src_ref, w_ref, b_row, cin):
        # src_ref: (H+2, W+2, cin) zero-padded plane -> (H*W, cout) pre-activation.
        acc = jnp.zeros((H * W, w_ref.shape[2]), jnp.float32)
        for tap in range(9):                       # static unroll; one MXU matmul/tap
            dy, dx = tap // 3, tap % 3
            patch = src_ref[dy:dy + H, dx:dx + W, :]            # (H, W, cin)
            acc = acc + jnp.dot(patch.reshape(H * W, cin), w_ref[tap],
                                preferred_element_type=jnp.float32)
        return acc + b_row

    # ---- DoubleConv, conv #1 (+BN folded) + ReLU --------------------------
    xp[...] = jnp.zeros_like(xp)
    xp[1:H + 1, 1:W + 1, :] = x_ref[0]
    h1 = jnp.maximum(conv3x3(xp, w1_ref, b1_ref[...], Cin), 0.0)    # (H*W, mid)

    # ---- DoubleConv, conv #2 (+BN folded) + ReLU --------------------------
    h1p[...] = jnp.zeros_like(h1p)
    h1p[1:H + 1, 1:W + 1, :] = h1.reshape(H, W, mid)
    h2 = jnp.maximum(conv3x3(h1p, w2_ref, b2_ref[...], mid), 0.0)   # (H*W, mid)

    # ---- AttBlock.conv1 (mid -> 1): per-tap channel reduction -------------
    h2p[...] = jnp.zeros_like(h2p)
    h2p[1:H + 1, 1:W + 1, :] = h2.reshape(H, W, mid)
    h3 = jnp.zeros((H, W), jnp.float32)
    for tap in range(9):
        dy, dx = tap // 3, tap % 3
        patch = h2p[dy:dy + H, dx:dx + W, :]                        # (H, W, mid)
        h3 = h3 + jnp.sum(patch * w3_ref[tap], axis=-1)
    h3 = h3 + sc_ref[0]                                             # conv1 bias

    # ---- bilinear resize (align_corners=True) + AttBlock.conv2 + sigmoid --
    # out = sum_dy (S_dy @ ry) @ h3 @ (sum_dx w4[dy,dx] * rx^T @ S_dx^T) + b4
    acc = jnp.zeros(o_ref.shape[1:], jnp.float32)                   # (OH, OW)
    for dy in range(3):
        t = jnp.dot(a_ref[dy], h3, preferred_element_type=jnp.float32)     # (OH, W)
        acc = acc + jnp.dot(t, c_ref[dy], preferred_element_type=jnp.float32)
    o_ref[0] = jax.nn.sigmoid(acc + sc_ref[1]).astype(o_ref.dtype)


# ---------------------------------------------------------------------------
# Wrapper-side helpers (weight preparation, tiny)
# ---------------------------------------------------------------------------
def interp_matrix(out_size, in_size):
    """Row-interpolation matrix for bilinear resize with align_corners=True."""
    if out_size == 1:
        return jnp.zeros((1, in_size), jnp.float32).at[0, 0].set(1.0)
    src = jnp.arange(out_size, dtype=jnp.float32) * ((in_size - 1) / (out_size - 1))
    i0 = jnp.clip(jnp.floor(src).astype(jnp.int32), 0, in_size - 1)
    i1 = jnp.minimum(i0 + 1, in_size - 1)
    frac = src - i0.astype(jnp.float32)
    rows = jnp.arange(out_size)
    m = jnp.zeros((out_size, in_size), jnp.float32)
    m = m.at[rows, i0].add(1.0 - frac)
    m = m.at[rows, i1].add(frac)
    return m


def _shift_rows(m, d):
    """out[o, :] = m[o + d - 1, :] if in range, else 0 (zero-pad conv semantics)."""
    z = jnp.zeros_like(m)
    if d == 0:
        return z.at[1:].set(m[:-1])
    if d == 1:
        return m
    return z.at[:-1].set(m[1:])


def _shift_cols(m, d):
    """out[:, p] = m[:, p + d - 1] if in range, else 0."""
    z = jnp.zeros_like(m)
    if d == 0:
        return z.at[:, 1:].set(m[:, :-1])
    if d == 1:
        return m
    return z.at[:, :-1].set(m[:, 1:])


# ---------------------------------------------------------------------------
# AttBlock_v1 forward (fused Pallas)
# ---------------------------------------------------------------------------
def attblock_v1_forward(x_nchw, params, shape=(400, 400)):
    N, Cin, H, W = x_nchw.shape
    OH, OW = shape
    mid = params['w1'].shape[3]

    x = jnp.transpose(x_nchw, (0, 2, 3, 1)).astype(jnp.float32)     # NCHW -> NHWC

    # Fold eval-mode BatchNorm into DoubleConv weights/biases.
    w1 = params['w1'] * params['bn1_scale']
    b1 = params['b1'] * params['bn1_scale'] + params['bn1_shift']
    w2 = params['w2'] * params['bn2_scale']
    b2 = params['b2'] * params['bn2_scale'] + params['bn2_shift']
    w1t = w1.reshape(9, Cin, mid)                                   # tap-major
    w2t = w2.reshape(9, mid, mid)
    w3t = params['w3'].reshape(9, mid)                              # (3,3,mid,1) -> (9,mid)
    w4v = params['w4'].reshape(9)                                   # (3,3,1,1)  -> (9,)
    sc = jnp.stack([params['b3'].reshape(()),
                    params['b4'].reshape(())]).astype(jnp.float32)  # (2,) SMEM scalars

    # Bilinear interpolation matrices with the final 3x3 conv folded in.
    ry = interp_matrix(OH, H)                                       # (OH, H)
    rxT = interp_matrix(OW, W).T                                    # (W, OW)
    A = jnp.stack([_shift_rows(ry, dy) for dy in range(3)])         # (3, OH, H)
    C = jnp.stack([sum(w4v[dy * 3 + dx] * _shift_cols(rxT, dx)
                       for dx in range(3)) for dy in range(3)])     # (3, W, OW)

    out = pl.pallas_call(
        _attblock_kernel,
        out_shape=jax.ShapeDtypeStruct((N, OH, OW), jnp.float32),
        grid=(N,),
        in_specs=[
            pl.BlockSpec((1, H, W, Cin), lambda n: (n, 0, 0, 0)),
            pl.BlockSpec((9, Cin, mid), lambda n: (0, 0, 0)),
            pl.BlockSpec((1, mid), lambda n: (0, 0)),
            pl.BlockSpec((9, mid, mid), lambda n: (0, 0, 0)),
            pl.BlockSpec((1, mid), lambda n: (0, 0)),
            pl.BlockSpec((9, mid), lambda n: (0, 0)),
            pl.BlockSpec((3, OH, H), lambda n: (0, 0, 0)),
            pl.BlockSpec((3, W, OW), lambda n: (0, 0, 0)),
            pl.BlockSpec(memory_space=pltpu.MemorySpace.SMEM),      # sc (2,)
        ],
        out_specs=pl.BlockSpec((1, OH, OW), lambda n: (n, 0, 0)),
        scratch_shapes=[
            pltpu.VMEM((H + 2, W + 2, Cin), jnp.float32),           # padded x
            pltpu.VMEM((H + 2, W + 2, mid), jnp.float32),           # padded h1
            pltpu.VMEM((H + 2, W + 2, mid), jnp.float32),           # padded h2
        ],
        compiler_params=pltpu.CompilerParams(dimension_semantics=("parallel",)),
    )(x, w1t, b1.reshape(1, mid), w2t, b2.reshape(1, mid), w3t, A, C, sc)

    return out[:, None, :, :]                                       # NCHW (N, 1, OH, OW)


# ---------------------------------------------------------------------------
# Parameter construction (deterministic, PyTorch-like uniform init, eval-mode BN)
# ---------------------------------------------------------------------------
def conv_init(key, cin, cout, k=3):
    wk, bk = jax.random.split(key)
    bound = 1.0 / math.sqrt(cin * k * k)
    w = jax.random.uniform(wk, (k, k, cin, cout), jnp.float32, -bound, bound)  # HWIO
    b = jax.random.uniform(bk, (cout,), jnp.float32, -bound, bound)
    return w, b


def bn_fold(channels, eps=1e-5):
    gamma = jnp.ones((channels,), jnp.float32)
    beta = jnp.zeros((channels,), jnp.float32)
    mean = jnp.zeros((channels,), jnp.float32)
    var = jnp.ones((channels,), jnp.float32)
    scale = gamma / jnp.sqrt(var + eps)
    shift = beta - mean * scale
    return scale, shift


def make_params(key, in_channels, mid_channels, out_channels):
    k1, k2, k3, k4 = jax.random.split(key, 4)
    p = {}
    p['w1'], p['b1'] = conv_init(k1, in_channels, mid_channels)
    p['bn1_scale'], p['bn1_shift'] = bn_fold(mid_channels)
    p['w2'], p['b2'] = conv_init(k2, mid_channels, mid_channels)
    p['bn2_scale'], p['bn2_shift'] = bn_fold(mid_channels)
    p['w3'], p['b3'] = conv_init(k3, mid_channels, out_channels)
    p['w4'], p['b4'] = conv_init(k4, out_channels, out_channels)
    return p


# ---------------------------------------------------------------------------
# Pure-JAX reference (correctness sanity check)
# ---------------------------------------------------------------------------
def _conv_ref(x, w, b):
    y = lax.conv_general_dilated(x, w, (1, 1), 'SAME',
                                 dimension_numbers=('NHWC', 'HWIO', 'NHWC'),
                                 precision='highest')
    return y + b.reshape(1, 1, 1, -1)


def attblock_v1_ref(x_nchw, p, shape):
    x = jnp.transpose(x_nchw, (0, 2, 3, 1))
    h = jnp.maximum(_conv_ref(x, p['w1'], p['b1']) * p['bn1_scale'] + p['bn1_shift'], 0.0)
    h = jnp.maximum(_conv_ref(h, p['w2'], p['b2']) * p['bn2_scale'] + p['bn2_shift'], 0.0)
    h = _conv_ref(h, p['w3'], p['b3'])
    ry = interp_matrix(shape[0], h.shape[1])
    rx = interp_matrix(shape[1], h.shape[2])
    h = jnp.einsum('oh,nhwc->nowc', ry, h, precision='highest')
    h = jnp.einsum('pw,nowc->nopc', rx, h, precision='highest')
    h = jax.nn.sigmoid(_conv_ref(h, p['w4'], p['b4']))
    return jnp.transpose(h, (0, 3, 1, 2))                           # NCHW


# ---------------------------------------------------------------------------
if __name__ == "__main__":
    key = jax.random.PRNGKey(0)
    kx, kp = jax.random.split(key)

    # Small shapes consistent with AttBlock_v1(in_channels=4, mid_channels=8, out_channels=1)
    N, Cin, H, W = 2, 4, 8, 8
    mid_channels, out_channels = 8, 1
    target_shape = (128, 128)        # stands in for the default (400, 400)

    x_nchw = jax.random.normal(kx, (N, Cin, H, W), jnp.float32)     # PyTorch NCHW layout
    params = make_params(kp, Cin, mid_channels, out_channels)

    fwd = jax.jit(functools.partial(attblock_v1_forward, shape=target_shape))
    y = fwd(x_nchw, params)
    jax.block_until_ready(y)

    # sanity check against pure-JAX reference
    y_ref = attblock_v1_ref(x_nchw, params, target_shape)
    assert y.shape == (N, out_channels) + target_shape
    assert jnp.allclose(y, y_ref, atol=1e-4, rtol=1e-4), float(jnp.max(jnp.abs(y - y_ref)))

    print("KERNEL_OK")
</pallas_src>

<mosaic_0001>
module attributes {stable_mosaic.version = 11 : i64} {
  func.func private @main(%arg0: i32) attributes {dimension_semantics = [#tpu.dimension_semantics<core_parallel>], iteration_bounds = array<i64: 2>, tpu.core_type = #tpu.core_type<sc_scalar_subcore>, window_params = []} {
    return
  }
}

module attributes {stable_mosaic.version = 11 : i64} {
  func.func private @main(%arg0: i32) attributes {dimension_semantics = [#tpu.dimension_semantics<core_parallel>], iteration_bounds = array<i64: 2>, tpu.core_type = #tpu.core_type<sc_scalar_subcore>, window_params = []} {
    return
  }
}

module attributes {stable_mosaic.version = 11 : i64} {
  func.func @_attblock_kernel(%arg0: i32, %arg1: memref<1x8x8x4xf32, #tpu.memory_space<vmem>>, %arg2: memref<9x4x8xf32, #tpu.memory_space<vmem>>, %arg3: memref<1x8xf32, #tpu.memory_space<vmem>>, %arg4: memref<9x8x8xf32, #tpu.memory_space<vmem>>, %arg5: memref<1x8xf32, #tpu.memory_space<vmem>>, %arg6: memref<9x8xf32, #tpu.memory_space<vmem>>, %arg7: memref<3x128x8xf32, #tpu.memory_space<vmem>>, %arg8: memref<3x8x128xf32, #tpu.memory_space<vmem>>, %arg9: memref<2xf32, #tpu.memory_space<smem>>, %arg10: memref<1x128x128xf32, #tpu.memory_space<vmem>>, %arg11: memref<10x10x4xf32, #tpu.memory_space<vmem>>, %arg12: memref<10x10x8xf32, #tpu.memory_space<vmem>>, %arg13: memref<10x10x8xf32, #tpu.memory_space<vmem>>) attributes {dimension_semantics = [#tpu.dimension_semantics<parallel>], iteration_bounds = array<i64: 2>, scalar_prefetch = 0 : i64, scratch_operands = 3 : i64, tpu.core_type = #tpu.core_type<tc>, window_params = [{transform_indices = @transform_0, window_bounds = array<i64: 1, 8, 8, 4>}, {pipeline_mode = #tpu.pipeline_mode<synchronous>, transform_indices = @transform_1, window_bounds = array<i64: 9, 4, 8>}, {pipeline_mode = #tpu.pipeline_mode<synchronous>, transform_indices = @transform_2, window_bounds = array<i64: 1, 8>}, {pipeline_mode = #tpu.pipeline_mode<synchronous>, transform_indices = @transform_3, window_bounds = array<i64: 9, 8, 8>}, {pipeline_mode = #tpu.pipeline_mode<synchronous>, transform_indices = @transform_4, window_bounds = array<i64: 1, 8>}, {pipeline_mode = #tpu.pipeline_mode<synchronous>, transform_indices = @transform_5, window_bounds = array<i64: 9, 8>}, {pipeline_mode = #tpu.pipeline_mode<synchronous>, transform_indices = @transform_6, window_bounds = array<i64: 3, 128, 8>}, {pipeline_mode = #tpu.pipeline_mode<synchronous>, transform_indices = @transform_7, window_bounds = array<i64: 3, 8, 128>}, {transform_indices = @transform_8, window_bounds = array<i64: 2>}, {transform_indices = @transform_9, window_bounds = array<i64: 1, 128, 128>}]} {
    %cst = arith.constant 0.000000e+00 : f32
    %0 = vector.broadcast %cst : f32 to vector<10x10x4xf32>
    %c0 = arith.constant 0 : index
    %c0_0 = arith.constant 0 : index
    %c0_1 = arith.constant 0 : index
    %1 = vector.load %arg11[%c0, %c0_0, %c0_1] : memref<10x10x4xf32, #tpu.memory_space<vmem>>, vector<10x10x4xf32>
    tpu.vector_store %arg11[%c0, %c0_0, %c0_1], %0 {strides = array<i32>} : memref<10x10x4xf32, #tpu.memory_space<vmem>>, vector<10x10x4xf32>,
    %c0_2 = arith.constant 0 : index
    %c0_3 = arith.constant 0 : index
    %c0_4 = arith.constant 0 : index
    %c0_5 = arith.constant 0 : index
    %2 = vector.load %arg1[%c0_2, %c0_3, %c0_4, %c0_5] : memref<1x8x8x4xf32, #tpu.memory_space<vmem>>, vector<1x8x8x4xf32>
    %3 = vector.shape_cast %2 : vector<1x8x8x4xf32> to vector<8x8x4xf32>
    %c1 = arith.constant 1 : index
    %c1_6 = arith.constant 1 : index
    %c0_7 = arith.constant 0 : index
    %4 = vector.load %arg11[%c1, %c1_6, %c0_7] : memref<10x10x4xf32, #tpu.memory_space<vmem>>, vector<8x8x4xf32>
    tpu.vector_store %arg11[%c1, %c1_6, %c0_7], %3 {strides = array<i32>} : memref<10x10x4xf32, #tpu.memory_space<vmem>>, vector<8x8x4xf32>,
    %c0_8 = arith.constant 0 : index
    %c0_9 = arith.constant 0 : index
    %5 = vector.load %arg3[%c0_8, %c0_9] : memref<1x8xf32, #tpu.memory_space<vmem>>, vector<1x8xf32>
    %cst_10 = arith.constant 0.000000e+00 : f32
    %6 = vector.broadcast %cst_10 : f32 to vector<64x8xf32>
    %c0_11 = arith.constant 0 : index
    %c0_12 = arith.constant 0 : index
    %c0_13 = arith.constant 0 : index
    %7 = vector.load %arg11[%c0_11, %c0_12, %c0_13] : memref<10x10x4xf32, #tpu.memory_space<vmem>>, vector<8x8x4xf32>
    %8 = vector.shape_cast %7 : vector<8x8x4xf32> to vector<64x4xf32>
    %c0_14 = arith.constant 0 : index
    %c0_15 = arith.constant 0 : index
    %c0_16 = arith.constant 0 : index
    %9 = vector.load %arg2[%c0_14, %c0_15, %c0_16] : memref<9x4x8xf32, #tpu.memory_space<vmem>>, vector<1x4x8xf32>
    %10 = vector.shape_cast %9 : vector<1x4x8xf32> to vector<4x8xf32>
    %cst_17 = arith.constant dense<0.000000e+00> : vector<64x8xf32>
    %11 = tpu.matmul %8, %10, %cst_17 {dimension_numbers = #tpu.dot_dimension_numbers<[1], [0], [0], [1], [0, 0, 1, 1], [], []>} : vector<64x4xf32>, vector<4x8xf32>, vector<64x8xf32> -> vector<64x8xf32>
    %12 = arith.addf %6, %11 : vector<64x8xf32>
    %c0_18 = arith.constant 0 : index
    %c1_19 = arith.constant 1 : index
    %c0_20 = arith.constant 0 : index
    %13 = vector.load %arg11[%c0_18, %c1_19, %c0_20] : memref<10x10x4xf32, #tpu.memory_space<vmem>>, vector<8x8x4xf32>
    %14 = vector.shape_cast %13 : vector<8x8x4xf32> to vector<64x4xf32>
    %c1_21 = arith.constant 1 : index
    %c0_22 = arith.constant 0 : index
    %c0_23 = arith.constant 0 : index
    %15 = vector.load %arg2[%c1_21, %c0_22, %c0_23] : memref<9x4x8xf32, #tpu.memory_space<vmem>>, vector<1x4x8xf32>
    %16 = vector.shape_cast %15 : vector<1x4x8xf32> to vector<4x8xf32>
    %cst_24 = arith.constant dense<0.000000e+00> : vector<64x8xf32>
    %17 = tpu.matmul %14, %16, %cst_24 {dimension_numbers = #tpu.dot_dimension_numbers<[1], [0], [0], [1], [0, 0, 1, 1], [], []>} : vector<64x4xf32>, vector<4x8xf32>, vector<64x8xf32> -> vector<64x8xf32>
    %18 = arith.addf %12, %17 : vector<64x8xf32>
    %c0_25 = arith.constant 0 : index
    %c2 = arith.constant 2 : index
    %c0_26 = arith.constant 0 : index
    %19 = vector.load %arg11[%c0_25, %c2, %c0_26] : memref<10x10x4xf32, #tpu.memory_space<vmem>>, vector<8x8x4xf32>
    %20 = vector.shape_cast %19 : vector<8x8x4xf32> to vector<64x4xf32>
    %c2_27 = arith.constant 2 : index
    %c0_28 = arith.constant 0 : index
    %c0_29 = arith.constant 0 : index
    %21 = vector.load %arg2[%c2_27, %c0_28, %c0_29] : memref<9x4x8xf32, #tpu.memory_space<vmem>>, vector<1x4x8xf32>
    %22 = vector.shape_cast %21 : vector<1x4x8xf32> to vector<4x8xf32>
    %cst_30 = arith.constant dense<0.000000e+00> : vector<64x8xf32>
    %23 = tpu.matmul %20, %22, %cst_30 {dimension_numbers = #tpu.dot_dimension_numbers<[1], [0], [0], [1], [0, 0, 1, 1], [], []>} : vector<64x4xf32>, vector<4x8xf32>, vector<64x8xf32> -> vector<64x8xf32>
    %24 = arith.addf %18, %23 : vector<64x8xf32>
    %c1_31 = arith.constant 1 : index
    %c0_32 = arith.constant 0 : index
    %c0_33 = arith.constant 0 : index
    %25 = vector.load %arg11[%c1_31, %c0_32, %c0_33] : memref<10x10x4xf32, #tpu.memory_space<vmem>>, vector<8x8x4xf32>
    %26 = vector.shape_cast %25 : vector<8x8x4xf32> to vector<64x4xf32>
    %c3 = arith.constant 3 : index
    %c0_34 = arith.constant 0 : index
    %c0_35 = arith.constant 0 : index
    %27 = vector.load %arg2[%c3, %c0_34, %c0_35] : memref<9x4x8xf32, #tpu.memory_space<vmem>>, vector<1x4x8xf32>
    %28 = vector.shape_cast %27 : vector<1x4x8xf32> to vector<4x8xf32>
    %cst_36 = arith.constant dense<0.000000e+00> : vector<64x8xf32>
    %29 = tpu.matmul %26, %28, %cst_36 {dimension_numbers = #tpu.dot_dimension_numbers<[1], [0], [0], [1], [0, 0, 1, 1], [], []>} : vector<64x4xf32>, vector<4x8xf32>, vector<64x8xf32> -> vector<64x8xf32>
    %30 = arith.addf %24, %29 : vector<64x8xf32>
    %c1_37 = arith.constant 1 : index
    %c1_38 = arith.constant 1 : index
    %c0_39 = arith.constant 0 : index
    %31 = vector.load %arg11[%c1_37, %c1_38, %c0_39] : memref<10x10x4xf32, #tpu.memory_space<vmem>>, vector<8x8x4xf32>
    %32 = vector.shape_cast %31 : vector<8x8x4xf32> to vector<64x4xf32>
    %c4 = arith.constant 4 : index
    %c0_40 = arith.constant 0 : index
    %c0_41 = arith.constant 0 : index
    %33 = vector.load %arg2[%c4, %c0_40, %c0_41] : memref<9x4x8xf32, #tpu.memory_space<vmem>>, vector<1x4x8xf32>
    %34 = vector.shape_cast %33 : vector<1x4x8xf32> to vector<4x8xf32>
    %cst_42 = arith.constant dense<0.000000e+00> : vector<64x8xf32>
    %35 = tpu.matmul %32, %34, %cst_42 {dimension_numbers = #tpu.dot_dimension_numbers<[1], [0], [0], [1], [0, 0, 1, 1], [], []>} : vector<64x4xf32>, vector<4x8xf32>, vector<64x8xf32> -> vector<64x8xf32>
    %36 = arith.addf %30, %35 : vector<64x8xf32>
    %c1_43 = arith.constant 1 : index
    %c2_44 = arith.constant 2 : index
    %c0_45 = arith.constant 0 : index
    %37 = vector.load %arg11[%c1_43, %c2_44, %c0_45] : memref<10x10x4xf32, #tpu.memory_space<vmem>>, vector<8x8x4xf32>
    %38 = vector.shape_cast %37 : vector<8x8x4xf32> to vector<64x4xf32>
    %c5 = arith.constant 5 : index
    %c0_46 = arith.constant 0 : index
    %c0_47 = arith.constant 0 : index
    %39 = vector.load %arg2[%c5, %c0_46, %c0_47] : memref<9x4x8xf32, #tpu.memory_space<vmem>>, vector<1x4x8xf32>
    %40 = vector.shape_cast %39 : vector<1x4x8xf32> to vector<4x8xf32>
    %cst_48 = arith.constant dense<0.000000e+00> : vector<64x8xf32>
    %41 = tpu.matmul %38, %40, %cst_48 {dimension_numbers = #tpu.dot_dimension_numbers<[1], [0], [0], [1], [0, 0, 1, 1], [], []>} : vector<64x4xf32>, vector<4x8xf32>, vector<64x8xf32> -> vector<64x8xf32>
    %42 = arith.addf %36, %41 : vector<64x8xf32>
    %c2_49 = arith.constant 2 : index
    %c0_50 = arith.constant 0 : index
    %c0_51 = arith.constant 0 : index
    %43 = vector.load %arg11[%c2_49, %c0_50, %c0_51] : memref<10x10x4xf32, #tpu.memory_space<vmem>>, vector<8x8x4xf32>
    %44 = vector.shape_cast %43 : vector<8x8x4xf32> to vector<64x4xf32>
    %c6 = arith.constant 6 : index
    %c0_52 = arith.constant 0 : index
    %c0_53 = arith.constant 0 : index
    %45 = vector.load %arg2[%c6, %c0_52, %c0_53] : memref<9x4x8xf32, #tpu.memory_space<vmem>>, vector<1x4x8xf32>
    %46 = vector.shape_cast %45 : vector<1x4x8xf32> to vector<4x8xf32>
    %cst_54 = arith.constant dense<0.000000e+00> : vector<64x8xf32>
    %47 = tpu.matmul %44, %46, %cst_54 {dimension_numbers = #tpu.dot_dimension_numbers<[1], [0], [0], [1], [0, 0, 1, 1], [], []>} : vector<64x4xf32>, vector<4x8xf32>, vector<64x8xf32> -> vector<64x8xf32>
    %48 = arith.addf %42, %47 : vector<64x8xf32>
    %c2_55 = arith.constant 2 : index
    %c1_56 = arith.constant 1 : index
    %c0_57 = arith.constant 0 : index
    %49 = vector.load %arg11[%c2_55, %c1_56, %c0_57] : memref<10x10x4xf32, #tpu.memory_space<vmem>>, vector<8x8x4xf32>
    %50 = vector.shape_cast %49 : vector<8x8x4xf32> to vector<64x4xf32>
    %c7 = arith.constant 7 : index
    %c0_58 = arith.constant 0 : index
    %c0_59 = arith.constant 0 : index
    %51 = vector.load %arg2[%c7, %c0_58, %c0_59] : memref<9x4x8xf32, #tpu.memory_space<vmem>>, vector<1x4x8xf32>
    %52 = vector.shape_cast %51 : vector<1x4x8xf32> to vector<4x8xf32>
    %cst_60 = arith.constant dense<0.000000e+00> : vector<64x8xf32>
    %53 = tpu.matmul %50, %52, %cst_60 {dimension_numbers = #tpu.dot_dimension_numbers<[1], [0], [0], [1], [0, 0, 1, 1], [], []>} : vector<64x4xf32>, vector<4x8xf32>, vector<64x8xf32> -> vector<64x8xf32>
    %54 = arith.addf %48, %53 : vector<64x8xf32>
    %c2_61 = arith.constant 2 : index
    %c2_62 = arith.constant 2 : index
    %c0_63 = arith.constant 0 : index
    %55 = vector.load %arg11[%c2_61, %c2_62, %c0_63] : memref<10x10x4xf32, #tpu.memory_space<vmem>>, vector<8x8x4xf32>
    %56 = vector.shape_cast %55 : vector<8x8x4xf32> to vector<64x4xf32>
    %c8 = arith.constant 8 : index
    %c0_64 = arith.constant 0 : index
    %c0_65 = arith.constant 0 : index
    %57 = vector.load %arg2[%c8, %c0_64, %c0_65] : memref<9x4x8xf32, #tpu.memory_space<vmem>>, vector<1x4x8xf32>
    %58 = vector.shape_cast %57 : vector<1x4x8xf32> to vector<4x8xf32>
    %cst_66 = arith.constant dense<0.000000e+00> : vector<64x8xf32>
    %59 = tpu.matmul %56, %58, %cst_66 {dimension_numbers = #tpu.dot_dimension_numbers<[1], [0], [0], [1], [0, 0, 1, 1], [], []>} : vector<64x4xf32>, vector<4x8xf32>, vector<64x8xf32> -> vector<64x8xf32>
    %60 = arith.addf %54, %59 : vector<64x8xf32>
    %61 = vector.broadcast %5 : vector<1x8xf32> to vector<64x8xf32>
    %62 = arith.addf %60, %61 : vector<64x8xf32>
    %cst_67 = arith.constant 0.000000e+00 : f32
    %63 = vector.broadcast %cst_67 : f32 to vector<64x8xf32>
    %64 = arith.maximumf %62, %63 : vector<64x8xf32>
    %cst_68 = arith.constant 0.000000e+00 : f32
    %65 = vector.broadcast %cst_68 : f32 to vector<10x10x8xf32>
    %c0_69 = arith.constant 0 : index
    %c0_70 = arith.constant 0 : index
    %c0_71 = arith.constant 0 : index
    %66 = vector.load %arg12[%c0_69, %c0_70, %c0_71] : memref<10x10x8xf32, #tpu.memory_space<vmem>>, vector<10x10x8xf32>
    tpu.vector_store %arg12[%c0_69, %c0_70, %c0_71], %65 {strides = array<i32>} : memref<10x10x8xf32, #tpu.memory_space<vmem>>, vector<10x10x8xf32>,
    %67 = vector.shape_cast %64 : vector<64x8xf32> to vector<8x8x8xf32>
    %c1_72 = arith.constant 1 : index
    %c1_73 = arith.constant 1 : index
    %c0_74 = arith.constant 0 : index
    %68 = vector.load %arg12[%c1_72, %c1_73, %c0_74] : memref<10x10x8xf32, #tpu.memory_space<vmem>>, vector<8x8x8xf32>
    tpu.vector_store %arg12[%c1_72, %c1_73, %c0_74], %67 {strides = array<i32>} : memref<10x10x8xf32, #tpu.memory_space<vmem>>, vector<8x8x8xf32>,
    %c0_75 = arith.constant 0 : index
    %c0_76 = arith.constant 0 : index
    %69 = vector.load %arg5[%c0_75, %c0_76] : memref<1x8xf32, #tpu.memory_space<vmem>>, vector<1x8xf32>
    %cst_77 = arith.constant 0.000000e+00 : f32
    %70 = vector.broadcast %cst_77 : f32 to vector<64x8xf32>
    %c0_78 = arith.constant 0 : index
    %c0_79 = arith.constant 0 : index
    %c0_80 = arith.constant 0 : index
    %71 = vector.load %arg12[%c0_78, %c0_79, %c0_80] : memref<10x10x8xf32, #tpu.memory_space<vmem>>, vector<8x8x8xf32>
    %72 = vector.shape_cast %71 : vector<8x8x8xf32> to vector<64x8xf32>
    %c0_81 = arith.constant 0 : index
    %c0_82 = arith.constant 0 : index
    %c0_83 = arith.constant 0 : index
    %73 = vector.load %arg4[%c0_81, %c0_82, %c0_83] : memref<9x8x8xf32, #tpu.memory_space<vmem>>, vector<1x8x8xf32>
    %74 = vector.shape_cast %73 : vector<1x8x8xf32> to vector<8x8xf32>
    %cst_84 = arith.constant dense<0.000000e+00> : vector<64x8xf32>
    %75 = tpu.matmul %72, %74, %cst_84 {dimension_numbers = #tpu.dot_dimension_numbers<[1], [0], [0], [1], [0, 0, 1, 1], [], []>} : vector<64x8xf32>, vector<8x8xf32>, vector<64x8xf32> -> vector<64x8xf32>
    %76 = arith.addf %70, %75 : vector<64x8xf32>
    %c0_85 = arith.constant 0 : index
    %c1_86 = arith.constant 1 : index
    %c0_87 = arith.constant 0 : index
    %77 = vector.load %arg12[%c0_85, %c1_86, %c0_87] : memref<10x10x8xf32, #tpu.memory_space<vmem>>, vector<8x8x8xf32>
    %78 = vector.shape_cast %77 : vector<8x8x8xf32> to vector<64x8xf32>
    %c1_88 = arith.constant 1 : index
    %c0_89 = arith.constant 0 : index
    %c0_90 = arith.constant 0 : index
    %79 = vector.load %arg4[%c1_88, %c0_89, %c0_90] : memref<9x8x8xf32, #tpu.memory_space<vmem>>, vector<1x8x8xf32>
    %80 = vector.shape_cast %79 : vector<1x8x8xf32> to vector<8x8xf32>
    %cst_91 = arith.constant dense<0.000000e+00> : vector<64x8xf32>
    %81 = tpu.matmul %78, %80, %cst_91 {dimension_numbers = #tpu.dot_dimension_numbers<[1], [0], [0], [1], [0, 0, 1, 1], [], []>} : vector<64x8xf32>, vector<8x8xf32>, vector<64x8xf32> -> vector<64x8xf32>
    %82 = arith.addf %76, %81 : vector<64x8xf32>
    %c0_92 = arith.constant 0 : index
    %c2_93 = arith.constant 2 : index
    %c0_94 = arith.constant 0 : index
    %83 = vector.load %arg12[%c0_92, %c2_93, %c0_94] : memref<10x10x8xf32, #tpu.memory_space<vmem>>, vector<8x8x8xf32>
    %84 = vector.shape_cast %83 : vector<8x8x8xf32> to vector<64x8xf32>
    %c2_95 = arith.constant 2 : index
    %c0_96 = arith.constant 0 : index
    %c0_97 = arith.constant 0 : index
    %85 = vector.load %arg4[%c2_95, %c0_96, %c0_97] : memref<9x8x8xf32, #tpu.memory_space<vmem>>, vector<1x8x8xf32>
    %86 = vector.shape_cast %85 : vector<1x8x8xf32> to vector<8x8xf32>
    %cst_98 = arith.constant dense<0.000000e+00> : vector<64x8xf32>
    %87 = tpu.matmul %84, %86, %cst_98 {dimension_numbers = #tpu.dot_dimension_numbers<[1], [0], [0], [1], [0, 0, 1, 1], [], []>} : vector<64x8xf32>, vector<8x8xf32>, vector<64x8xf32> -> vector<64x8xf32>
    %88 = arith.addf %82, %87 : vector<64x8xf32>
    %c1_99 = arith.constant 1 : index
    %c0_100 = arith.constant 0 : index
    %c0_101 = arith.constant 0 : index
    %89 = vector.load %arg12[%c1_99, %c0_100, %c0_101] : memref<10x10x8xf32, #tpu.memory_space<vmem>>, vector<8x8x8xf32>
    %90 = vector.shape_cast %89 : vector<8x8x8xf32> to vector<64x8xf32>
    %c3_102 = arith.constant 3 : index
    %c0_103 = arith.constant 0 : index
    %c0_104 = arith.constant 0 : index
    %91 = vector.load %arg4[%c3_102, %c0_103, %c0_104] : memref<9x8x8xf32, #tpu.memory_space<vmem>>, vector<1x8x8xf32>
    %92 = vector.shape_cast %91 : vector<1x8x8xf32> to vector<8x8xf32>
    %cst_105 = arith.constant dense<0.000000e+00> : vector<64x8xf32>
    %93 = tpu.matmul %90, %92, %cst_105 {dimension_numbers = #tpu.dot_dimension_numbers<[1], [0], [0], [1], [0, 0, 1, 1], [], []>} : vector<64x8xf32>, vector<8x8xf32>, vector<64x8xf32> -> vector<64x8xf32>
    %94 = arith.addf %88, %93 : vector<64x8xf32>
    %c1_106 = arith.constant 1 : index
    %c1_107 = arith.constant 1 : index
    %c0_108 = arith.constant 0 : index
    %95 = vector.load %arg12[%c1_106, %c1_107, %c0_108] : memref<10x10x8xf32, #tpu.memory_space<vmem>>, vector<8x8x8xf32>
    %96 = vector.shape_cast %95 : vector<8x8x8xf32> to vector<64x8xf32>
    %c4_109 = arith.constant 4 : index
    %c0_110 = arith.constant 0 : index
    %c0_111 = arith.constant 0 : index
    %97 = vector.load %arg4[%c4_109, %c0_110, %c0_111] : memref<9x8x8xf32, #tpu.memory_space<vmem>>, vector<1x8x8xf32>
    %98 = vector.shape_cast %97 : vector<1x8x8xf32> to vector<8x8xf32>
    %cst_112 = arith.constant dense<0.000000e+00> : vector<64x8xf32>
    %99 = tpu.matmul %96, %98, %cst_112 {dimension_numbers = #tpu.dot_dimension_numbers<[1], [0], [0], [1], [0, 0, 1, 1], [], []>} : vector<64x8xf32>, vector<8x8xf32>, vector<64x8xf32> -> vector<64x8xf32>
    %100 = arith.addf %94, %99 : vector<64x8xf32>
    %c1_113 = arith.constant 1 : index
    %c2_114 = arith.constant 2 : index
    %c0_115 = arith.constant 0 : index
    %101 = vector.load %arg12[%c1_113, %c2_114, %c0_115] : memref<10x10x8xf32, #tpu.memory_space<vmem>>, vector<8x8x8xf32>
    %102 = vector.shape_cast %101 : vector<8x8x8xf32> to vector<64x8xf32>
    %c5_116 = arith.constant 5 : index
    %c0_117 = arith.constant 0 : index
    %c0_118 = arith.constant 0 : index
    %103 = vector.load %arg4[%c5_116, %c0_117, %c0_118] : memref<9x8x8xf32, #tpu.memory_space<vmem>>, vector<1x8x8xf32>
    %104 = vector.shape_cast %103 : vector<1x8x8xf32> to vector<8x8xf32>
    %cst_119 = arith.constant dense<0.000000e+00> : vector<64x8xf32>
    %105 = tpu.matmul %102, %104, %cst_119 {dimension_numbers = #tpu.dot_dimension_numbers<[1], [0], [0], [1], [0, 0, 1, 1], [], []>} : vector<64x8xf32>, vector<8x8xf32>, vector<64x8xf32> -> vector<64x8xf32>
    %106 = arith.addf %100, %105 : vector<64x8xf32>
    %c2_120 = arith.constant 2 : index
    %c0_121 = arith.constant 0 : index
    %c0_122 = arith.constant 0 : index
    %107 = vector.load %arg12[%c2_120, %c0_121, %c0_122] : memref<10x10x8xf32, #tpu.memory_space<vmem>>, vector<8x8x8xf32>
    %108 = vector.shape_cast %107 : vector<8x8x8xf32> to vector<64x8xf32>
    %c6_123 = arith.constant 6 : index
    %c0_124 = arith.constant 0 : index
    %c0_125 = arith.constant 0 : index
    %109 = vector.load %arg4[%c6_123, %c0_124, %c0_125] : memref<9x8x8xf32, #tpu.memory_space<vmem>>, vector<1x8x8xf32>
    %110 = vector.shape_cast %109 : vector<1x8x8xf32> to vector<8x8xf32>
    %cst_126 = arith.constant dense<0.000000e+00> : vector<64x8xf32>
    %111 = tpu.matmul %108, %110, %cst_126 {dimension_numbers = #tpu.dot_dimension_numbers<[1], [0], [0], [1], [0, 0, 1, 1], [], []>} : vector<64x8xf32>, vector<8x8xf32>, vector<64x8xf32> -> vector<64x8xf32>
    %112 = arith.addf %106, %111 : vector<64x8xf32>
    %c2_127 = arith.constant 2 : index
    %c1_128 = arith.constant 1 : index
    %c0_129 = arith.constant 0 : index
    %113 = vector.load %arg12[%c2_127, %c1_128, %c0_129] : memref<10x10x8xf32, #tpu.memory_space<vmem>>, vector<8x8x8xf32>
    %114 = vector.shape_cast %113 : vector<8x8x8xf32> to vector<64x8xf32>
    %c7_130 = arith.constant 7 : index
    %c0_131 = arith.constant 0 : index
    %c0_132 = arith.constant 0 : index
    %115 = vector.load %arg4[%c7_130, %c0_131, %c0_132] : memref<9x8x8xf32, #tpu.memory_space<vmem>>, vector<1x8x8xf32>
    %116 = vector.shape_cast %115 : vector<1x8x8xf32> to vector<8x8xf32>
    %cst_133 = arith.constant dense<0.000000e+00> : vector<64x8xf32>
    %117 = tpu.matmul %114, %116, %cst_133 {dimension_numbers = #tpu.dot_dimension_numbers<[1], [0], [0], [1], [0, 0, 1, 1], [], []>} : vector<64x8xf32>, vector<8x8xf32>, vector<64x8xf32> -> vector<64x8xf32>
    %118 = arith.addf %112, %117 : vector<64x8xf32>
    %c2_134 = arith.constant 2 : index
    %c2_135 = arith.constant 2 : index
    %c0_136 = arith.constant 0 : index
    %119 = vector.load %arg12[%c2_134, %c2_135, %c0_136] : memref<10x10x8xf32, #tpu.memory_space<vmem>>, vector<8x8x8xf32>
    %120 = vector.shape_cast %119 : vector<8x8x8xf32> to vector<64x8xf32>
    %c8_137 = arith.constant 8 : index
    %c0_138 = arith.constant 0 : index
    %c0_139 = arith.constant 0 : index
    %121 = vector.load %arg4[%c8_137, %c0_138, %c0_139] : memref<9x8x8xf32, #tpu.memory_space<vmem>>, vector<1x8x8xf32>
    %122 = vector.shape_cast %121 : vector<1x8x8xf32> to vector<8x8xf32>
    %cst_140 = arith.constant dense<0.000000e+00> : vector<64x8xf32>
    %123 = tpu.matmul %120, %122, %cst_140 {dimension_numbers = #tpu.dot_dimension_numbers<[1], [0], [0], [1], [0, 0, 1, 1], [], []>} : vector<64x8xf32>, vector<8x8xf32>, vector<64x8xf32> -> vector<64x8xf32>
    %124 = arith.addf %118, %123 : vector<64x8xf32>
    %125 = vector.broadcast %69 : vector<1x8xf32> to vector<64x8xf32>
    %126 = arith.addf %124, %125 : vector<64x8xf32>
    %cst_141 = arith.constant 0.000000e+00 : f32
    %127 = vector.broadcast %cst_141 : f32 to vector<64x8xf32>
    %128 = arith.maximumf %126, %127 : vector<64x8xf32>
    %cst_142 = arith.constant 0.000000e+00 : f32
    %129 = vector.broadcast %cst_142 : f32 to vector<10x10x8xf32>
    %c0_143 = arith.constant 0 : index
    %c0_144 = arith.constant 0 : index
    %c0_145 = arith.constant 0 : index
    %130 = vector.load %arg13[%c0_143, %c0_144, %c0_145] : memref<10x10x8xf32, #tpu.memory_space<vmem>>, vector<10x10x8xf32>
    tpu.vector_store %arg13[%c0_143, %c0_144, %c0_145], %129 {strides = array<i32>} : memref<10x10x8xf32, #tpu.memory_space<vmem>>, vector<10x10x8xf32>,
    %131 = vector.shape_cast %128 : vector<64x8xf32> to vector<8x8x8xf32>
    %c1_146 = arith.constant 1 : index
    %c1_147 = arith.constant 1 : index
    %c0_148 = arith.constant 0 : index
    %132 = vector.load %arg13[%c1_146, %c1_147, %c0_148] : memref<10x10x8xf32, #tpu.memory_space<vmem>>, vector<8x8x8xf32>
    tpu.vector_store %arg13[%c1_146, %c1_147, %c0_148], %131 {strides = array<i32>} : memref<10x10x8xf32, #tpu.memory_space<vmem>>, vector<8x8x8xf32>,
    %cst_149 = arith.constant 0.000000e+00 : f32
    %133 = vector.broadcast %cst_149 : f32 to vector<8x8xf32>
    %c0_150 = arith.constant 0 : index
    %c0_151 = arith.constant 0 : index
    %c0_152 = arith.constant 0 : index
    %134 = vector.load %arg13[%c0_150, %c0_151, %c0_152] : memref<10x10x8xf32, #tpu.memory_space<vmem>>, vector<8x8x8xf32>
    %c0_153 = arith.constant 0 : index
    %c0_154 = arith.constant 0 : index
    %135 = vector.load %arg6[%c0_153, %c0_154] : memref<9x8xf32, #tpu.memory_space<vmem>>, vector<1x8xf32>
    %136 = vector.shape_cast %135 : vector<1x8xf32> to vector<8xf32>
    %137 = vector.shape_cast %136 : vector<8xf32> to vector<1x1x8xf32>
    %138 = vector.broadcast %137 : vector<1x1x8xf32> to vector<8x8x8xf32>
    %139 = arith.mulf %134, %138 : vector<8x8x8xf32>
    %cst_155 = arith.constant dense<0.000000e+00> : vector<8x8xf32>
    %140 = vector.multi_reduction <add>, %139, %cst_155 [2] : vector<8x8x8xf32> to vector<8x8xf32>
    %141 = arith.addf %133, %140 : vector<8x8xf32>
    %c0_156 = arith.constant 0 : index
    %c1_157 = arith.constant 1 : index
    %c0_158 = arith.constant 0 : index
    %142 = vector.load %arg13[%c0_156, %c1_157, %c0_158] : memref<10x10x8xf32, #tpu.memory_space<vmem>>, vector<8x8x8xf32>
    %c1_159 = arith.constant 1 : index
    %c0_160 = arith.constant 0 : index
    %143 = vector.load %arg6[%c1_159, %c0_160] : memref<9x8xf32, #tpu.memory_space<vmem>>, vector<1x8xf32>
    %144 = vector.shape_cast %143 : vector<1x8xf32> to vector<8xf32>
    %145 = vector.shape_cast %144 : vector<8xf32> to vector<1x1x8xf32>
    %146 = vector.broadcast %145 : vector<1x1x8xf32> to vector<8x8x8xf32>
    %147 = arith.mulf %142, %146 : vector<8x8x8xf32>
    %cst_161 = arith.constant dense<0.000000e+00> : vector<8x8xf32>
    %148 = vector.multi_reduction <add>, %147, %cst_161 [2] : vector<8x8x8xf32> to vector<8x8xf32>
    %149 = arith.addf %141, %148 : vector<8x8xf32>
    %c0_162 = arith.constant 0 : index
    %c2_163 = arith.constant 2 : index
    %c0_164 = arith.constant 0 : index
    %150 = vector.load %arg13[%c0_162, %c2_163, %c0_164] : memref<10x10x8xf32, #tpu.memory_space<vmem>>, vector<8x8x8xf32>
    %c2_165 = arith.constant 2 : index
    %c0_166 = arith.constant 0 : index
    %151 = vector.load %arg6[%c2_165, %c0_166] : memref<9x8xf32, #tpu.memory_space<vmem>>, vector<1x8xf32>
    %152 = vector.shape_cast %151 : vector<1x8xf32> to vector<8xf32>
    %153 = vector.shape_cast %152 : vector<8xf32> to vector<1x1x8xf32>
    %154 = vector.broadcast %153 : vector<1x1x8xf32> to vector<8x8x8xf32>
    %155 = arith.mulf %150, %154 : vector<8x8x8xf32>
    %cst_167 = arith.constant dense<0.000000e+00> : vector<8x8xf32>
    %156 = vector.multi_reduction <add>, %155, %cst_167 [2] : vector<8x8x8xf32> to vector<8x8xf32>
    %157 = arith.addf %149, %156 : vector<8x8xf32>
    %c1_168 = arith.constant 1 : index
    %c0_169 = arith.constant 0 : index
    %c0_170 = arith.constant 0 : index
    %158 = vector.load %arg13[%c1_168, %c0_169, %c0_170] : memref<10x10x8xf32, #tpu.memory_space<vmem>>, vector<8x8x8xf32>
    %c3_171 = arith.constant 3 : index
    %c0_172 = arith.constant 0 : index
    %159 = vector.load %arg6[%c3_171, %c0_172] : memref<9x8xf32, #tpu.memory_space<vmem>>, vector<1x8xf32>
    %160 = vector.shape_cast %159 : vector<1x8xf32> to vector<8xf32>
    %161 = vector.shape_cast %160 : vector<8xf32> to vector<1x1x8xf32>
    %162 = vector.broadcast %161 : vector<1x1x8xf32> to vector<8x8x8xf32>
    %163 = arith.mulf %158, %162 : vector<8x8x8xf32>
    %cst_173 = arith.constant dense<0.000000e+00> : vector<8x8xf32>
    %164 = vector.multi_reduction <add>, %163, %cst_173 [2] : vector<8x8x8xf32> to vector<8x8xf32>
    %165 = arith.addf %157, %164 : vector<8x8xf32>
    %c1_174 = arith.constant 1 : index
    %c1_175 = arith.constant 1 : index
    %c0_176 = arith.constant 0 : index
    %166 = vector.load %arg13[%c1_174, %c1_175, %c0_176] : memref<10x10x8xf32, #tpu.memory_space<vmem>>, vector<8x8x8xf32>
    %c4_177 = arith.constant 4 : index
    %c0_178 = arith.constant 0 : index
    %167 = vector.load %arg6[%c4_177, %c0_178] : memref<9x8xf32, #tpu.memory_space<vmem>>, vector<1x8xf32>
    %168 = vector.shape_cast %167 : vector<1x8xf32> to vector<8xf32>
    %169 = vector.shape_cast %168 : vector<8xf32> to vector<1x1x8xf32>
    %170 = vector.broadcast %169 : vector<1x1x8xf32> to vector<8x8x8xf32>
    %171 = arith.mulf %166, %170 : vector<8x8x8xf32>
    %cst_179 = arith.constant dense<0.000000e+00> : vector<8x8xf32>
    %172 = vector.multi_reduction <add>, %171, %cst_179 [2] : vector<8x8x8xf32> to vector<8x8xf32>
    %173 = arith.addf %165, %172 : vector<8x8xf32>
    %c1_180 = arith.constant 1 : index
    %c2_181 = arith.constant 2 : index
    %c0_182 = arith.constant 0 : index
    %174 = vector.load %arg13[%c1_180, %c2_181, %c0_182] : memref<10x10x8xf32, #tpu.memory_space<vmem>>, vector<8x8x8xf32>
    %c5_183 = arith.constant 5 : index
    %c0_184 = arith.constant 0 : index
    %175 = vector.load %arg6[%c5_183, %c0_184] : memref<9x8xf32, #tpu.memory_space<vmem>>, vector<1x8xf32>
    %176 = vector.shape_cast %175 : vector<1x8xf32> to vector<8xf32>
    %177 = vector.shape_cast %176 : vector<8xf32> to vector<1x1x8xf32>
    %178 = vector.broadcast %177 : vector<1x1x8xf32> to vector<8x8x8xf32>
    %179 = arith.mulf %174, %178 : vector<8x8x8xf32>
    %cst_185 = arith.constant dense<0.000000e+00> : vector<8x8xf32>
    %180 = vector.multi_reduction <add>, %179, %cst_185 [2] : vector<8x8x8xf32> to vector<8x8xf32>
    %181 = arith.addf %173, %180 : vector<8x8xf32>
    %c2_186 = arith.constant 2 : index
    %c0_187 = arith.constant 0 : index
    %c0_188 = arith.constant 0 : index
    %182 = vector.load %arg13[%c2_186, %c0_187, %c0_188] : memref<10x10x8xf32, #tpu.memory_space<vmem>>, vector<8x8x8xf32>
    %c6_189 = arith.constant 6 : index
    %c0_190 = arith.constant 0 : index
    %183 = vector.load %arg6[%c6_189, %c0_190] : memref<9x8xf32, #tpu.memory_space<vmem>>, vector<1x8xf32>
    %184 = vector.shape_cast %183 : vector<1x8xf32> to vector<8xf32>
    %185 = vector.shape_cast %184 : vector<8xf32> to vector<1x1x8xf32>
    %186 = vector.broadcast %185 : vector<1x1x8xf32> to vector<8x8x8xf32>
    %187 = arith.mulf %182, %186 : vector<8x8x8xf32>
    %cst_191 = arith.constant dense<0.000000e+00> : vector<8x8xf32>
    %188 = vector.multi_reduction <add>, %187, %cst_191 [2] : vector<8x8x8xf32> to vector<8x8xf32>
    %189 = arith.addf %181, %188 : vector<8x8xf32>
    %c2_192 = arith.constant 2 : index
    %c1_193 = arith.constant 1 : index
    %c0_194 = arith.constant 0 : index
    %190 = vector.load %arg13[%c2_192, %c1_193, %c0_194] : memref<10x10x8xf32, #tpu.memory_space<vmem>>, vector<8x8x8xf32>
    %c7_195 = arith.constant 7 : index
    %c0_196 = arith.constant 0 : index
    %191 = vector.load %arg6[%c7_195, %c0_196] : memref<9x8xf32, #tpu.memory_space<vmem>>, vector<1x8xf32>
    %192 = vector.shape_cast %191 : vector<1x8xf32> to vector<8xf32>
    %193 = vector.shape_cast %192 : vector<8xf32> to vector<1x1x8xf32>
    %194 = vector.broadcast %193 : vector<1x1x8xf32> to vector<8x8x8xf32>
    %195 = arith.mulf %190, %194 : vector<8x8x8xf32>
    %cst_197 = arith.constant dense<0.000000e+00> : vector<8x8xf32>
    %196 = vector.multi_reduction <add>, %195, %cst_197 [2] : vector<8x8x8xf32> to vector<8x8xf32>
    %197 = arith.addf %189, %196 : vector<8x8xf32>
    %c2_198 = arith.constant 2 : index
    %c2_199 = arith.constant 2 : index
    %c0_200 = arith.constant 0 : index
    %198 = vector.load %arg13[%c2_198, %c2_199, %c0_200] : memref<10x10x8xf32, #tpu.memory_space<vmem>>, vector<8x8x8xf32>
    %c8_201 = arith.constant 8 : index
    %c0_202 = arith.constant 0 : index
    %199 = vector.load %arg6[%c8_201, %c0_202] : memref<9x8xf32, #tpu.memory_space<vmem>>, vector<1x8xf32>
    %200 = vector.shape_cast %199 : vector<1x8xf32> to vector<8xf32>
    %201 = vector.shape_cast %200 : vector<8xf32> to vector<1x1x8xf32>
    %202 = vector.broadcast %201 : vector<1x1x8xf32> to vector<8x8x8xf32>
    %203 = arith.mulf %198, %202 : vector<8x8x8xf32>
    %cst_203 = arith.constant dense<0.000000e+00> : vector<8x8xf32>
    %204 = vector.multi_reduction <add>, %203, %cst_203 [2] : vector<8x8x8xf32> to vector<8x8xf32>
    %205 = arith.addf %197, %204 : vector<8x8xf32>
    %c0_204 = arith.constant 0 : index
    %206 = memref.load %arg9[%c0_204] : memref<2xf32, #tpu.memory_space<smem>>
    %207 = vector.broadcast %206 : f32 to vector<8x8xf32>
    %208 = arith.addf %205, %207 : vector<8x8xf32>
    %cst_205 = arith.constant 0.000000e+00 : f32
    %209 = vector.broadcast %cst_205 : f32 to vector<128x128xf32>
    %c0_206 = arith.constant 0 : index
    %c0_207 = arith.constant 0 : index
    %c0_208 = arith.constant 0 : index
    %210 = vector.load %arg7[%c0_206, %c0_207, %c0_208] : memref<3x128x8xf32, #tpu.memory_space<vmem>>, vector<1x128x8xf32>
    %211 = vector.shape_cast %210 : vector<1x128x8xf32> to vector<128x8xf32>
    %cst_209 = arith.constant dense<0.000000e+00> : vector<128x8xf32>
    %212 = tpu.matmul %211, %208, %cst_209 {dimension_numbers = #tpu.dot_dimension_numbers<[1], [0], [0], [1], [0, 0, 1, 1], [], []>} : vector<128x8xf32>, vector<8x8xf32>, vector<128x8xf32> -> vector<128x8xf32>
    %c0_210 = arith.constant 0 : index
    %c0_211 = arith.constant 0 : index
    %c0_212 = arith.constant 0 : index
    %213 = vector.load %arg8[%c0_210, %c0_211, %c0_212] : memref<3x8x128xf32, #tpu.memory_space<vmem>>, vector<1x8x128xf32>
    %214 = vector.shape_cast %213 : vector<1x8x128xf32> to vector<8x128xf32>
    %cst_213 = arith.constant dense<0.000000e+00> : vector<128x128xf32>
    %215 = tpu.matmul %212, %214, %cst_213 {dimension_numbers = #tpu.dot_dimension_numbers<[1], [0], [0], [1], [0, 0, 1, 1], [], []>} : vector<128x8xf32>, vector<8x128xf32>, vector<128x128xf32> -> vector<128x128xf32>
    %216 = arith.addf %209, %215 : vector<128x128xf32>
    %c1_214 = arith.constant 1 : index
    %c0_215 = arith.constant 0 : index
    %c0_216 = arith.constant 0 : index
    %217 = vector.load %arg7[%c1_214, %c0_215, %c0_216] : memref<3x128x8xf32, #tpu.memory_space<vmem>>, vector<1x128x8xf32>
    %218 = vector.shape_cast %217 : vector<1x128x8xf32> to vector<128x8xf32>
    %cst_217 = arith.constant dense<0.000000e+00> : vector<128x8xf32>
    %219 = tpu.matmul %218, %208, %cst_217 {dimension_numbers = #tpu.dot_dimension_numbers<[1], [0], [0], [1], [0, 0, 1, 1], [], []>} : vector<128x8xf32>, vector<8x8xf32>, vector<128x8xf32> -> vector<128x8xf32>
    %c1_218 = arith.constant 1 : index
    %c0_219 = arith.constant 0 : index
    %c0_220 = arith.constant 0 : index
    %220 = vector.load %arg8[%c1_218, %c0_219, %c0_220] : memref<3x8x128xf32, #tpu.memory_space<vmem>>, vector<1x8x128xf32>
    %221 = vector.shape_cast %220 : vector<1x8x128xf32> to vector<8x128xf32>
    %cst_221 = arith.constant dense<0.000000e+00> : vector<128x128xf32>
    %222 = tpu.matmul %219, %221, %cst_221 {dimension_numbers = #tpu.dot_dimension_numbers<[1], [0], [0], [1], [0, 0, 1, 1], [], []>} : vector<128x8xf32>, vector<8x128xf32>, vector<128x128xf32> -> vector<128x128xf32>
    %223 = arith.addf %216, %222 : vector<128x128xf32>
    %c2_222 = arith.constant 2 : index
    %c0_223 = arith.constant 0 : index
    %c0_224 = arith.constant 0 : index
    %224 = vector.load %arg7[%c2_222, %c0_223, %c0_224] : memref<3x128x8xf32, #tpu.memory_space<vmem>>, vector<1x128x8xf32>
    %225 = vector.shape_cast %224 : vector<1x128x8xf32> to vector<128x8xf32>
    %cst_225 = arith.constant dense<0.000000e+00> : vector<128x8xf32>
    %226 = tpu.matmul %225, %208, %cst_225 {dimension_numbers = #tpu.dot_dimension_numbers<[1], [0], [0], [1], [0, 0, 1, 1], [], []>} : vector<128x8xf32>, vector<8x8xf32>, vector<128x8xf32> -> vector<128x8xf32>
    %c2_226 = arith.constant 2 : index
    %c0_227 = arith.constant 0 : index
    %c0_228 = arith.constant 0 : index
    %227 = vector.load %arg8[%c2_226, %c0_227, %c0_228] : memref<3x8x128xf32, #tpu.memory_space<vmem>>, vector<1x8x128xf32>
    %228 = vector.shape_cast %227 : vector<1x8x128xf32> to vector<8x128xf32>
    %cst_229 = arith.constant dense<0.000000e+00> : vector<128x128xf32>
    %229 = tpu.matmul %226, %228, %cst_229 {dimension_numbers = #tpu.dot_dimension_numbers<[1], [0], [0], [1], [0, 0, 1, 1], [], []>} : vector<128x8xf32>, vector<8x128xf32>, vector<128x128xf32> -> vector<128x128xf32>
    %230 = arith.addf %223, %229 : vector<128x128xf32>
    %c1_230 = arith.constant 1 : index
    %231 = memref.load %arg9[%c1_230] : memref<2xf32, #tpu.memory_space<smem>>
    %232 = vector.broadcast %231 : f32 to vector<128x128xf32>
    %233 = arith.addf %230, %232 : vector<128x128xf32>
    %234 = arith.negf %233 : vector<128x128xf32>
    %235 = math.exp %234 : vector<128x128xf32>
    %cst_231 = arith.constant 1.000000e+00 : f32
    %236 = vector.broadcast %cst_231 : f32 to vector<128x128xf32>
    %237 = arith.addf %236, %235 : vector<128x128xf32>
    %238 = arith.divf %236, %237 : vector<128x128xf32>
    %c0_232 = arith.constant 0 : index
    %c0_233 = arith.constant 0 : index
    %c0_234 = arith.constant 0 : index
    %239 = vector.load %arg10[%c0_232, %c0_233, %c0_234] : memref<1x128x128xf32, #tpu.memory_space<vmem>>, vector<1x128x128xf32>
    %240 = vector.shape_cast %239 : vector<1x128x128xf32> to vector<128x128xf32>
    %241 = vector.shape_cast %238 : vector<128x128xf32> to vector<1x128x128xf32>
    tpu.vector_store %arg10[%c0_232, %c0_233, %c0_234], %241 {strides = array<i32>} : memref<1x128x128xf32, #tpu.memory_space<vmem>>, vector<1x128x128xf32>,
    return
  }
  func.func @transform_0(%arg0: i32) -> (i32, i32, i32, i32) {
    %c0_i32 = arith.constant 0 : i32
    %c0_i32_0 = arith.constant 0 : i32
    %c0_i32_1 = arith.constant 0 : i32
    %c0_i32_2 = arith.constant 0 : i32
    return %arg0, %c0_i32, %c0_i32_0, %c0_i32_1 : i32, i32, i32, i32
  }
  func.func @transform_1(%arg0: i32) -> (i32, i32, i32) {
    %c0_i32 = arith.constant 0 : i32
    %c0_i32_0 = arith.constant 0 : i32
    %c0_i32_1 = arith.constant 0 : i32
    %c0_i32_2 = arith.constant 0 : i32
    return %c0_i32, %c0_i32_0, %c0_i32_1 : i32, i32, i32
  }
  func.func @transform_2(%arg0: i32) -> (i32, i32) {
    %c0_i32 = arith.constant 0 : i32
    %c0_i32_0 = arith.constant 0 : i32
    %c0_i32_1 = arith.constant 0 : i32
    return %c0_i32, %c0_i32_0 : i32, i32
  }
  func.func @transform_3(%arg0: i32) -> (i32, i32, i32) {
    %c0_i32 = arith.constant 0 : i32
    %c0_i32_0 = arith.constant 0 : i32
    %c0_i32_1 = arith.constant 0 : i32
    %c0_i32_2 = arith.constant 0 : i32
    return %c0_i32, %c0_i32_0, %c0_i32_1 : i32, i32, i32
  }
  func.func @transform_4(%arg0: i32) -> (i32, i32) {
    %c0_i32 = arith.constant 0 : i32
    %c0_i32_0 = arith.constant 0 : i32
    %c0_i32_1 = arith.constant 0 : i32
    return %c0_i32, %c0_i32_0 : i32, i32
  }
  func.func @transform_5(%arg0: i32) -> (i32, i32) {
    %c0_i32 = arith.constant 0 : i32
    %c0_i32_0 = arith.constant 0 : i32
    %c0_i32_1 = arith.constant 0 : i32
    return %c0_i32, %c0_i32_0 : i32, i32
  }
  func.func @transform_6(%arg0: i32) -> (i32, i32, i32) {
    %c0_i32 = arith.constant 0 : i32
    %c0_i32_0 = arith.constant 0 : i32
    %c0_i32_1 = arith.constant 0 : i32
    %c0_i32_2 = arith.constant 0 : i32
    return %c0_i32, %c0_i32_0, %c0_i32_1 : i32, i32, i32
  }
  func.func @transform_7(%arg0: i32) -> (i32, i32, i32) {
    %c0_i32 = arith.constant 0 : i32
    %c0_i32_0 = arith.constant 0 : i32
    %c0_i32_1 = arith.constant 0 : i32
    %c0_i32_2 = arith.constant 0 : i32
    return %c0_i32, %c0_i32_0, %c0_i32_1 : i32, i32, i32
  }
  func.func @transform_8(%arg0: i32) -> i32 {
    %c0_i32 = arith.constant 0 : i32
    %c0_i32_0 = arith.constant 0 : i32
    return %c0_i32 : i32
  }
  func.func @transform_9(%arg0: i32) -> (i32, i32, i32) {
    %c0_i32 = arith.constant 0 : i32
    %c0_i32_0 = arith.constant 0 : i32
    %c0_i32_1 = arith.constant 0 : i32
    return %arg0, %c0_i32, %c0_i32_0 : i32, i32, i32
  }
}

</mosaic_0001>

<llo_original>
// kernel: attblock_v1_forward.1
$region0: #{attblock_v1_forward.1}
  #allocation0 [shape = 'u32[]', space=smem, size = 0x4, offset = 0x4, fixed_abs, tag = 'smem constant byte address 0x4 - core index']
  #allocation1 [shape = 'u32[144,128]{1,0:T(1,128)}', space=vmem, size = 0x12000, scoped, tag = 'internal scratch']
  #allocation2 [shape = 'f32[10,10,4]{2,1,0:T(8,128)}', space=vmem, size = 0x14000, scoped, tag = 'scratch operand']
  #allocation3 [shape = 'f32[10,10,8]{2,1,0:T(8,128)}', space=vmem, size = 0x14000, scoped, tag = 'scratch operand']
  #allocation4 [shape = 'f32[10,10,8]{2,1,0:T(8,128)}', space=vmem, size = 0x14000, scoped, tag = 'scratch operand']
  %s0 = inlined_call_operand.vmem [shape: f32[2,8,8,4], index: 0, kind: input, shape index: {}]
  %s1 = inlined_call_operand.vmem [shape: f32[9,4,8], index: 1, kind: input, shape index: {}]
  %s2 = inlined_call_operand.vmem [shape: f32[1,8], index: 2, kind: input, shape index: {}]
  %s3 = inlined_call_operand.vmem [shape: f32[9,8,8], index: 3, kind: input, shape index: {}]
  %s4 = inlined_call_operand.vmem [shape: f32[1,8], index: 4, kind: input, shape index: {}]
  %s5 = inlined_call_operand.vmem [shape: f32[9,8], index: 5, kind: input, shape index: {}]
  %s6 = inlined_call_operand.vmem [shape: f32[3,128,8], index: 6, kind: input, shape index: {}]
  %s7 = inlined_call_operand.vmem [shape: f32[3,8,128], index: 7, kind: input, shape index: {}]
  %s8 = inlined_call_operand.vmem [shape: f32[2], index: 8, kind: input, shape index: {}]
  %s9 = inlined_call_operand.hbm [shape: f32[2,128,128], index: 9, kind: output, shape index: {}]
  %s10 = sld [smem:[#allocation0]]
  $region73: #{attblock_v1_forward.1} parent=0
    _
  %s12 = ssub.s32 1, %s10
  %s13 = scalar_select 0, %s12, %s10
  $region1: #{attblock_v1_forward.1} parent=0
    #allocation5 [shape = 'u8[512]{0}', space=smem, size = 0x200, scoped, tag = 'input window, operand 8, single buffered']
    #allocation6 [shape = 's32[2]{0}', space=sflag, size = 0x8, scoped, tag = 'scoped memory for attblock_v1_forward.1']
    #allocation7 [shape = 's32[2]{0}', space=sflag, size = 0x8, scoped, tag = 'scoped memory for attblock_v1_forward.1']
    #allocation8 [shape = 'u8[131072]{0}', space=vmem, size = 0x20000, scoped, tag = 'output window, operand 0']
    %14 = vsyncpa [#allocation7], 0
    %15 = vsyncpa [#allocation6], 0
    %s16 = scalar_lea.sflag [#allocation6], 1
    %17 = vsyncpa %s16, 0
    loop: start=0, step=1, limit=4
    $region2: #{attblock_v1_forward.1} parent=1 // loop_pre_header
      _
    $region3: #{attblock_v1_forward.1} parent=1 // loop_header
      %s19 = sphi 0, %s23
      %p20 = scmp.ge.s32.totalorder %s19, 4
      %s29 = sphi 0, %s31
      %s32 = sphi 0, %s29
      %s33 = sphi 0, %s32
      %s49 = sphi 0, %s33
      %s53 = sphi 0, %s53
      %s55 = sphi 0, %s53
      %s56 = sphi 0, %s55
      %s70 = sphi 0, %s56
      %s74 = sphi 0, %s74
      %s76 = sphi 0, %s74
      %s77 = sphi 0, %s76
      %s91 = sphi 0, %s77
      %s95 = sphi 0, %s95
      %s97 = sphi 0, %s95
      %s98 = sphi 0, %s97
      %s112 = sphi 0, %s98
      %s116 = sphi 0, %s116
      %s118 = sphi 0, %s116
      %s119 = sphi 0, %s118
      %s133 = sphi 0, %s119
      %s137 = sphi 0, %s137
      %s139 = sphi 0, %s137
      %s140 = sphi 0, %s139
      %s154 = sphi 0, %s140
      %s158 = sphi 0, %s158
      %s160 = sphi 0, %s158
      %s161 = sphi 0, %s160
      %s175 = sphi 0, %s161
      %s179 = sphi 0, %s179
      %s181 = sphi 0, %s179
      %s182 = sphi 0, %s181
      %s196 = sphi 0, %s182
      %s200 = sphi 0, %s200
      %s202 = sphi 0, %s200
      %s203 = sphi 0, %s202
      %s217 = sphi 0, %s203
      %s223 = sphi 0, %s225
      %s226 = sphi 0, %s223
      %s227 = sphi 0, %s226
      %s243 = sphi 0, %s227
    $region4: #{attblock_v1_forward.1} parent=1 // loop_header_branch
      %22 = sbr.rel (%p20) target = $region8
    $region5: #{attblock_v1_forward.1} parent=1 // loop_body
      %s24 = ssub.s32 %s19, 1
      %s25 = ssub.s32 %s19, 2
      %s26 = sadd.s32 %s19, 1
      %s27 = ssub.s32 %s19, %s26
      %p28 = scmp.eq.s32.totalorder %s27, 0
      %s30 = sadd.s32 %s29, 1
      %s31 = scalar_select %p28, %s29, %s30
      %p34 = pneg %p28
      %p35 = scmp.eq.s32.totalorder %s19, 1
      %p36 = por %p34, %p35
      %p37 = scmp.ne.s32.totalorder %s29, %s32
      %p38 = scmp.eq.s32.totalorder %s19, 0
      %p39 = por %p37, %p38
      %p40 = scmp.ne.s32.totalorder %s29, %s32
      %p41 = scmp.eq.s32.totalorder %s24, 1
      %p42 = por %p40, %p41
      %p43 = scmp.ne.s32.totalorder %s32, %s33
      %p44 = scmp.eq.s32.totalorder %s24, 0
      %p45 = por %p43, %p44
      %p46 = scmp.ne.s32.totalorder %s32, %s33
      %p47 = scmp.eq.s32.totalorder %s25, 1
      %p48 = por %p46, %p47
      %p50 = scmp.ne.s32.totalorder %s33, %s49
      %p51 = scmp.eq.s32.totalorder %s25, 0
      %p52 = por %p50, %p51
      %s54 = sadd.s32 %s53, 1
      %p57 = scmp.eq.s32.totalorder %s19, 1
      %p58 = scmp.ne.s32.totalorder %s53, %s55
      %p59 = scmp.eq.s32.totalorder %s19, 0
      %p60 = por %p58, %p59
      %p61 = scmp.ne.s32.totalorder %s53, %s55
      %p62 = scmp.eq.s32.totalorder %s24, 1
      %p63 = por %p61, %p62
      %p64 = scmp.ne.s32.totalorder %s55, %s56
      %p65 = scmp.eq.s32.totalorder %s24, 0
      %p66 = por %p64, %p65
      %p67 = scmp.ne.s32.totalorder %s55, %s56
      %p68 = scmp.eq.s32.totalorder %s25, 1
      %p69 = por %p67, %p68
      %p71 = scmp.ne.s32.totalorder %s56, %s70
      %p72 = scmp.eq.s32.totalorder %s25, 0
      %p73 = por %p71, %p72
      %s75 = sadd.s32 %s74, 1
      %p78 = scmp.eq.s32.totalorder %s19, 1
      %p79 = scmp.ne.s32.totalorder %s74, %s76
      %p80 = scmp.eq.s32.totalorder %s19, 0
      %p81 = por %p79, %p80
      %p82 = scmp.ne.s32.totalorder %s74, %s76
      %p83 = scmp.eq.s32.totalorder %s24, 1
      %p84 = por %p82, %p83
      %p85 = scmp.ne.s32.totalorder %s76, %s77
      %p86 = scmp.eq.s32.totalorder %s24, 0
      %p87 = por %p85, %p86
      %p88 = scmp.ne.s32.totalorder %s76, %s77
      %p89 = scmp.eq.s32.totalorder %s25, 1
      %p90 = por %p88, %p89
      %p92 = scmp.ne.s32.totalorder %s77, %s91
      %p93 = scmp.eq.s32.totalorder %s25, 0
      %p94 = por %p92, %p93
      %s96 = sadd.s32 %s95, 1
      %p99 = scmp.eq.s32.totalorder %s19, 1
      %p100 = scmp.ne.s32.totalorder %s95, %s97
      %p101 = scmp.eq.s32.totalorder %s19, 0
      %p102 = por %p100, %p101
      %p103 = scmp.ne.s32.totalorder %s95, %s97
      %p104 = scmp.eq.s32.totalorder %s24, 1
      %p105 = por %p103, %p104
      %p106 = scmp.ne.s32.totalorder %s97, %s98
      %p107 = scmp.eq.s32.totalorder %s24, 0
      %p108 = por %p106, %p107
      %p109 = scmp.ne.s32.totalorder %s97, %s98
      %p110 = scmp.eq.s32.totalorder %s25, 1
      %p111 = por %p109, %p110
      %p113 = scmp.ne.s32.totalorder %s98, %s112
      %p114 = scmp.eq.s32.totalorder %s25, 0
      %p115 = por %p113, %p114
      %s117 = sadd.s32 %s116, 1
      %p120 = scmp.eq.s32.totalorder %s19, 1
      %p121 = scmp.ne.s32.totalorder %s116, %s118
      %p122 = scmp.eq.s32.totalorder %s19, 0
      %p123 = por %p121, %p122
      %p124 = scmp.ne.s32.totalorder %s116, %s118
      %p125 = scmp.eq.s32.totalorder %s24, 1
      %p126 = por %p124, %p125
      %p127 = scmp.ne.s32.totalorder %s118, %s119
      %p128 = scmp.eq.s32.totalorder %s24, 0
      %p129 = por %p127, %p128
      %p130 = scmp.ne.s32.totalorder %s118, %s119
      %p131 = scmp.eq.s32.totalorder %s25, 1
      %p132 = por %p130, %p131
      %p134 = scmp.ne.s32.totalorder %s119, %s133
      %p135 = scmp.eq.s32.totalorder %s25, 0
      %p136 = por %p134, %p135
      %s138 = sadd.s32 %s137, 1
      %p141 = scmp.eq.s32.totalorder %s19, 1
      %p142 = scmp.ne.s32.totalorder %s137, %s139
      %p143 = scmp.eq.s32.totalorder %s19, 0
      %p144 = por %p142, %p143
      %p145 = scmp.ne.s32.totalorder %s137, %s139
      %p146 = scmp.eq.s32.totalorder %s24, 1
      %p147 = por %p145, %p146
      %p148 = scmp.ne.s32.totalorder %s139, %s140
      %p149 = scmp.eq.s32.totalorder %s24, 0
      %p150 = por %p148, %p149
      %p151 = scmp.ne.s32.totalorder %s139, %s140
      %p152 = scmp.eq.s32.totalorder %s25, 1
      %p153 = por %p151, %p152
      %p155 = scmp.ne.s32.totalorder %s140, %s154
      %p156 = scmp.eq.s32.totalorder %s25, 0
      %p157 = por %p155, %p156
      %s159 = sadd.s32 %s158, 1
      %p162 = scmp.eq.s32.totalorder %s19, 1
      %p163 = scmp.ne.s32.totalorder %s158, %s160
      %p164 = scmp.eq.s32.totalorder %s19, 0
      %p165 = por %p163, %p164
      %p166 = scmp.ne.s32.totalorder %s158, %s160
      %p167 = scmp.eq.s32.totalorder %s24, 1
      %p168 = por %p166, %p167
      %p169 = scmp.ne.s32.totalorder %s160, %s161
      %p170 = scmp.eq.s32.totalorder %s24, 0
      %p171 = por %p169, %p170
      %p172 = scmp.ne.s32.totalorder %s160, %s161
      %p173 = scmp.eq.s32.totalorder %s25, 1
      %p174 = por %p172, %p173
      %p176 = scmp.ne.s32.totalorder %s161, %s175
      %p177 = scmp.eq.s32.totalorder %s25, 0
      %p178 = por %p176, %p177
      %s180 = sadd.s32 %s179, 1
      %p183 = scmp.eq.s32.totalorder %s19, 1
      %p184 = scmp.ne.s32.totalorder %s179, %s181
      %p185 = scmp.eq.s32.totalorder %s19, 0
      %p186 = por %p184, %p185
      %p187 = scmp.ne.s32.totalorder %s179, %s181
      %p188 = scmp.eq.s32.totalorder %s24, 1
      %p189 = por %p187, %p188
      %p190 = scmp.ne.s32.totalorder %s181, %s182
      %p191 = scmp.eq.s32.totalorder %s24, 0
      %p192 = por %p190, %p191
      %p193 = scmp.ne.s32.totalorder %s181, %s182
      %p194 = scmp.eq.s32.totalorder %s25, 1
      %p195 = por %p193, %p194
      %p197 = scmp.ne.s32.totalorder %s182, %s196
      %p198 = scmp.eq.s32.totalorder %s25, 0
      %p199 = por %p197, %p198
      %s201 = sadd.s32 %s200, 1
      %p204 = scmp.eq.s32.totalorder %s19, 1
      %p205 = scmp.ne.s32.totalorder %s200, %s202
      %p206 = scmp.eq.s32.totalorder %s19, 0
      %p207 = por %p205, %p206
      %p208 = scmp.ne.s32.totalorder %s200, %s202
      %p209 = scmp.eq.s32.totalorder %s24, 1
      %p210 = por %p208, %p209
      %p211 = scmp.ne.s32.totalorder %s202, %s203
      %p212 = scmp.eq.s32.totalorder %s24, 0
      %p213 = por %p211, %p212
      %p214 = scmp.ne.s32.totalorder %s202, %s203
      %p215 = scmp.eq.s32.totalorder %s25, 1
      %p216 = por %p214, %p215
      %p218 = scmp.ne.s32.totalorder %s203, %s217
      %p219 = scmp.eq.s32.totalorder %s25, 0
      %p220 = por %p218, %p219
      %s221 = ssub.s32 %s19, %s26
      %p222 = scmp.eq.s32.totalorder %s221, 0
      %s224 = sadd.s32 %s223, 1
      %s225 = scalar_select %p222, %s223, %s224
      %p228 = pneg %p222
      %p229 = scmp.eq.s32.totalorder %s19, 1
      %p230 = por %p228, %p229
      %p231 = scmp.ne.s32.totalorder %s223, %s226
      %p232 = scmp.eq.s32.totalorder %s19, 0
      %p233 = por %p231, %p232
      %p234 = scmp.ne.s32.totalorder %s223, %s226
      %p235 = scmp.eq.s32.totalorder %s24, 1
      %p236 = por %p234, %p235
      %p237 = scmp.ne.s32.totalorder %s226, %s227
      %p238 = scmp.eq.s32.totalorder %s24, 0
      %p239 = por %p237, %p238
      %p240 = scmp.ne.s32.totalorder %s226, %s227
      %p241 = scmp.eq.s32.totalorder %s25, 1
      %p242 = por %p240, %p241
      %p244 = scmp.ne.s32.totalorder %s227, %s243
      %p245 = scmp.eq.s32.totalorder %s25, 0
      %p246 = por %p244, %p245
      %p247 = scmp.le.s32.totalorder 1, %s19
      %p248 = scmp.lt.s32.totalorder %s19, 3
      %p249 = pnand %p247, %p248
      %p250 = pneg %p249
      // Predicated region
      $region9: #{attblock_v1_forward.1} parent=5 // pred_check
        _
      $region10: #{attblock_v1_forward.1} parent=5 // pred_check_branch
        %252 = sbr.rel (%p249) target = $region12
      $region11: #{attblock_v1_forward.1} parent=5 // pred_region
        %s253 = ssub.s32 %s19, 1
        // Predicated region
        $region13: #{attblock_v1_forward.1} parent=11 // pred_check
          %p254 = pneg %p66
        $region14: #{attblock_v1_forward.1} parent=11 // pred_check_branch
          %256 = sbr.rel (%p254) target = $region16
        $region15: #{attblock_v1_forward.1} parent=11 // pred_region
          _
        $region16: #{attblock_v1_forward.1} parent=11 // pred_fallthru
          _
        // Predicated region
        $region17: #{attblock_v1_forward.1} parent=11 // pred_check
          %p257 = pneg %p87
        $region18: #{attblock_v1_forward.1} parent=11 // pred_check_branch
          %259 = sbr.rel (%p257) target = $region20
        $region19: #{attblock_v1_forward.1} parent=11 // pred_region
          _
        $region20: #{attblock_v1_forward.1} parent=11 // pred_fallthru
          _
        // Predicated region
        $region21: #{attblock_v1_forward.1} parent=11 // pred_check
          %p260 = pneg %p108
        $region22: #{attblock_v1_forward.1} parent=11 // pred_check_branch
          %262 = sbr.rel (%p260) target = $region24
        $region23: #{attblock_v1_forward.1} parent=11 // pred_region
          _
        $region24: #{attblock_v1_forward.1} parent=11 // pred_fallthru
          _
        // Predicated region
        $region25: #{attblock_v1_forward.1} parent=11 // pred_check
          %p263 = pneg %p129
        $region26: #{attblock_v1_forward.1} parent=11 // pred_check_branch
          %265 = sbr.rel (%p263) target = $region28
        $region27: #{attblock_v1_forward.1} parent=11 // pred_region
          _
        $region28: #{attblock_v1_forward.1} parent=11 // pred_fallthru
          _
        // Predicated region
        $region29: #{attblock_v1_forward.1} parent=11 // pred_check
          %p266 = pneg %p150
        $region30: #{attblock_v1_forward.1} parent=11 // pred_check_branch
          %268 = sbr.rel (%p266) target = $region32
        $region31: #{attblock_v1_forward.1} parent=11 // pred_region
          _
        $region32: #{attblock_v1_forward.1} parent=11 // pred_fallthru
          _
        // Predicated region
        $region33: #{attblock_v1_forward.1} parent=11 // pred_check
          %p269 = pneg %p171
        $region34: #{attblock_v1_forward.1} parent=11 // pred_check_branch
          %271 = sbr.rel (%p269) target = $region36
        $region35: #{attblock_v1_forward.1} parent=11 // pred_region
          _
        $region36: #{attblock_v1_forward.1} parent=11 // pred_fallthru
          _
        // Predicated region
        $region37: #{attblock_v1_forward.1} parent=11 // pred_check
          %p272 = pneg %p192
        $region38: #{attblock_v1_forward.1} parent=11 // pred_check_branch
          %274 = sbr.rel (%p272) target = $region40
        $region39: #{attblock_v1_forward.1} parent=11 // pred_region
          _
        $region40: #{attblock_v1_forward.1} parent=11 // pred_fallthru
          _
        // Predicated region
        $region41: #{attblock_v1_forward.1} parent=11 // pred_check
          %p275 = pneg %p213
        $region42: #{attblock_v1_forward.1} parent=11 // pred_check_branch
          %277 = sbr.rel (%p275) target = $region44
        $region43: #{attblock_v1_forward.1} parent=11 // pred_region
          %s279 = ssub.s32 16, 16
          %280 = vsyncadd [#allocation7], %s279
          %s282 = sshll.u32 %s8, 4
          %s283 = int_to_ptr.vmem [resolvable:$true] %s282
          %285 = dma.vmem_to_smem %s283, 16, [#allocation5], [#allocation7]
        $region44: #{attblock_v1_forward.1} parent=11 // pred_fallthru
          _
      $region12: #{attblock_v1_forward.1} parent=5 // pred_fallthru
        _
      %p286 = scmp.lt.s32.totalorder %s19, 2
      // Predicated region
      $region45: #{attblock_v1_forward.1} parent=5 // pred_check
        %p287 = pneg %p286
      $region46: #{attblock_v1_forward.1} parent=5 // pred_check_branch
        %289 = sbr.rel (%p287) target = $region48
      $region47: #{attblock_v1_forward.1} parent=5 // pred_region
        // Predicated region
        $region49: #{attblock_v1_forward.1} parent=47 // pred_check
          %p290 = pneg %p39
        $region50: #{attblock_v1_forward.1} parent=47 // pred_check_branch
          %292 = sbr.rel (%p290) target = $region52
        $region51: #{attblock_v1_forward.1} parent=47 // pred_region
          %p293 = scmp.lt.s32.totalorder %s19, 1
          %s294 = scalar_select %p293, %s19, 1
          %s295 = smul.addr %s294, 8
          %s296 = smul.addr %s295, 8
          %s297 = scalar_lea.vmem %s0, %s296
        $region52: #{attblock_v1_forward.1} parent=47 // pred_fallthru
          _
      $region48: #{attblock_v1_forward.1} parent=5 // pred_fallthru
        _
      %p298 = scmp.le.s32.totalorder 1, %s19
      %p299 = scmp.lt.s32.totalorder %s19, 3
      %p300 = pnand %p298, %p299
      %p301 = pneg %p300
      // Predicated region
      $region53: #{attblock_v1_forward.1} parent=5 // pred_check
        _
      $region54: #{attblock_v1_forward.1} parent=5 // pred_check_branch
        %303 = sbr.rel (%p300) target = $region56
      $region55: #{attblock_v1_forward.1} parent=5 // pred_region
        %s304 = ssub.s32 %s19, 1
        // Predicated region
        $region57: #{attblock_v1_forward.1} parent=55 // pred_check
          %p305 = pneg %p213
        $region58: #{attblock_v1_forward.1} parent=55 // pred_check_branch
          %307 = sbr.rel (%p305) target = $region60
        $region59: #{attblock_v1_forward.1} parent=55 // pred_region
          %308 = dma.done [#allocation7], 16
        $region60: #{attblock_v1_forward.1} parent=55 // pred_fallthru
          _
        %309 = sfence
        %p310 = scmp.lt.s32.totalorder %s24, 1
        %s311 = scalar_select %p310, %s24, 1
        %s312 = smul.addr %s311, 8
        %s313 = smul.addr %s312, 8
        %s314 = scalar_lea.vmem %s0, %s313
        %p315 = pneg %p45
        %p316 = pneg %p42
        %p317 = pneg %p66
        %p318 = pneg %p63
        %p319 = pneg %p87
        %p320 = pneg %p84
        %p321 = pneg %p108
        %p322 = pneg %p105
        %p323 = pneg %p129
        %p324 = pneg %p126
        %p325 = pneg %p150
        %p326 = pneg %p147
        %p327 = pneg %p171
        %p328 = pneg %p168
        %p329 = pneg %p192
        %p330 = pneg %p189
        %p331 = pneg %p213
        %p332 = pneg %p210
        %p333 = pneg %p239
        %p334 = pneg %p236
        %s335 = sand.u32 %s226, 1
        %s336 = scalar_lea.sflag [#allocation6], %s335
        %s337 = sand.u32 %s226, 1
        %s338 = smul.addr %s337, 128
        %s339 = scalar_lea.vmem [#allocation8], %s338
        %p340 = scmp.lt.s32.totalorder %s24, 1
        %s341 = scalar_select %p340, %s24, 1
        %s342 = smul.addr %s341, 8
        %s343 = smul.addr %s342, 8
        %s344 = scalar_lea.vmem %s0, %s343
        %vm345 = vcmask 31744
        %346 = vst.msk [vmem:[#allocation2] sm:$0xff] %vm345, 0.0
        %vm347 = vcmask 25600
        %348 = vst.msk [vmem:[#allocation2 + $0x8] sm:$0x3] %vm347, 0.0
        %349 = vst.msk [vmem:[#allocation2 + $0x10] sm:$0xff] %vm345, 0.0
        %350 = vst.msk [vmem:[#allocation2 + $0x18] sm:$0x3] %vm347, 0.0
        %351 = vst.msk [vmem:[#allocation2 + $0x20] sm:$0xff] %vm345, 0.0
        %352 = vst.msk [vmem:[#allocation2 + $0x28] sm:$0x3] %vm347, 0.0
        %353 = vst.msk [vmem:[#allocation2 + $0x30] sm:$0xff] %vm345, 0.0
        %354 = vst.msk [vmem:[#allocation2 + $0x38] sm:$0x3] %vm347, 0.0
        %355 = vst.msk [vmem:[#allocation2 + $0x40] sm:$0xff] %vm345, 0.0
        %356 = vst.msk [vmem:[#allocation2 + $0x48] sm:$0x3] %vm347, 0.0
        %357 = vst.msk [vmem:[#allocation2 + $0x50] sm:$0xff] %vm345, 0.0
        %358 = vst.msk [vmem:[#allocation2 + $0x58] sm:$0x3] %vm347, 0.0
        %359 = vst.msk [vmem:[#allocation2 + $0x60] sm:$0xff] %vm345, 0.0
        %360 = vst.msk [vmem:[#allocation2 + $0x68] sm:$0x3] %vm347, 0.0
        %361 = vst.msk [vmem:[#allocation2 + $0x70] sm:$0xff] %vm345, 0.0
        %362 = vst.msk [vmem:[#allocation2 + $0x78] sm:$0x3] %vm347, 0.0
        %363 = vst.msk [vmem:[#allocation2 + $0x80] sm:$0xff] %vm345, 0.0
        %364 = vst.msk [vmem:[#allocation2 + $0x88] sm:$0x3] %vm347, 0.0
        %365 = vst.msk [vmem:[#allocation2 + $0x90] sm:$0xff] %vm345, 0.0
        %366 = vst.msk [vmem:[#allocation2 + $0x98] sm:$0x3] %vm347, 0.0
        %v367 = vld [vmem:[%s344] sm:$0xff]
        %v368 = vld [vmem:[%s344 + $0x8] sm:$0xff]
        %v369 = vld [vmem:[%s344 + $0x10] sm:$0xff]
        %v370 = vld [vmem:[%s344 + $0x18] sm:$0xff]
        %v371 = vld [vmem:[%s344 + $0x20] sm:$0xff]
        %v372 = vld [vmem:[%s344 + $0x28] sm:$0xff]
        %v373 = vld [vmem:[%s344 + $0x30] sm:$0xff]
        %v374 = vld [vmem:[%s344 + $0x38] sm:$0xff]
        %s375 = scalar_lea.vmem [#allocation2], 16
        %376 = vst.msk [vmem:[%s375 + $0x1] sm:$0xff] %vm345, %v367
        %377 = vst.msk [vmem:[%s375 + $0x11] sm:$0xff] %vm345, %v368
        %378 = vst.msk [vmem:[%s375 + $0x21] sm:$0xff] %vm345, %v369
        %379 = vst.msk [vmem:[%s375 + $0x31] sm:$0xff] %vm345, %v370
        %380 = vst.msk [vmem:[%s375 + $0x41] sm:$0xff] %vm345, %v371
        %381 = vst.msk [vmem:[%s375 + $0x51] sm:$0xff] %vm345, %v372
        %382 = vst.msk [vmem:[%s375 + $0x61] sm:$0xff] %vm345, %v373
        %383 = vst.msk [vmem:[%s375 + $0x71] sm:$0xff] %vm345, %v374
        %v384 = vld [vmem:[%s2] sm:$0x1]
        %v385 = vld [vmem:[#allocation2] sm:$0xff]
        %v386 = vld [vmem:[#allocation2 + $0x10] sm:$0xff]
        %v387 = vld [vmem:[#allocation2 + $0x20] sm:$0xff]
        %v388 = vld [vmem:[#allocation2 + $0x30] sm:$0xff]
        %v389 = vld [vmem:[#allocation2 + $0x40] sm:$0xff]
        %v390 = vld [vmem:[#allocation2 + $0x50] sm:$0xff]
        %v391 = vld [vmem:[#allocation2 + $0x60] sm:$0xff]
        %v392 = vld [vmem:[#allocation2 + $0x70] sm:$0xff]
        %v393 = vld [vmem:[%s1] sm:$0xf]
        %v394 = vld [vmem:[#allocation2 + $0x1] sm:$0xff]
        %v395 = vld [vmem:[#allocation2 + $0x11] sm:$0xff]
        %v396 = vld [vmem:[#allocation2 + $0x21] sm:$0xff]
        %v397 = vld [vmem:[#allocation2 + $0x31] sm:$0xff]
        %v398 = vld [vmem:[#allocation2 + $0x41] sm:$0xff]
        %v399 = vld [vmem:[#allocation2 + $0x51] sm:$0xff]
        %v400 = vld [vmem:[#allocation2 + $0x61] sm:$0xff]
        %v401 = vld [vmem:[#allocation2 + $0x71] sm:$0xff]
        %s402 = scalar_lea.vmem %s1, 4
        %v403 = vld [vmem:[%s402] sm:$0xf]
        %v405 = vsel %vm345, %v394, 0
        %v408 = vsel %vm345, %v395, 0
        %v411 = vsel %vm345, %v396, 0
        %v414 = vsel %vm345, %v397, 0
        %v417 = vsel %vm345, %v398, 0
        %v420 = vsel %vm345, %v399, 0
        %v423 = vsel %vm345, %v400, 0
        %v426 = vsel %vm345, %v401, 0
        %vm428 = vcmask 1043456
        %v430 = vsel %vm428, %v403, 0
        %432 = vmatprep.subr.mxu0 0.0
        %433 = vmatpush1.msra.mxu0 0.0
        %434 = vmatprep.subr.mxu0 0.0
        %435 = vmatpush1.msra.mxu0 0.0
        %436 = vmatprep.subr.mxu0 0.0
        %437 = vmatpush1.msra.mxu0 0.0
        %438 = vmatprep.subr.mxu0 0.0
        %439 = vmatpush1.msra.mxu0 0.0
        %440 = vmatprep.subr.mxu0 0.0
        %441 = vmatpush1.msra.mxu0 0.0
        %442 = vmatprep.subr.mxu0 0.0
        %443 = vmatpush1.msra.mxu0 0.0
        %444 = vmatprep.subr.mxu0 0.0
        %445 = vmatpush1.msra.mxu0 0.0
        %446 = vmatprep.subr.mxu0 0.0
        %447 = vmatpush1.msra.mxu0 0.0
        %448 = vmatprep.subr.mxu0 0.0
        %449 = vmatpush1.msra.mxu0 0.0
        %450 = vmatprep.subr.mxu0 0.0
        %451 = vmatpush1.msra.mxu0 0.0
        %452 = vmatprep.subr.mxu0 0.0
        %453 = vmatpush1.msra.mxu0 0.0
        %454 = vmatprep.subr.mxu0 0.0
        %455 = vmatpush1.msra.mxu0 0.0
        %456 = vmatprep.subr.mxu0 0.0
        %457 = vmatpush1.msra.mxu0 0.0
        %458 = vmatprep.subr.mxu0 0.0
        %459 = vmatpush1.msra.mxu0 0.0
        %460 = vmatprep.subr.mxu0 0.0
        %461 = vmatpush1.msra.mxu0 0.0
        %462 = vmatprep.subr.mxu0 0.0
        %463 = vmatpush1.msra.mxu0 %v430
        %464 = vmatprep.subr.mxu0 0.0
        %465 = vmatpush2.msra.mxu0 0.0
        %466 = vmatprep.subr.mxu0 0.0
        %467 = vmatpush2.msra.mxu0 0.0
        %468 = vmatprep.subr.mxu0 0.0
        %469 = vmatpush2.msra.mxu0 0.0
        %470 = vmatprep.subr.mxu0 0.0
        %471 = vmatpush2.msra.mxu0 0.0
        %472 = vmatprep.subr.mxu0 0.0
        %473 = vmatpush2.msra.mxu0 0.0
        %474 = vmatprep.subr.mxu0 0.0
        %475 = vmatpush2.msra.mxu0 0.0
        %476 = vmatprep.subr.mxu0 0.0
        %477 = vmatpush2.msra.mxu0 0.0
        %478 = vmatprep.subr.mxu0 0.0
        %479 = vmatpush2.msra.mxu0 0.0
        %480 = vmatprep.subr.mxu0 0.0
        %481 = vmatpush2.msra.mxu0 0.0
        %482 = vmatprep.subr.mxu0 0.0
        %483 = vmatpush2.msra.mxu0 0.0
        %484 = vmatprep.subr.mxu0 0.0
        %485 = vmatpush2.msra.mxu0 0.0
        %486 = vmatprep.subr.mxu0 0.0
        %487 = vmatpush2.msra.mxu0 0.0
        %488 = vmatprep.subr.mxu0 0.0
        %489 = vmatpush2.msra.mxu0 0.0
        %490 = vmatprep.subr.mxu0 0.0
        %491 = vmatpush2.msra.mxu0 0.0
        %492 = vmatprep.subr.mxu0 0.0
        %493 = vmatpush2.msra.mxu0 0.0
        %494 = vmatprep.subr.mxu0 0.0
        %495 = vmatpush2.msra.mxu0 0.0
        %496 = vmatprep.mubr.f32.mxu0 0.0
        %497 = vmatmul.mubr.f32.gmra.mxu0 %v405
        %v498 = vpop.f32.mrf.mxu0
        %v499 = vadd.f32 0.0, %v498
        %v500 = vpop.f32.mrf.mxu0
        %501 = vmatprep.mubr.f32.mxu0 0.0
        %502 = vmatmul.mubr.f32.gmra.mxu0 %v408
        %v503 = vpop.f32.mrf.mxu0
        %v504 = vadd.f32 0.0, %v503
        %v505 = vpop.f32.mrf.mxu0
        %506 = vmatprep.mubr.f32.mxu0 0.0
        %507 = vmatmul.mubr.f32.gmra.mxu0 %v411
        %v508 = vpop.f32.mrf.mxu0
        %v509 = vadd.f32 0.0, %v508
        %v510 = vpop.f32.mrf.mxu0
        %511 = vmatprep.mubr.f32.mxu0 0.0
        %512 = vmatmul.mubr.f32.gmra.mxu0 %v414
        %v513 = vpop.f32.mrf.mxu0
        %v514 = vadd.f32 0.0, %v513
        %v515 = vpop.f32.mrf.mxu0
        %516 = vmatprep.mubr.f32.mxu0 0.0
        %517 = vmatmul.mubr.f32.gmra.mxu0 %v417
        %v518 = vpop.f32.mrf.mxu0
        %v519 = vadd.f32 0.0, %v518
        %v520 = vpop.f32.mrf.mxu0
        %521 = vmatprep.mubr.f32.mxu0 0.0
        %522 = vmatmul.mubr.f32.gmra.mxu0 %v420
        %v523 = vpop.f32.mrf.mxu0
        %v524 = vadd.f32 0.0, %v523
        %v525 = vpop.f32.mrf.mxu0
        %526 = vmatprep.mubr.f32.mxu0 0.0
        %527 = vmatmul.mubr.f32.gmra.mxu0 %v423
        %v528 = vpop.f32.mrf.mxu0
        %v529 = vadd.f32 0.0, %v528
        %v530 = vpop.f32.mrf.mxu0
        %531 = vmatprep.mubr.f32.mxu0 0.0
        %532 = vmatmul.mubr.f32.gmra.mxu0 %v426
        %v533 = vpop.f32.mrf.mxu0
        %v534 = vadd.f32 0.0, %v533
        %v535 = vpop.f32.mrf.mxu0
        %536 = vdwg.mxu0
        %v538 = vsel %vm345, %v385, 0
        %v541 = vsel %vm345, %v386, 0
        %v544 = vsel %vm345, %v387, 0
        %v547 = vsel %vm345, %v388, 0
        %v550 = vsel %vm345, %v389, 0
        %v553 = vsel %vm345, %v390, 0
        %v556 = vsel %vm345, %v391, 0
        %v559 = vsel %vm345, %v392, 0
        %v562 = vsel %vm428, %v393, 0
        %564 = vmatprep.subr.mxu0 0.0
        %565 = vmatpush1.msra.mxu0 0.0
        %566 = vmatprep.subr.mxu0 0.0
        %567 = vmatpush1.msra.mxu0 0.0
        %568 = vmatprep.subr.mxu0 0.0
        %569 = vmatpush1.msra.mxu0 0.0
        %570 = vmatprep.subr.mxu0 0.0
        %571 = vmatpush1.msra.mxu0 0.0
        %572 = vmatprep.subr.mxu0 0.0
        %573 = vmatpush1.msra.mxu0 0.0
        %574 = vmatprep.subr.mxu0 0.0
        %575 = vmatpush1.msra.mxu0 0.0
        %576 = vmatprep.subr.mxu0 0.0
        %577 = vmatpush1.msra.mxu0 0.0
        %578 = vmatprep.subr.mxu0 0.0
        %579 = vmatpush1.msra.mxu0 0.0
        %580 = vmatprep.subr.mxu0 0.0
        %581 = vmatpush1.msra.mxu0 0.0
        %582 = vmatprep.subr.mxu0 0.0
        %583 = vmatpush1.msra.mxu0 0.0
        %584 = vmatprep.subr.mxu0 0.0
        %585 = vmatpush1.msra.mxu0 0.0
        %586 = vmatprep.subr.mxu0 0.0
        %587 = vmatpush1.msra.mxu0 0.0
        %588 = vmatprep.subr.mxu0 0.0
        %589 = vmatpush1.msra.mxu0 0.0
        %590 = vmatprep.subr.mxu0 0.0
        %591 = vmatpush1.msra.mxu0 0.0
        %592 = vmatprep.subr.mxu0 0.0
        %593 = vmatpush1.msra.mxu0 0.0
        %594 = vmatprep.subr.mxu0 0.0
        %595 = vmatpush1.msra.mxu0 %v562
        %596 = vmatprep.subr.mxu0 0.0
        %597 = vmatpush2.msra.mxu0 0.0
        %598 = vmatprep.subr.mxu0 0.0
        %599 = vmatpush2.msra.mxu0 0.0
        %600 = vmatprep.subr.mxu0 0.0
        %601 = vmatpush2.msra.mxu0 0.0
        %602 = vmatprep.subr.mxu0 0.0
        %603 = vmatpush2.msra.mxu0 0.0
        %604 = vmatprep.subr.mxu0 0.0
        %605 = vmatpush2.msra.mxu0 0.0
        %606 = vmatprep.subr.mxu0 0.0
        %607 = vmatpush2.msra.mxu0 0.0
        %608 = vmatprep.subr.mxu0 0.0
        %609 = vmatpush2.msra.mxu0 0.0
        %610 = vmatprep.subr.mxu0 0.0
        %611 = vmatpush2.msra.mxu0 0.0
        %612 = vmatprep.subr.mxu0 0.0
        %613 = vmatpush2.msra.mxu0 0.0
        %614 = vmatprep.subr.mxu0 0.0
        %615 = vmatpush2.msra.mxu0 0.0
        %616 = vmatprep.subr.mxu0 0.0
        %617 = vmatpush2.msra.mxu0 0.0
        %618 = vmatprep.subr.mxu0 0.0
        %619 = vmatpush2.msra.mxu0 0.0
        %620 = vmatprep.subr.mxu0 0.0
        %621 = vmatpush2.msra.mxu0 0.0
        %622 = vmatprep.subr.mxu0 0.0
        %623 = vmatpush2.msra.mxu0 0.0
        %624 = vmatprep.subr.mxu0 0.0
        %625 = vmatpush2.msra.mxu0 0.0
        %626 = vmatprep.subr.mxu0 0.0
        %627 = vmatpush2.msra.mxu0 0.0
        %628 = vmatprep.mubr.f32.mxu0 0.0
        %629 = vmatmul.mubr.f32.gmra.mxu0 %v538
        %v630 = vpop.f32.mrf.mxu0
        %v631 = vadd.f32 %v499, %v630
        %v632 = vpop.f32.mrf.mxu0
        %633 = vmatprep.mubr.f32.mxu0 0.0
        %634 = vmatmul.mubr.f32.gmra.mxu0 %v541
        %v635 = vpop.f32.mrf.mxu0
        %v636 = vadd.f32 %v504, %v635
        %v637 = vpop.f32.mrf.mxu0
        %638 = vmatprep.mubr.f32.mxu0 0.0
        %639 = vmatmul.mubr.f32.gmra.mxu0 %v544
        %v640 = vpop.f32.mrf.mxu0
        %v641 = vadd.f32 %v509, %v640
        %v642 = vpop.f32.mrf.mxu0
        %643 = vmatprep.mubr.f32.mxu0 0.0
        %644 = vmatmul.mubr.f32.gmra.mxu0 %v547
        %v645 = vpop.f32.mrf.mxu0
        %v646 = vadd.f32 %v514, %v645
        %v647 = vpop.f32.mrf.mxu0
        %648 = vmatprep.mubr.f32.mxu0 0.0
        %649 = vmatmul.mubr.f32.gmra.mxu0 %v550
        %v650 = vpop.f32.mrf.mxu0
        %v651 = vadd.f32 %v519, %v650
        %v652 = vpop.f32.mrf.mxu0
        %653 = vmatprep.mubr.f32.mxu0 0.0
        %654 = vmatmul.mubr.f32.gmra.mxu0 %v553
        %v655 = vpop.f32.mrf.mxu0
        %v656 = vadd.f32 %v524, %v655
        %v657 = vpop.f32.mrf.mxu0
        %658 = vmatprep.mubr.f32.mxu0 0.0
        %659 = vmatmul.mubr.f32.gmra.mxu0 %v556
        %v660 = vpop.f32.mrf.mxu0
        %v661 = vadd.f32 %v529, %v660
        %v662 = vpop.f32.mrf.mxu0
        %663 = vmatprep.mubr.f32.mxu0 0.0
        %664 = vmatmul.mubr.f32.gmra.mxu0 %v559
        %v665 = vpop.f32.mrf.mxu0
        %v666 = vadd.f32 %v534, %v665
        %v667 = vpop.f32.mrf.mxu0
        %668 = vdwg.mxu0
        %v669 = vld [vmem:[#allocation2 + $0x2] sm:$0xff]
        %v670 = vld [vmem:[#allocation2 + $0x12] sm:$0xff]
        %v671 = vld [vmem:[#allocation2 + $0x22] sm:$0xff]
        %v672 = vld [vmem:[#allocation2 + $0x32] sm:$0xff]
        %v673 = vld [vmem:[#allocation2 + $0x42] sm:$0xff]
        %v674 = vld [vmem:[#allocation2 + $0x52] sm:$0xff]
        %v675 = vld [vmem:[#allocation2 + $0x62] sm:$0xff]
        %v676 = vld [vmem:[#allocation2 + $0x72] sm:$0xff]
        %s677 = scalar_lea.vmem %s1, 8
        %v678 = vld [vmem:[%s677] sm:$0xf]
        %v680 = vsel %vm345, %v669, 0
        %v683 = vsel %vm345, %v670, 0
        %v686 = vsel %vm345, %v671, 0
        %v689 = vsel %vm345, %v672, 0
        %v692 = vsel %vm345, %v673, 0
        %v695 = vsel %vm345, %v674, 0
        %v698 = vsel %vm345, %v675, 0
        %v701 = vsel %vm345, %v676, 0
        %v704 = vsel %vm428, %v678, 0
        %706 = vmatprep.subr.mxu0 0.0
        %707 = vmatpush1.msra.mxu0 0.0
        %708 = vmatprep.subr.mxu0 0.0
        %709 = vmatpush1.msra.mxu0 0.0
        %710 = vmatprep.subr.mxu0 0.0
        %711 = vmatpush1.msra.mxu0 0.0
        %712 = vmatprep.subr.mxu0 0.0
        %713 = vmatpush1.msra.mxu0 0.0
        %714 = vmatprep.subr.mxu0 0.0
        %715 = vmatpush1.msra.mxu0 0.0
        %716 = vmatprep.subr.mxu0 0.0
        %717 = vmatpush1.msra.mxu0 0.0
        %718 = vmatprep.subr.mxu0 0.0
        %719 = vmatpush1.msra.mxu0 0.0
        %720 = vmatprep.subr.mxu0 0.0
        %721 = vmatpush1.msra.mxu0 0.0
        %722 = vmatprep.subr.mxu0 0.0
        %723 = vmatpush1.msra.mxu0 0.0
        %724 = vmatprep.subr.mxu0 0.0
        %725 = vmatpush1.msra.mxu0 0.0
        %726 = vmatprep.subr.mxu0 0.0
        %727 = vmatpush1.msra.mxu0 0.0
        %728 = vmatprep.subr.mxu0 0.0
        %729 = vmatpush1.msra.mxu0 0.0
        %730 = vmatprep.subr.mxu0 0.0
        %731 = vmatpush1.msra.mxu0 0.0
        %732 = vmatprep.subr.mxu0 0.0
        %733 = vmatpush1.msra.mxu0 0.0
        %734 = vmatprep.subr.mxu0 0.0
        %735 = vmatpush1.msra.mxu0 0.0
        %736 = vmatprep.subr.mxu0 0.0
        %737 = vmatpush1.msra.mxu0 %v704
        %738 = vmatprep.subr.mxu0 0.0
        %739 = vmatpush2.msra.mxu0 0.0
        %740 = vmatprep.subr.mxu0 0.0
        %741 = vmatpush2.msra.mxu0 0.0
        %742 = vmatprep.subr.mxu0 0.0
        %743 = vmatpush2.msra.mxu0 0.0
        %744 = vmatprep.subr.mxu0 0.0
        %745 = vmatpush2.msra.mxu0 0.0
        %746 = vmatprep.subr.mxu0 0.0
        %747 = vmatpush2.msra.mxu0 0.0
        %748 = vmatprep.subr.mxu0 0.0
        %749 = vmatpush2.msra.mxu0 0.0
        %750 = vmatprep.subr.mxu0 0.0
        %751 = vmatpush2.msra.mxu0 0.0
        %752 = vmatprep.subr.mxu0 0.0
        %753 = vmatpush2.msra.mxu0 0.0
        %754 = vmatprep.subr.mxu0 0.0
        %755 = vmatpush2.msra.mxu0 0.0
        %756 = vmatprep.subr.mxu0 0.0
        %757 = vmatpush2.msra.mxu0 0.0
        %758 = vmatprep.subr.mxu0 0.0
        %759 = vmatpush2.msra.mxu0 0.0
        %760 = vmatprep.subr.mxu0 0.0
        %761 = vmatpush2.msra.mxu0 0.0
        %762 = vmatprep.subr.mxu0 0.0
        %763 = vmatpush2.msra.mxu0 0.0
        %764 = vmatprep.subr.mxu0 0.0
        %765 = vmatpush2.msra.mxu0 0.0
        %766 = vmatprep.subr.mxu0 0.0
        %767 = vmatpush2.msra.mxu0 0.0
        %768 = vmatprep.subr.mxu0 0.0
        %769 = vmatpush2.msra.mxu0 0.0
        %770 = vmatprep.mubr.f32.mxu0 0.0
        %771 = vmatmul.mubr.f32.gmra.mxu0 %v680
        %v772 = vpop.f32.mrf.mxu0
        %v773 = vadd.f32 0.0, %v772
        %v774 = vpop.f32.mrf.mxu0
        %775 = vmatprep.mubr.f32.mxu0 0.0
        %776 = vmatmul.mubr.f32.gmra.mxu0 %v683
        %v777 = vpop.f32.mrf.mxu0
        %v778 = vadd.f32 0.0, %v777
        %v779 = vpop.f32.mrf.mxu0
        %780 = vmatprep.mubr.f32.mxu0 0.0
        %781 = vmatmul.mubr.f32.gmra.mxu0 %v686
        %v782 = vpop.f32.mrf.mxu0
        %v783 = vadd.f32 0.0, %v782
        %v784 = vpop.f32.mrf.mxu0
        %785 = vmatprep.mubr.f32.mxu0 0.0
        %786 = vmatmul.mubr.f32.gmra.mxu0 %v689
        %v787 = vpop.f32.mrf.mxu0
        %v788 = vadd.f32 0.0, %v787
        %v789 = vpop.f32.mrf.mxu0
        %790 = vmatprep.mubr.f32.mxu0 0.0
        %791 = vmatmul.mubr.f32.gmra.mxu0 %v692
        %v792 = vpop.f32.mrf.mxu0
        %v793 = vadd.f32 0.0, %v792
        %v794 = vpop.f32.mrf.mxu0
        %795 = vmatprep.mubr.f32.mxu0 0.0
        %796 = vmatmul.mubr.f32.gmra.mxu0 %v695
        %v797 = vpop.f32.mrf.mxu0
        %v798 = vadd.f32 0.0, %v797
        %v799 = vpop.f32.mrf.mxu0
        %800 = vmatprep.mubr.f32.mxu0 0.0
        %801 = vmatmul.mubr.f32.gmra.mxu0 %v698
        %v802 = vpop.f32.mrf.mxu0
        %v803 = vadd.f32 0.0, %v802
        %v804 = vpop.f32.mrf.mxu0
        %805 = vmatprep.mubr.f32.mxu0 0.0
        %806 = vmatmul.mubr.f32.gmra.mxu0 %v701
        %v807 = vpop.f32.mrf.mxu0
        %v808 = vadd.f32 0.0, %v807
        %v809 = vpop.f32.mrf.mxu0
        %810 = vdwg.mxu0
        %v811 = vadd.f32 %v631, %v773
        %v812 = vadd.f32 %v636, %v778
        %v813 = vadd.f32 %v641, %v783
        %v814 = vadd.f32 %v646, %v788
        %v815 = vadd.f32 %v651, %v793
        %v816 = vadd.f32 %v656, %v798
        %v817 = vadd.f32 %v661, %v803
        %v818 = vadd.f32 %v666, %v808
        %v819 = vld [vmem:[%s375] sm:$0xff]
        %v820 = vld [vmem:[%s375 + $0x10] sm:$0xff]
        %v821 = vld [vmem:[%s375 + $0x20] sm:$0xff]
        %v822 = vld [vmem:[%s375 + $0x30] sm:$0xff]
        %v823 = vld [vmem:[%s375 + $0x40] sm:$0xff]
        %v824 = vld [vmem:[%s375 + $0x50] sm:$0xff]
        %v825 = vld [vmem:[%s375 + $0x60] sm:$0xff]
        %v826 = vld [vmem:[%s375 + $0x70] sm:$0xff]
        %s827 = scalar_lea.vmem %s1, 12
        %v828 = vld [vmem:[%s827] sm:$0xf]
        %v830 = vsel %vm345, %v819, 0
        %v833 = vsel %vm345, %v820, 0
        %v836 = vsel %vm345, %v821, 0
        %v839 = vsel %vm345, %v822, 0
        %v842 = vsel %vm345, %v823, 0
        %v845 = vsel %vm345, %v824, 0
        %v848 = vsel %vm345, %v825, 0
        %v851 = vsel %vm345, %v826, 0
        %v854 = vsel %vm428, %v828, 0
        %856 = vmatprep.subr.mxu0 0.0
        %857 = vmatpush1.msra.mxu0 0.0
        %858 = vmatprep.subr.mxu0 0.0
        %859 = vmatpush1.msra.mxu0 0.0
        %860 = vmatprep.subr.mxu0 0.0
        %861 = vmatpush1.msra.mxu0 0.0
        %862 = vmatprep.subr.mxu0 0.0
        %863 = vmatpush1.msra.mxu0 0.0
        %864 = vmatprep.subr.mxu0 0.0
        %865 = vmatpush1.msra.mxu0 0.0
        %866 = vmatprep.subr.mxu0 0.0
        %867 = vmatpush1.msra.mxu0 0.0
        %868 = vmatprep.subr.mxu0 0.0
        %869 = vmatpush1.msra.mxu0 0.0
        %870 = vmatprep.subr.mxu0 0.0
        %871 = vmatpush1.msra.mxu0 0.0
        %872 = vmatprep.subr.mxu0 0.0
        %873 = vmatpush1.msra.mxu0 0.0
        %874 = vmatprep.subr.mxu0 0.0
        %875 = vmatpush1.msra.mxu0 0.0
        %876 = vmatprep.subr.mxu0 0.0
        %877 = vmatpush1.msra.mxu0 0.0
        %878 = vmatprep.subr.mxu0 0.0
        %879 = vmatpush1.msra.mxu0 0.0
        %880 = vmatprep.subr.mxu0 0.0
        %881 = vmatpush1.msra.mxu0 0.0
        %882 = vmatprep.subr.mxu0 0.0
        %883 = vmatpush1.msra.mxu0 0.0
        %884 = vmatprep.subr.mxu0 0.0
        %885 = vmatpush1.msra.mxu0 0.0
        %886 = vmatprep.subr.mxu0 0.0
        %887 = vmatpush1.msra.mxu0 %v854
        %888 = vmatprep.subr.mxu0 0.0
        %889 = vmatpush2.msra.mxu0 0.0
        %890 = vmatprep.subr.mxu0 0.0
        %891 = vmatpush2.msra.mxu0 0.0
        %892 = vmatprep.subr.mxu0 0.0
        %893 = vmatpush2.msra.mxu0 0.0
        %894 = vmatprep.subr.mxu0 0.0
        %895 = vmatpush2.msra.mxu0 0.0
        %896 = vmatprep.subr.mxu0 0.0
        %897 = vmatpush2.msra.mxu0 0.0
        %898 = vmatprep.subr.mxu0 0.0
        %899 = vmatpush2.msra.mxu0 0.0
        %900 = vmatprep.subr.mxu0 0.0
        %901 = vmatpush2.msra.mxu0 0.0
        %902 = vmatprep.subr.mxu0 0.0
        %903 = vmatpush2.msra.mxu0 0.0
        %904 = vmatprep.subr.mxu0 0.0
        %905 = vmatpush2.msra.mxu0 0.0
        %906 = vmatprep.subr.mxu0 0.0
        %907 = vmatpush2.msra.mxu0 0.0
        %908 = vmatprep.subr.mxu0 0.0
        %909 = vmatpush2.msra.mxu0 0.0
        %910 = vmatprep.subr.mxu0 0.0
        %911 = vmatpush2.msra.mxu0 0.0
        %912 = vmatprep.subr.mxu0 0.0
        %913 = vmatpush2.msra.mxu0 0.0
        %914 = vmatprep.subr.mxu0 0.0
        %915 = vmatpush2.msra.mxu0 0.0
        %916 = vmatprep.subr.mxu0 0.0
        %917 = vmatpush2.msra.mxu0 0.0
        %918 = vmatprep.subr.mxu0 0.0
        %919 = vmatpush2.msra.mxu0 0.0
        %920 = vmatprep.mubr.f32.mxu0 0.0
        %921 = vmatmul.mubr.f32.gmra.mxu0 %v830
        %v922 = vpop.f32.mrf.mxu0
        %v923 = vadd.f32 0.0, %v922
        %v924 = vpop.f32.mrf.mxu0
        %925 = vmatprep.mubr.f32.mxu0 0.0
        %926 = vmatmul.mubr.f32.gmra.mxu0 %v833
        %v927 = vpop.f32.mrf.mxu0
        %v928 = vadd.f32 0.0, %v927
        %v929 = vpop.f32.mrf.mxu0
        %930 = vmatprep.mubr.f32.mxu0 0.0
        %931 = vmatmul.mubr.f32.gmra.mxu0 %v836
        %v932 = vpop.f32.mrf.mxu0
        %v933 = vadd.f32 0.0, %v932
        %v934 = vpop.f32.mrf.mxu0
        %935 = vmatprep.mubr.f32.mxu0 0.0
        %936 = vmatmul.mubr.f32.gmra.mxu0 %v839
        %v937 = vpop.f32.mrf.mxu0
        %v938 = vadd.f32 0.0, %v937
        %v939 = vpop.f32.mrf.mxu0
        %940 = vmatprep.mubr.f32.mxu0 0.0
        %941 = vmatmul.mubr.f32.gmra.mxu0 %v842
        %v942 = vpop.f32.mrf.mxu0
        %v943 = vadd.f32 0.0, %v942
        %v944 = vpop.f32.mrf.mxu0
        %945 = vmatprep.mubr.f32.mxu0 0.0
        %946 = vmatmul.mubr.f32.gmra.mxu0 %v845
        %v947 = vpop.f32.mrf.mxu0
        %v948 = vadd.f32 0.0, %v947
        %v949 = vpop.f32.mrf.mxu0
        %950 = vmatprep.mubr.f32.mxu0 0.0
        %951 = vmatmul.mubr.f32.gmra.mxu0 %v848
        %v952 = vpop.f32.mrf.mxu0
        %v953 = vadd.f32 0.0, %v952
        %v954 = vpop.f32.mrf.mxu0
        %955 = vmatprep.mubr.f32.mxu0 0.0
        %956 = vmatmul.mubr.f32.gmra.mxu0 %v851
        %v957 = vpop.f32.mrf.mxu0
        %v958 = vadd.f32 0.0, %v957
        %v959 = vpop.f32.mrf.mxu0
        %960 = vdwg.mxu0
        %v961 = vadd.f32 %v811, %v923
        %v962 = vadd.f32 %v812, %v928
        %v963 = vadd.f32 %v813, %v933
        %v964 = vadd.f32 %v814, %v938
        %v965 = vadd.f32 %v815, %v943
        %v966 = vadd.f32 %v816, %v948
        %v967 = vadd.f32 %v817, %v953
        %v968 = vadd.f32 %v818, %v958
        %v969 = vld [vmem:[%s375 + $0x1] sm:$0xff]
        %v970 = vld [vmem:[%s375 + $0x11] sm:$0xff]
        %v971 = vld [vmem:[%s375 + $0x21] sm:$0xff]
        %v972 = vld [vmem:[%s375 + $0x31] sm:$0xff]
        %v973 = vld [vmem:[%s375 + $0x41] sm:$0xff]
        %v974 = vld [vmem:[%s375 + $0x51] sm:$0xff]
        %v975 = vld [vmem:[%s375 + $0x61] sm:$0xff]
        %v976 = vld [vmem:[%s375 + $0x71] sm:$0xff]
        %s977 = scalar_lea.vmem %s1, 16
        %v978 = vld [vmem:[%s977] sm:$0xf]
        %v980 = vsel %vm345, %v969, 0
        %v983 = vsel %vm345, %v970, 0
        %v986 = vsel %vm345, %v971, 0
        %v989 = vsel %vm345, %v972, 0
        %v992 = vsel %vm345, %v973, 0
        %v995 = vsel %vm345, %v974, 0
        %v998 = vsel %vm345, %v975, 0
        %v1001 = vsel %vm345, %v976, 0
        %v1004 = vsel %vm428, %v978, 0
        %1006 = vmatprep.subr.mxu0 0.0
        %1007 = vmatpush1.msra.mxu0 0.0
        %1008 = vmatprep.subr.mxu0 0.0
        %1009 = vmatpush1.msra.mxu0 0.0
        %1010 = vmatprep.subr.mxu0 0.0
        %1011 = vmatpush1.msra.mxu0 0.0
        %1012 = vmatprep.subr.mxu0 0.0
        %1013 = vmatpush1.msra.mxu0 0.0
        %1014 = vmatprep.subr.mxu0 0.0
        %1015 = vmatpush1.msra.mxu0 0.0
        %1016 = vmatprep.subr.mxu0 0.0
        %1017 = vmatpush1.msra.mxu0 0.0
        %1018 = vmatprep.subr.mxu0 0.0
        %1019 = vmatpush1.msra.mxu0 0.0
        %1020 = vmatprep.subr.mxu0 0.0
        %1021 = vmatpush1.msra.mxu0 0.0
        %1022 = vmatprep.subr.mxu0 0.0
        %1023 = vmatpush1.msra.mxu0 0.0
        %1024 = vmatprep.subr.mxu0 0.0
        %1025 = vmatpush1.msra.mxu0 0.0
        %1026 = vmatprep.subr.mxu0 0.0
        %1027 = vmatpush1.msra.mxu0 0.0
        %1028 = vmatprep.subr.mxu0 0.0
        %1029 = vmatpush1.msra.mxu0 0.0
        %1030 = vmatprep.subr.mxu0 0.0
        %1031 = vmatpush1.msra.mxu0 0.0
        %1032 = vmatprep.subr.mxu0 0.0
        %1033 = vmatpush1.msra.mxu0 0.0
        %1034 = vmatprep.subr.mxu0 0.0
        %1035 = vmatpush1.msra.mxu0 0.0
        %1036 = vmatprep.subr.mxu0 0.0
        %1037 = vmatpush1.msra.mxu0 %v1004
        %1038 = vmatprep.subr.mxu0 0.0
        %1039 = vmatpush2.msra.mxu0 0.0
        %1040 = vmatprep.subr.mxu0 0.0
        %1041 = vmatpush2.msra.mxu0 0.0
        %1042 = vmatprep.subr.mxu0 0.0
        %1043 = vmatpush2.msra.mxu0 0.0
        %1044 = vmatprep.subr.mxu0 0.0
        %1045 = vmatpush2.msra.mxu0 0.0
        %1046 = vmatprep.subr.mxu0 0.0
        %1047 = vmatpush2.msra.mxu0 0.0
        %1048 = vmatprep.subr.mxu0 0.0
        %1049 = vmatpush2.msra.mxu0 0.0
        %1050 = vmatprep.subr.mxu0 0.0
        %1051 = vmatpush2.msra.mxu0 0.0
        %1052 = vmatprep.subr.mxu0 0.0
        %1053 = vmatpush2.msra.mxu0 0.0
        %1054 = vmatprep.subr.mxu0 0.0
        %1055 = vmatpush2.msra.mxu0 0.0
        %1056 = vmatprep.subr.mxu0 0.0
        %1057 = vmatpush2.msra.mxu0 0.0
        %1058 = vmatprep.subr.mxu0 0.0
        %1059 = vmatpush2.msra.mxu0 0.0
        %1060 = vmatprep.subr.mxu0 0.0
        %1061 = vmatpush2.msra.mxu0 0.0
        %1062 = vmatprep.subr.mxu0 0.0
        %1063 = vmatpush2.msra.mxu0 0.0
        %1064 = vmatprep.subr.mxu0 0.0
        %1065 = vmatpush2.msra.mxu0 0.0
        %1066 = vmatprep.subr.mxu0 0.0
        %1067 = vmatpush2.msra.mxu0 0.0
        %1068 = vmatprep.subr.mxu0 0.0
        %1069 = vmatpush2.msra.mxu0 0.0
        %1070 = vmatprep.mubr.f32.mxu0 0.0
        %1071 = vmatmul.mubr.f32.gmra.mxu0 %v980
        %v1072 = vpop.f32.mrf.mxu0
        %v1073 = vadd.f32 0.0, %v1072
        %v1074 = vpop.f32.mrf.mxu0
        %1075 = vmatprep.mubr.f32.mxu0 0.0
        %1076 = vmatmul.mubr.f32.gmra.mxu0 %v983
        %v1077 = vpop.f32.mrf.mxu0
        %v1078 = vadd.f32 0.0, %v1077
        %v1079 = vpop.f32.mrf.mxu0
        %1080 = vmatprep.mubr.f32.mxu0 0.0
        %1081 = vmatmul.mubr.f32.gmra.mxu0 %v986
        %v1082 = vpop.f32.mrf.mxu0
        %v1083 = vadd.f32 0.0, %v1082
        %v1084 = vpop.f32.mrf.mxu0
        %1085 = vmatprep.mubr.f32.mxu0 0.0
        %1086 = vmatmul.mubr.f32.gmra.mxu0 %v989
        %v1087 = vpop.f32.mrf.mxu0
        %v1088 = vadd.f32 0.0, %v1087
        %v1089 = vpop.f32.mrf.mxu0
        %1090 = vmatprep.mubr.f32.mxu0 0.0
        %1091 = vmatmul.mubr.f32.gmra.mxu0 %v992
        %v1092 = vpop.f32.mrf.mxu0
        %v1093 = vadd.f32 0.0, %v1092
        %v1094 = vpop.f32.mrf.mxu0
        %1095 = vmatprep.mubr.f32.mxu0 0.0
        %1096 = vmatmul.mubr.f32.gmra.mxu0 %v995
        %v1097 = vpop.f32.mrf.mxu0
        %v1098 = vadd.f32 0.0, %v1097
        %v1099 = vpop.f32.mrf.mxu0
        %1100 = vmatprep.mubr.f32.mxu0 0.0
        %1101 = vmatmul.mubr.f32.gmra.mxu0 %v998
        %v1102 = vpop.f32.mrf.mxu0
        %v1103 = vadd.f32 0.0, %v1102
        %v1104 = vpop.f32.mrf.mxu0
        %1105 = vmatprep.mubr.f32.mxu0 0.0
        %1106 = vmatmul.mubr.f32.gmra.mxu0 %v1001
        %v1107 = vpop.f32.mrf.mxu0
        %v1108 = vadd.f32 0.0, %v1107
        %v1109 = vpop.f32.mrf.mxu0
        %1110 = vdwg.mxu0
        %v1111 = vadd.f32 %v961, %v1073
        %v1112 = vadd.f32 %v962, %v1078
        %v1113 = vadd.f32 %v963, %v1083
        %v1114 = vadd.f32 %v964, %v1088
        %v1115 = vadd.f32 %v965, %v1093
        %v1116 = vadd.f32 %v966, %v1098
        %v1117 = vadd.f32 %v967, %v1103
        %v1118 = vadd.f32 %v968, %v1108
        %v1119 = vld [vmem:[%s375 + $0x2] sm:$0xff]
        %v1120 = vld [vmem:[%s375 + $0x12] sm:$0xff]
        %v1121 = vld [vmem:[%s375 + $0x22] sm:$0xff]
        %v1122 = vld [vmem:[%s375 + $0x32] sm:$0xff]
        %v1123 = vld [vmem:[%s375 + $0x42] sm:$0xff]
        %v1124 = vld [vmem:[%s375 + $0x52] sm:$0xff]
        %v1125 = vld [vmem:[%s375 + $0x62] sm:$0xff]
        %v1126 = vld [vmem:[%s375 + $0x72] sm:$0xff]
        %s1127 = scalar_lea.vmem %s1, 20
        %v1128 = vld [vmem:[%s1127] sm:$0xf]
        %v1130 = vsel %vm345, %v1119, 0
        %v1133 = vsel %vm345, %v1120, 0
        %v1136 = vsel %vm345, %v1121, 0
        %v1139 = vsel %vm345, %v1122, 0
        %v1142 = vsel %vm345, %v1123, 0
        %v1145 = vsel %vm345, %v1124, 0
        %v1148 = vsel %vm345, %v1125, 0
        %v1151 = vsel %vm345, %v1126, 0
        %v1154 = vsel %vm428, %v1128, 0
        %1156 = vmatprep.subr.mxu0 0.0
        %1157 = vmatpush1.msra.mxu0 0.0
        %1158 = vmatprep.subr.mxu0 0.0
        %1159 = vmatpush1.msra.mxu0 0.0
        %1160 = vmatprep.subr.mxu0 0.0
        %1161 = vmatpush1.msra.mxu0 0.0
        %1162 = vmatprep.subr.mxu0 0.0
        %1163 = vmatpush1.msra.mxu0 0.0
        %1164 = vmatprep.subr.mxu0 0.0
        %1165 = vmatpush1.msra.mxu0 0.0
        %1166 = vmatprep.subr.mxu0 0.0
        %1167 = vmatpush1.msra.mxu0 0.0
        %1168 = vmatprep.subr.mxu0 0.0
        %1169 = vmatpush1.msra.mxu0 0.0
        %1170 = vmatprep.subr.mxu0 0.0
        %1171 = vmatpush1.msra.mxu0 0.0
        %1172 = vmatprep.subr.mxu0 0.0
        %1173 = vmatpush1.msra.mxu0 0.0
        %1174 = vmatprep.subr.mxu0 0.0
        %1175 = vmatpush1.msra.mxu0 0.0
        %1176 = vmatprep.subr.mxu0 0.0
        %1177 = vmatpush1.msra.mxu0 0.0
        %1178 = vmatprep.subr.mxu0 0.0
        %1179 = vmatpush1.msra.mxu0 0.0
        %1180 = vmatprep.subr.mxu0 0.0
        %1181 = vmatpush1.msra.mxu0 0.0
        %1182 = vmatprep.subr.mxu0 0.0
        %1183 = vmatpush1.msra.mxu0 0.0
        %1184 = vmatprep.subr.mxu0 0.0
        %1185 = vmatpush1.msra.mxu0 0.0
        %1186 = vmatprep.subr.mxu0 0.0
        %1187 = vmatpush1.msra.mxu0 %v1154
        %1188 = vmatprep.subr.mxu0 0.0
        %1189 = vmatpush2.msra.mxu0 0.0
        %1190 = vmatprep.subr.mxu0 0.0
        %1191 = vmatpush2.msra.mxu0 0.0
        %1192 = vmatprep.subr.mxu0 0.0
        %1193 = vmatpush2.msra.mxu0 0.0
        %1194 = vmatprep.subr.mxu0 0.0
        %1195 = vmatpush2.msra.mxu0 0.0
        %1196 = vmatprep.subr.mxu0 0.0
        %1197 = vmatpush2.msra.mxu0 0.0
        %1198 = vmatprep.subr.mxu0 0.0
        %1199 = vmatpush2.msra.mxu0 0.0
        %1200 = vmatprep.subr.mxu0 0.0
        %1201 = vmatpush2.msra.mxu0 0.0
        %1202 = vmatprep.subr.mxu0 0.0
        %1203 = vmatpush2.msra.mxu0 0.0
        %1204 = vmatprep.subr.mxu0 0.0
        %1205 = vmatpush2.msra.mxu0 0.0
        %1206 = vmatprep.subr.mxu0 0.0
        %1207 = vmatpush2.msra.mxu0 0.0
        %1208 = vmatprep.subr.mxu0 0.0
        %1209 = vmatpush2.msra.mxu0 0.0
        %1210 = vmatprep.subr.mxu0 0.0
        %1211 = vmatpush2.msra.mxu0 0.0
        %1212 = vmatprep.subr.mxu0 0.0
        %1213 = vmatpush2.msra.mxu0 0.0
        %1214 = vmatprep.subr.mxu0 0.0
        %1215 = vmatpush2.msra.mxu0 0.0
        %1216 = vmatprep.subr.mxu0 0.0
        %1217 = vmatpush2.msra.mxu0 0.0
        %1218 = vmatprep.subr.mxu0 0.0
        %1219 = vmatpush2.msra.mxu0 0.0
        %1220 = vmatprep.mubr.f32.mxu0 0.0
        %1221 = vmatmul.mubr.f32.gmra.mxu0 %v1130
        %v1222 = vpop.f32.mrf.mxu0
        %v1223 = vadd.f32 0.0, %v1222
        %v1224 = vpop.f32.mrf.mxu0
        %1225 = vmatprep.mubr.f32.mxu0 0.0
        %1226 = vmatmul.mubr.f32.gmra.mxu0 %v1133
        %v1227 = vpop.f32.mrf.mxu0
        %v1228 = vadd.f32 0.0, %v1227
        %v1229 = vpop.f32.mrf.mxu0
        %1230 = vmatprep.mubr.f32.mxu0 0.0
        %1231 = vmatmul.mubr.f32.gmra.mxu0 %v1136
        %v1232 = vpop.f32.mrf.mxu0
        %v1233 = vadd.f32 0.0, %v1232
        %v1234 = vpop.f32.mrf.mxu0
        %1235 = vmatprep.mubr.f32.mxu0 0.0
        %1236 = vmatmul.mubr.f32.gmra.mxu0 %v1139
        %v1237 = vpop.f32.mrf.mxu0
        %v1238 = vadd.f32 0.0, %v1237
        %v1239 = vpop.f32.mrf.mxu0
        %1240 = vmatprep.mubr.f32.mxu0 0.0
        %1241 = vmatmul.mubr.f32.gmra.mxu0 %v1142
        %v1242 = vpop.f32.mrf.mxu0
        %v1243 = vadd.f32 0.0, %v1242
        %v1244 = vpop.f32.mrf.mxu0
        %1245 = vmatprep.mubr.f32.mxu0 0.0
        %1246 = vmatmul.mubr.f32.gmra.mxu0 %v1145
        %v1247 = vpop.f32.mrf.mxu0
        %v1248 = vadd.f32 0.0, %v1247
        %v1249 = vpop.f32.mrf.mxu0
        %1250 = vmatprep.mubr.f32.mxu0 0.0
        %1251 = vmatmul.mubr.f32.gmra.mxu0 %v1148
        %v1252 = vpop.f32.mrf.mxu0
        %v1253 = vadd.f32 0.0, %v1252
        %v1254 = vpop.f32.mrf.mxu0
        %1255 = vmatprep.mubr.f32.mxu0 0.0
        %1256 = vmatmul.mubr.f32.gmra.mxu0 %v1151
        %v1257 = vpop.f32.mrf.mxu0
        %v1258 = vadd.f32 0.0, %v1257
        %v1259 = vpop.f32.mrf.mxu0
        %1260 = vdwg.mxu0
        %v1261 = vadd.f32 %v1111, %v1223
        %v1262 = vadd.f32 %v1112, %v1228
        %v1263 = vadd.f32 %v1113, %v1233
        %v1264 = vadd.f32 %v1114, %v1238
        %v1265 = vadd.f32 %v1115, %v1243
        %v1266 = vadd.f32 %v1116, %v1248
        %v1267 = vadd.f32 %v1117, %v1253
        %v1268 = vadd.f32 %v1118, %v1258
        %s1269 = scalar_lea.vmem [#allocation2], 32
        %v1270 = vld [vmem:[%s1269] sm:$0xff]
        %v1271 = vld [vmem:[%s1269 + $0x10] sm:$0xff]
        %v1272 = vld [vmem:[%s1269 + $0x20] sm:$0xff]
        %v1273 = vld [vmem:[%s1269 + $0x30] sm:$0xff]
        %v1274 = vld [vmem:[%s1269 + $0x40] sm:$0xff]
        %v1275 = vld [vmem:[%s1269 + $0x50] sm:$0xff]
        %v1276 = vld [vmem:[%s1269 + $0x60] sm:$0xff]
        %v1277 = vld [vmem:[%s1269 + $0x70] sm:$0xff]
        %s1278 = scalar_lea.vmem %s1, 24
        %v1279 = vld [vmem:[%s1278] sm:$0xf]
        %v1281 = vsel %vm345, %v1270, 0
        %v1284 = vsel %vm345, %v1271, 0
        %v1287 = vsel %vm345, %v1272, 0
        %v1290 = vsel %vm345, %v1273, 0
        %v1293 = vsel %vm345, %v1274, 0
        %v1296 = vsel %vm345, %v1275, 0
        %v1299 = vsel %vm345, %v1276, 0
        %v1302 = vsel %vm345, %v1277, 0
        %v1305 = vsel %vm428, %v1279, 0
        %1307 = vmatprep.subr.mxu0 0.0
        %1308 = vmatpush1.msra.mxu0 0.0
        %1309 = vmatprep.subr.mxu0 0.0
        %1310 = vmatpush1.msra.mxu0 0.0
        %1311 = vmatprep.subr.mxu0 0.0
        %1312 = vmatpush1.msra.mxu0 0.0
        %1313 = vmatprep.subr.mxu0 0.0
        %1314 = vmatpush1.msra.mxu0 0.0
        %1315 = vmatprep.subr.mxu0 0.0
        %1316 = vmatpush1.msra.mxu0 0.0
        %1317 = vmatprep.subr.mxu0 0.0
        %1318 = vmatpush1.msra.mxu0 0.0
        %1319 = vmatprep.subr.mxu0 0.0
        %1320 = vmatpush1.msra.mxu0 0.0
        %1321 = vmatprep.subr.mxu0 0.0
        %1322 = vmatpush1.msra.mxu0 0.0
        %1323 = vmatprep.subr.mxu0 0.0
        %1324 = vmatpush1.msra.mxu0 0.0
        %1325 = vmatprep.subr.mxu0 0.0
        %1326 = vmatpush1.msra.mxu0 0.0
        %1327 = vmatprep.subr.mxu0 0.0
        %1328 = vmatpush1.msra.mxu0 0.0
        %1329 = vmatprep.subr.mxu0 0.0
        %1330 = vmatpush1.msra.mxu0 0.0
        %1331 = vmatprep.subr.mxu0 0.0
        %1332 = vmatpush1.msra.mxu0 0.0
        %1333 = vmatprep.subr.mxu0 0.0
        %1334 = vmatpush1.msra.mxu0 0.0
        %1335 = vmatprep.subr.mxu0 0.0
        %1336 = vmatpush1.msra.mxu0 0.0
        %1337 = vmatprep.subr.mxu0 0.0
        %1338 = vmatpush1.msra.mxu0 %v1305
        %1339 = vmatprep.subr.mxu0 0.0
        %1340 = vmatpush2.msra.mxu0 0.0
        %1341 = vmatprep.subr.mxu0 0.0
        %1342 = vmatpush2.msra.mxu0 0.0
        %1343 = vmatprep.subr.mxu0 0.0
        %1344 = vmatpush2.msra.mxu0 0.0
        %1345 = vmatprep.subr.mxu0 0.0
        %1346 = vmatpush2.msra.mxu0 0.0
        %1347 = vmatprep.subr.mxu0 0.0
        %1348 = vmatpush2.msra.mxu0 0.0
        %1349 = vmatprep.subr.mxu0 0.0
        %1350 = vmatpush2.msra.mxu0 0.0
        %1351 = vmatprep.subr.mxu0 0.0
        %1352 = vmatpush2.msra.mxu0 0.0
        %1353 = vmatprep.subr.mxu0 0.0
        %1354 = vmatpush2.msra.mxu0 0.0
        %1355 = vmatprep.subr.mxu0 0.0
        %1356 = vmatpush2.msra.mxu0 0.0
        %1357 = vmatprep.subr.mxu0 0.0
        %1358 = vmatpush2.msra.mxu0 0.0
        %1359 = vmatprep.subr.mxu0 0.0
        %1360 = vmatpush2.msra.mxu0 0.0
        %1361 = vmatprep.subr.mxu0 0.0
        %1362 = vmatpush2.msra.mxu0 0.0
        %1363 = vmatprep.subr.mxu0 0.0
        %1364 = vmatpush2.msra.mxu0 0.0
        %1365 = vmatprep.subr.mxu0 0.0
        %1366 = vmatpush2.msra.mxu0 0.0
        %1367 = vmatprep.subr.mxu0 0.0
        %1368 = vmatpush2.msra.mxu0 0.0
        %1369 = vmatprep.subr.mxu0 0.0
        %1370 = vmatpush2.msra.mxu0 0.0
        %1371 = vmatprep.mubr.f32.mxu0 0.0
        %1372 = vmatmul.mubr.f32.gmra.mxu0 %v1281
        %v1373 = vpop.f32.mrf.mxu0
        %v1374 = vadd.f32 0.0, %v1373
        %v1375 = vpop.f32.mrf.mxu0
        %1376 = vmatprep.mubr.f32.mxu0 0.0
        %1377 = vmatmul.mubr.f32.gmra.mxu0 %v1284
        %v1378 = vpop.f32.mrf.mxu0
        %v1379 = vadd.f32 0.0, %v1378
        %v1380 = vpop.f32.mrf.mxu0
        %1381 = vmatprep.mubr.f32.mxu0 0.0
        %1382 = vmatmul.mubr.f32.gmra.mxu0 %v1287
        %v1383 = vpop.f32.mrf.mxu0
        %v1384 = vadd.f32 0.0, %v1383
        %v1385 = vpop.f32.mrf.mxu0
        %1386 = vmatprep.mubr.f32.mxu0 0.0
        %1387 = vmatmul.mubr.f32.gmra.mxu0 %v1290
        %v1388 = vpop.f32.mrf.mxu0
        %v1389 = vadd.f32 0.0, %v1388
        %v1390 = vpop.f32.mrf.mxu0
        %1391 = vmatprep.mubr.f32.mxu0 0.0
        %1392 = vmatmul.mubr.f32.gmra.mxu0 %v1293
        %v1393 = vpop.f32.mrf.mxu0
        %v1394 = vadd.f32 0.0, %v1393
        %v1395 = vpop.f32.mrf.mxu0
        %1396 = vmatprep.mubr.f32.mxu0 0.0
        %1397 = vmatmul.mubr.f32.gmra.mxu0 %v1296
        %v1398 = vpop.f32.mrf.mxu0
        %v1399 = vadd.f32 0.0, %v1398
        %v1400 = vpop.f32.mrf.mxu0
        %1401 = vmatprep.mubr.f32.mxu0 0.0
        %1402 = vmatmul.mubr.f32.gmra.mxu0 %v1299
        %v1403 = vpop.f32.mrf.mxu0
        %v1404 = vadd.f32 0.0, %v1403
        %v1405 = vpop.f32.mrf.mxu0
        %1406 = vmatprep.mubr.f32.mxu0 0.0
        %1407 = vmatmul.mubr.f32.gmra.mxu0 %v1302
        %v1408 = vpop.f32.mrf.mxu0
        %v1409 = vadd.f32 0.0, %v1408
        %v1410 = vpop.f32.mrf.mxu0
        %1411 = vdwg.mxu0
        %v1412 = vadd.f32 %v1261, %v1374
        %v1413 = vadd.f32 %v1262, %v1379
        %v1414 = vadd.f32 %v1263, %v1384
        %v1415 = vadd.f32 %v1264, %v1389
        %v1416 = vadd.f32 %v1265, %v1394
        %v1417 = vadd.f32 %v1266, %v1399
        %v1418 = vadd.f32 %v1267, %v1404
        %v1419 = vadd.f32 %v1268, %v1409
        %v1420 = vld [vmem:[%s1269 + $0x1] sm:$0xff]
        %v1421 = vld [vmem:[%s1269 + $0x11] sm:$0xff]
        %v1422 = vld [vmem:[%s1269 + $0x21] sm:$0xff]
        %v1423 = vld [vmem:[%s1269 + $0x31] sm:$0xff]
        %v1424 = vld [vmem:[%s1269 + $0x41] sm:$0xff]
        %v1425 = vld [vmem:[%s1269 + $0x51] sm:$0xff]
        %v1426 = vld [vmem:[%s1269 + $0x61] sm:$0xff]
        %v1427 = vld [vmem:[%s1269 + $0x71] sm:$0xff]
        %s1428 = scalar_lea.vmem %s1, 28
        %v1429 = vld [vmem:[%s1428] sm:$0xf]
        %v1431 = vsel %vm345, %v1420, 0
        %v1434 = vsel %vm345, %v1421, 0
        %v1437 = vsel %vm345, %v1422, 0
        %v1440 = vsel %vm345, %v1423, 0
        %v1443 = vsel %vm345, %v1424, 0
        %v1446 = vsel %vm345, %v1425, 0
        %v1449 = vsel %vm345, %v1426, 0
        %v1452 = vsel %vm345, %v1427, 0
        %v1455 = vsel %vm428, %v1429, 0
        %1457 = vmatprep.subr.mxu0 0.0
        %1458 = vmatpush1.msra.mxu0 0.0
        %1459 = vmatprep.subr.mxu0 0.0
        %1460 = vmatpush1.msra.mxu0 0.0
        %1461 = vmatprep.subr.mxu0 0.0
        %1462 = vmatpush1.msra.mxu0 0.0
        %1463 = vmatprep.subr.mxu0 0.0
        %1464 = vmatpush1.msra.mxu0 0.0
        %1465 = vmatprep.subr.mxu0 0.0
        %1466 = vmatpush1.msra.mxu0 0.0
        %1467 = vmatprep.subr.mxu0 0.0
        %1468 = vmatpush1.msra.mxu0 0.0
        %1469 = vmatprep.subr.mxu0 0.0
        %1470 = vmatpush1.msra.mxu0 0.0
        %1471 = vmatprep.subr.mxu0 0.0
        %1472 = vmatpush1.msra.mxu0 0.0
        %1473 = vmatprep.subr.mxu0 0.0
        %1474 = vmatpush1.msra.mxu0 0.0
        %1475 = vmatprep.subr.mxu0 0.0
        %1476 = vmatpush1.msra.mxu0 0.0
        %1477 = vmatprep.subr.mxu0 0.0
        %1478 = vmatpush1.msra.mxu0 0.0
        %1479 = vmatprep.subr.mxu0 0.0
        %1480 = vmatpush1.msra.mxu0 0.0
        %1481 = vmatprep.subr.mxu0 0.0
        %1482 = vmatpush1.msra.mxu0 0.0
        %1483 = vmatprep.subr.mxu0 0.0
        %1484 = vmatpush1.msra.mxu0 0.0
        %1485 = vmatprep.subr.mxu0 0.0
        %1486 = vmatpush1.msra.mxu0 0.0
        %1487 = vmatprep.subr.mxu0 0.0
        %1488 = vmatpush1.msra.mxu0 %v1455
        %1489 = vmatprep.subr.mxu0 0.0
        %1490 = vmatpush2.msra.mxu0 0.0
        %1491 = vmatprep.subr.mxu0 0.0
        %1492 = vmatpush2.msra.mxu0 0.0
        %1493 = vmatprep.subr.mxu0 0.0
        %1494 = vmatpush2.msra.mxu0 0.0
        %1495 = vmatprep.subr.mxu0 0.0
        %1496 = vmatpush2.msra.mxu0 0.0
        %1497 = vmatprep.subr.mxu0 0.0
        %1498 = vmatpush2.msra.mxu0 0.0
        %1499 = vmatprep.subr.mxu0 0.0
        %1500 = vmatpush2.msra.mxu0 0.0
        %1501 = vmatprep.subr.mxu0 0.0
        %1502 = vmatpush2.msra.mxu0 0.0
        %1503 = vmatprep.subr.mxu0 0.0
        %1504 = vmatpush2.msra.mxu0 0.0
        %1505 = vmatprep.subr.mxu0 0.0
        %1506 = vmatpush2.msra.mxu0 0.0
        %1507 = vmatprep.subr.mxu0 0.0
        %1508 = vmatpush2.msra.mxu0 0.0
        %1509 = vmatprep.subr.mxu0 0.0
        %1510 = vmatpush2.msra.mxu0 0.0
        %1511 = vmatprep.subr.mxu0 0.0
        %1512 = vmatpush2.msra.mxu0 0.0
        %1513 = vmatprep.subr.mxu0 0.0
        %1514 = vmatpush2.msra.mxu0 0.0
        %1515 = vmatprep.subr.mxu0 0.0
        %1516 = vmatpush2.msra.mxu0 0.0
        %1517 = vmatprep.subr.mxu0 0.0
        %1518 = vmatpush2.msra.mxu0 0.0
        %1519 = vmatprep.subr.mxu0 0.0
        %1520 = vmatpush2.msra.mxu0 0.0
        %1521 = vmatprep.mubr.f32.mxu0 0.0
        %1522 = vmatmul.mubr.f32.gmra.mxu0 %v1431
        %v1523 = vpop.f32.mrf.mxu0
        %v1524 = vadd.f32 0.0, %v1523
        %v1525 = vpop.f32.mrf.mxu0
        %1526 = vmatprep.mubr.f32.mxu0 0.0
        %1527 = vmatmul.mubr.f32.gmra.mxu0 %v1434
        %v1528 = vpop.f32.mrf.mxu0
        %v1529 = vadd.f32 0.0, %v1528
        %v1530 = vpop.f32.mrf.mxu0
        %1531 = vmatprep.mubr.f32.mxu0 0.0
        %1532 = vmatmul.mubr.f32.gmra.mxu0 %v1437
        %v1533 = vpop.f32.mrf.mxu0
        %v1534 = vadd.f32 0.0, %v1533
        %v1535 = vpop.f32.mrf.mxu0
        %1536 = vmatprep.mubr.f32.mxu0 0.0
        %1537 = vmatmul.mubr.f32.gmra.mxu0 %v1440
        %v1538 = vpop.f32.mrf.mxu0
        %v1539 = vadd.f32 0.0, %v1538
        %v1540 = vpop.f32.mrf.mxu0
        %1541 = vmatprep.mubr.f32.mxu0 0.0
        %1542 = vmatmul.mubr.f32.gmra.mxu0 %v1443
        %v1543 = vpop.f32.mrf.mxu0
        %v1544 = vadd.f32 0.0, %v1543
        %v1545 = vpop.f32.mrf.mxu0
        %1546 = vmatprep.mubr.f32.mxu0 0.0
        %1547 = vmatmul.mubr.f32.gmra.mxu0 %v1446
        %v1548 = vpop.f32.mrf.mxu0
        %v1549 = vadd.f32 0.0, %v1548
        %v1550 = vpop.f32.mrf.mxu0
        %1551 = vmatprep.mubr.f32.mxu0 0.0
        %1552 = vmatmul.mubr.f32.gmra.mxu0 %v1449
        %v1553 = vpop.f32.mrf.mxu0
        %v1554 = vadd.f32 0.0, %v1553
        %v1555 = vpop.f32.mrf.mxu0
        %1556 = vmatprep.mubr.f32.mxu0 0.0
        %1557 = vmatmul.mubr.f32.gmra.mxu0 %v1452
        %v1558 = vpop.f32.mrf.mxu0
        %v1559 = vadd.f32 0.0, %v1558
        %v1560 = vpop.f32.mrf.mxu0
        %1561 = vdwg.mxu0
        %v1562 = vadd.f32 %v1412, %v1524
        %v1563 = vadd.f32 %v1413, %v1529
        %v1564 = vadd.f32 %v1414, %v1534
        %v1565 = vadd.f32 %v1415, %v1539
        %v1566 = vadd.f32 %v1416, %v1544
        %v1567 = vadd.f32 %v1417, %v1549
        %v1568 = vadd.f32 %v1418, %v1554
        %v1569 = vadd.f32 %v1419, %v1559
        %v1570 = vld [vmem:[%s1269 + $0x2] sm:$0xff]
        %v1571 = vld [vmem:[%s1269 + $0x12] sm:$0xff]
        %v1572 = vld [vmem:[%s1269 + $0x22] sm:$0xff]
        %v1573 = vld [vmem:[%s1269 + $0x32] sm:$0xff]
        %v1574 = vld [vmem:[%s1269 + $0x42] sm:$0xff]
        %v1575 = vld [vmem:[%s1269 + $0x52] sm:$0xff]
        %v1576 = vld [vmem:[%s1269 + $0x62] sm:$0xff]
        %v1577 = vld [vmem:[%s1269 + $0x72] sm:$0xff]
        %s1578 = scalar_lea.vmem %s1, 32
        %v1579 = vld [vmem:[%s1578] sm:$0xf]
        %v1581 = vsel %vm345, %v1570, 0
        %v1584 = vsel %vm345, %v1571, 0
        %v1587 = vsel %vm345, %v1572, 0
        %v1590 = vsel %vm345, %v1573, 0
        %v1593 = vsel %vm345, %v1574, 0
        %v1596 = vsel %vm345, %v1575, 0
        %v1599 = vsel %vm345, %v1576, 0
        %v1602 = vsel %vm345, %v1577, 0
        %v1605 = vsel %vm428, %v1579, 0
        %1607 = vmatprep.subr.mxu0 0.0
        %1608 = vmatpush1.msra.mxu0 0.0
        %1609 = vmatprep.subr.mxu0 0.0
        %1610 = vmatpush1.msra.mxu0 0.0
        %1611 = vmatprep.subr.mxu0 0.0
        %1612 = vmatpush1.msra.mxu0 0.0
        %1613 = vmatprep.subr.mxu0 0.0
        %1614 = vmatpush1.msra.mxu0 0.0
        %1615 = vmatprep.subr.mxu0 0.0
        %1616 = vmatpush1.msra.mxu0 0.0
        %1617 = vmatprep.subr.mxu0 0.0
        %1618 = vmatpush1.msra.mxu0 0.0
        %1619 = vmatprep.subr.mxu0 0.0
        %1620 = vmatpush1.msra.mxu0 0.0
        %1621 = vmatprep.subr.mxu0 0.0
        %1622 = vmatpush1.msra.mxu0 0.0
        %1623 = vmatprep.subr.mxu0 0.0
        %1624 = vmatpush1.msra.mxu0 0.0
        %1625 = vmatprep.subr.mxu0 0.0
        %1626 = vmatpush1.msra.mxu0 0.0
        %1627 = vmatprep.subr.mxu0 0.0
        %1628 = vmatpush1.msra.mxu0 0.0
        %1629 = vmatprep.subr.mxu0 0.0
        %1630 = vmatpush1.msra.mxu0 0.0
        %1631 = vmatprep.subr.mxu0 0.0
        %1632 = vmatpush1.msra.mxu0 0.0
        %1633 = vmatprep.subr.mxu0 0.0
        %1634 = vmatpush1.msra.mxu0 0.0
        %1635 = vmatprep.subr.mxu0 0.0
        %1636 = vmatpush1.msra.mxu0 0.0
        %1637 = vmatprep.subr.mxu0 0.0
        %1638 = vmatpush1.msra.mxu0 %v1605
        %1639 = vmatprep.subr.mxu0 0.0
        %1640 = vmatpush2.msra.mxu0 0.0
        %1641 = vmatprep.subr.mxu0 0.0
        %1642 = vmatpush2.msra.mxu0 0.0
        %1643 = vmatprep.subr.mxu0 0.0
        %1644 = vmatpush2.msra.mxu0 0.0
        %1645 = vmatprep.subr.mxu0 0.0
        %1646 = vmatpush2.msra.mxu0 0.0
        %1647 = vmatprep.subr.mxu0 0.0
        %1648 = vmatpush2.msra.mxu0 0.0
        %1649 = vmatprep.subr.mxu0 0.0
        %1650 = vmatpush2.msra.mxu0 0.0
        %1651 = vmatprep.subr.mxu0 0.0
        %1652 = vmatpush2.msra.mxu0 0.0
        %1653 = vmatprep.subr.mxu0 0.0
        %1654 = vmatpush2.msra.mxu0 0.0
        %1655 = vmatprep.subr.mxu0 0.0
        %1656 = vmatpush2.msra.mxu0 0.0
        %1657 = vmatprep.subr.mxu0 0.0
        %1658 = vmatpush2.msra.mxu0 0.0
        %1659 = vmatprep.subr.mxu0 0.0
        %1660 = vmatpush2.msra.mxu0 0.0
        %1661 = vmatprep.subr.mxu0 0.0
        %1662 = vmatpush2.msra.mxu0 0.0
        %1663 = vmatprep.subr.mxu0 0.0
        %1664 = vmatpush2.msra.mxu0 0.0
        %1665 = vmatprep.subr.mxu0 0.0
        %1666 = vmatpush2.msra.mxu0 0.0
        %1667 = vmatprep.subr.mxu0 0.0
        %1668 = vmatpush2.msra.mxu0 0.0
        %1669 = vmatprep.subr.mxu0 0.0
        %1670 = vmatpush2.msra.mxu0 0.0
        %1671 = vmatprep.mubr.f32.mxu0 0.0
        %1672 = vmatmul.mubr.f32.gmra.mxu0 %v1581
        %v1673 = vpop.f32.mrf.mxu0
        %v1674 = vadd.f32 0.0, %v1673
        %v1675 = vpop.f32.mrf.mxu0
        %1676 = vmatprep.mubr.f32.mxu0 0.0
        %1677 = vmatmul.mubr.f32.gmra.mxu0 %v1584
        %v1678 = vpop.f32.mrf.mxu0
        %v1679 = vadd.f32 0.0, %v1678
        %v1680 = vpop.f32.mrf.mxu0
        %1681 = vmatprep.mubr.f32.mxu0 0.0
        %1682 = vmatmul.mubr.f32.gmra.mxu0 %v1587
        %v1683 = vpop.f32.mrf.mxu0
        %v1684 = vadd.f32 0.0, %v1683
        %v1685 = vpop.f32.mrf.mxu0
        %1686 = vmatprep.mubr.f32.mxu0 0.0
        %1687 = vmatmul.mubr.f32.gmra.mxu0 %v1590
        %v1688 = vpop.f32.mrf.mxu0
        %v1689 = vadd.f32 0.0, %v1688
        %v1690 = vpop.f32.mrf.mxu0
        %1691 = vmatprep.mubr.f32.mxu0 0.0
        %1692 = vmatmul.mubr.f32.gmra.mxu0 %v1593
        %v1693 = vpop.f32.mrf.mxu0
        %v1694 = vadd.f32 0.0, %v1693
        %v1695 = vpop.f32.mrf.mxu0
        %1696 = vmatprep.mubr.f32.mxu0 0.0
        %1697 = vmatmul.mubr.f32.gmra.mxu0 %v1596
        %v1698 = vpop.f32.mrf.mxu0
        %v1699 = vadd.f32 0.0, %v1698
        %v1700 = vpop.f32.mrf.mxu0
        %1701 = vmatprep.mubr.f32.mxu0 0.0
        %1702 = vmatmul.mubr.f32.gmra.mxu0 %v1599
        %v1703 = vpop.f32.mrf.mxu0
        %v1704 = vadd.f32 0.0, %v1703
        %v1705 = vpop.f32.mrf.mxu0
        %1706 = vmatprep.mubr.f32.mxu0 0.0
        %1707 = vmatmul.mubr.f32.gmra.mxu0 %v1602
        %v1708 = vpop.f32.mrf.mxu0
        %v1709 = vadd.f32 0.0, %v1708
        %v1710 = vpop.f32.mrf.mxu0
        %1711 = vdwg.mxu0
        %v1712 = vadd.f32 %v1562, %v1674
        %v1713 = vadd.f32 %v1563, %v1679
        %v1714 = vadd.f32 %v1564, %v1684
        %v1715 = vadd.f32 %v1565, %v1689
        %v1716 = vadd.f32 %v1566, %v1694
        %v1717 = vadd.f32 %v1567, %v1699
        %v1718 = vadd.f32 %v1568, %v1704
        %v1719 = vadd.f32 %v1569, %v1709
        %v1721 = vlaneseq
        %v1722 = vshrl.u32 %v1721, 7
        %v1723 = vsub.s32 0, %v1722
        %v1724 = vrot.slane %v384, %v1723
        %v1726 = vadd.f32 %v1712, %v1724
        %v1727 = vadd.f32 %v1713, %v1724
        %v1728 = vadd.f32 %v1714, %v1724
        %v1729 = vadd.f32 %v1715, %v1724
        %v1730 = vadd.f32 %v1716, %v1724
        %v1731 = vadd.f32 %v1717, %v1724
        %v1732 = vadd.f32 %v1718, %v1724
        %v1733 = vadd.f32 %v1719, %v1724
        %v1734 = vmax.f32 %v1726, 0.0
        %v1735 = vmax.f32 %v1727, 0.0
        %v1736 = vmax.f32 %v1728, 0.0
        %v1737 = vmax.f32 %v1729, 0.0
        %v1738 = vmax.f32 %v1730, 0.0
        %v1739 = vmax.f32 %v1731, 0.0
        %v1740 = vmax.f32 %v1732, 0.0
        %v1741 = vmax.f32 %v1733, 0.0
        %vm1742 = vcmask 64512
        %1743 = vst.msk [vmem:[#allocation3] sm:$0xff] %vm1742, 0.0
        %vm1744 = vcmask 58368
        %1745 = vst.msk [vmem:[#allocation3 + $0x8] sm:$0x3] %vm1744, 0.0
        %1746 = vst.msk [vmem:[#allocation3 + $0x10] sm:$0xff] %vm1742, 0.0
        %1747 = vst.msk [vmem:[#allocation3 + $0x18] sm:$0x3] %vm1744, 0.0
        %1748 = vst.msk [vmem:[#allocation3 + $0x20] sm:$0xff] %vm1742, 0.0
        %1749 = vst.msk [vmem:[#allocation3 + $0x28] sm:$0x3] %vm1744, 0.0
        %1750 = vst.msk [vmem:[#allocation3 + $0x30] sm:$0xff] %vm1742, 0.0
        %1751 = vst.msk [vmem:[#allocation3 + $0x38] sm:$0x3] %vm1744, 0.0
        %1752 = vst.msk [vmem:[#allocation3 + $0x40] sm:$0xff] %vm1742, 0.0
        %1753 = vst.msk [vmem:[#allocation3 + $0x48] sm:$0x3] %vm1744, 0.0
        %1754 = vst.msk [vmem:[#allocation3 + $0x50] sm:$0xff] %vm1742, 0.0
        %1755 = vst.msk [vmem:[#allocation3 + $0x58] sm:$0x3] %vm1744, 0.0
        %1756 = vst.msk [vmem:[#allocation3 + $0x60] sm:$0xff] %vm1742, 0.0
        %1757 = vst.msk [vmem:[#allocation3 + $0x68] sm:$0x3] %vm1744, 0.0
        %1758 = vst.msk [vmem:[#allocation3 + $0x70] sm:$0xff] %vm1742, 0.0
        %1759 = vst.msk [vmem:[#allocation3 + $0x78] sm:$0x3] %vm1744, 0.0
        %1760 = vst.msk [vmem:[#allocation3 + $0x80] sm:$0xff] %vm1742, 0.0
        %1761 = vst.msk [vmem:[#allocation3 + $0x88] sm:$0x3] %vm1744, 0.0
        %1762 = vst.msk [vmem:[#allocation3 + $0x90] sm:$0xff] %vm1742, 0.0
        %1763 = vst.msk [vmem:[#allocation3 + $0x98] sm:$0x3] %vm1744, 0.0
        %s1764 = scalar_lea.vmem [#allocation3], 16
        %1765 = vst.msk [vmem:[%s1764 + $0x1] sm:$0xff] %vm1742, %v1734
        %1766 = vst.msk [vmem:[%s1764 + $0x11] sm:$0xff] %vm1742, %v1735
        %1767 = vst.msk [vmem:[%s1764 + $0x21] sm:$0xff] %vm1742, %v1736
        %1768 = vst.msk [vmem:[%s1764 + $0x31] sm:$0xff] %vm1742, %v1737
        %1769 = vst.msk [vmem:[%s1764 + $0x41] sm:$0xff] %vm1742, %v1738
        %1770 = vst.msk [vmem:[%s1764 + $0x51] sm:$0xff] %vm1742, %v1739
        %1771 = vst.msk [vmem:[%s1764 + $0x61] sm:$0xff] %vm1742, %v1740
        %1772 = vst.msk [vmem:[%s1764 + $0x71] sm:$0xff] %vm1742, %v1741
        %v1773 = vld [vmem:[%s4] sm:$0x1]
        %v1774 = vld [vmem:[#allocation3] sm:$0xff]
        %v1775 = vld [vmem:[#allocation3 + $0x10] sm:$0xff]
        %v1776 = vld [vmem:[#allocation3 + $0x20] sm:$0xff]
        %v1777 = vld [vmem:[#allocation3 + $0x30] sm:$0xff]
        %v1778 = vld [vmem:[#allocation3 + $0x40] sm:$0xff]
        %v1779 = vld [vmem:[#allocation3 + $0x50] sm:$0xff]
        %v1780 = vld [vmem:[#allocation3 + $0x60] sm:$0xff]
        %v1781 = vld [vmem:[#allocation3 + $0x70] sm:$0xff]
        %v1782 = vld [vmem:[%s3] sm:$0xff]
        %v1783 = vld [vmem:[#allocation3 + $0x1] sm:$0xff]
        %v1784 = vld [vmem:[#allocation3 + $0x11] sm:$0xff]
        %v1785 = vld [vmem:[#allocation3 + $0x21] sm:$0xff]
        %v1786 = vld [vmem:[#allocation3 + $0x31] sm:$0xff]
        %v1787 = vld [vmem:[#allocation3 + $0x41] sm:$0xff]
        %v1788 = vld [vmem:[#allocation3 + $0x51] sm:$0xff]
        %v1789 = vld [vmem:[#allocation3 + $0x61] sm:$0xff]
        %v1790 = vld [vmem:[#allocation3 + $0x71] sm:$0xff]
        %s1791 = scalar_lea.vmem %s3, 8
        %v1792 = vld [vmem:[%s1791] sm:$0xff]
        %v1794 = vsel %vm1742, %v1783, 0
        %v1797 = vsel %vm1742, %v1784, 0
        %v1800 = vsel %vm1742, %v1785, 0
        %v1803 = vsel %vm1742, %v1786, 0
        %v1806 = vsel %vm1742, %v1787, 0
        %v1809 = vsel %vm1742, %v1788, 0
        %v1812 = vsel %vm1742, %v1789, 0
        %v1815 = vsel %vm1742, %v1790, 0
        %1817 = vmatprep.subr.mxu0 0.0
        %1818 = vmatpush1.msra.mxu0 0.0
        %1819 = vmatprep.subr.mxu0 0.0
        %1820 = vmatpush1.msra.mxu0 0.0
        %1821 = vmatprep.subr.mxu0 0.0
        %1822 = vmatpush1.msra.mxu0 0.0
        %1823 = vmatprep.subr.mxu0 0.0
        %1824 = vmatpush1.msra.mxu0 0.0
        %1825 = vmatprep.subr.mxu0 0.0
        %1826 = vmatpush1.msra.mxu0 0.0
        %1827 = vmatprep.subr.mxu0 0.0
        %1828 = vmatpush1.msra.mxu0 0.0
        %1829 = vmatprep.subr.mxu0 0.0
        %1830 = vmatpush1.msra.mxu0 0.0
        %1831 = vmatprep.subr.mxu0 0.0
        %1832 = vmatpush1.msra.mxu0 0.0
        %1833 = vmatprep.subr.mxu0 0.0
        %1834 = vmatpush1.msra.mxu0 0.0
        %1835 = vmatprep.subr.mxu0 0.0
        %1836 = vmatpush1.msra.mxu0 0.0
        %1837 = vmatprep.subr.mxu0 0.0
        %1838 = vmatpush1.msra.mxu0 0.0
        %1839 = vmatprep.subr.mxu0 0.0
        %1840 = vmatpush1.msra.mxu0 0.0
        %1841 = vmatprep.subr.mxu0 0.0
        %1842 = vmatpush1.msra.mxu0 0.0
        %1843 = vmatprep.subr.mxu0 0.0
        %1844 = vmatpush1.msra.mxu0 0.0
        %1845 = vmatprep.subr.mxu0 0.0
        %1846 = vmatpush1.msra.mxu0 0.0
        %1847 = vmatprep.subr.mxu0 0.0
        %1848 = vmatpush1.msra.mxu0 %v1792
        %1849 = vmatprep.subr.mxu0 0.0
        %1850 = vmatpush2.msra.mxu0 0.0
        %1851 = vmatprep.subr.mxu0 0.0
        %1852 = vmatpush2.msra.mxu0 0.0
        %1853 = vmatprep.subr.mxu0 0.0
        %1854 = vmatpush2.msra.mxu0 0.0
        %1855 = vmatprep.subr.mxu0 0.0
        %1856 = vmatpush2.msra.mxu0 0.0
        %1857 = vmatprep.subr.mxu0 0.0
        %1858 = vmatpush2.msra.mxu0 0.0
        %1859 = vmatprep.subr.mxu0 0.0
        %1860 = vmatpush2.msra.mxu0 0.0
        %1861 = vmatprep.subr.mxu0 0.0
        %1862 = vmatpush2.msra.mxu0 0.0
        %1863 = vmatprep.subr.mxu0 0.0
        %1864 = vmatpush2.msra.mxu0 0.0
        %1865 = vmatprep.subr.mxu0 0.0
        %1866 = vmatpush2.msra.mxu0 0.0
        %1867 = vmatprep.subr.mxu0 0.0
        %1868 = vmatpush2.msra.mxu0 0.0
        %1869 = vmatprep.subr.mxu0 0.0
        %1870 = vmatpush2.msra.mxu0 0.0
        %1871 = vmatprep.subr.mxu0 0.0
        %1872 = vmatpush2.msra.mxu0 0.0
        %1873 = vmatprep.subr.mxu0 0.0
        %1874 = vmatpush2.msra.mxu0 0.0
        %1875 = vmatprep.subr.mxu0 0.0
        %1876 = vmatpush2.msra.mxu0 0.0
        %1877 = vmatprep.subr.mxu0 0.0
        %1878 = vmatpush2.msra.mxu0 0.0
        %1879 = vmatprep.subr.mxu0 0.0
        %1880 = vmatpush2.msra.mxu0 0.0
        %1881 = vmatprep.mubr.f32.mxu0 0.0
        %1882 = vmatmul.mubr.f32.gmra.mxu0 %v1794
        %v1883 = vpop.f32.mrf.mxu0
        %v1884 = vadd.f32 0.0, %v1883
        %v1885 = vpop.f32.mrf.mxu0
        %1886 = vmatprep.mubr.f32.mxu0 0.0
        %1887 = vmatmul.mubr.f32.gmra.mxu0 %v1797
        %v1888 = vpop.f32.mrf.mxu0
        %v1889 = vadd.f32 0.0, %v1888
        %v1890 = vpop.f32.mrf.mxu0
        %1891 = vmatprep.mubr.f32.mxu0 0.0
        %1892 = vmatmul.mubr.f32.gmra.mxu0 %v1800
        %v1893 = vpop.f32.mrf.mxu0
        %v1894 = vadd.f32 0.0, %v1893
        %v1895 = vpop.f32.mrf.mxu0
        %1896 = vmatprep.mubr.f32.mxu0 0.0
        %1897 = vmatmul.mubr.f32.gmra.mxu0 %v1803
        %v1898 = vpop.f32.mrf.mxu0
        %v1899 = vadd.f32 0.0, %v1898
        %v1900 = vpop.f32.mrf.mxu0
        %1901 = vmatprep.mubr.f32.mxu0 0.0
        %1902 = vmatmul.mubr.f32.gmra.mxu0 %v1806
        %v1903 = vpop.f32.mrf.mxu0
        %v1904 = vadd.f32 0.0, %v1903
        %v1905 = vpop.f32.mrf.mxu0
        %1906 = vmatprep.mubr.f32.mxu0 0.0
        %1907 = vmatmul.mubr.f32.gmra.mxu0 %v1809
        %v1908 = vpop.f32.mrf.mxu0
        %v1909 = vadd.f32 0.0, %v1908
        %v1910 = vpop.f32.mrf.mxu0
        %1911 = vmatprep.mubr.f32.mxu0 0.0
        %1912 = vmatmul.mubr.f32.gmra.mxu0 %v1812
        %v1913 = vpop.f32.mrf.mxu0
        %v1914 = vadd.f32 0.0, %v1913
        %v1915 = vpop.f32.mrf.mxu0
        %1916 = vmatprep.mubr.f32.mxu0 0.0
        %1917 = vmatmul.mubr.f32.gmra.mxu0 %v1815
        %v1918 = vpop.f32.mrf.mxu0
        %v1919 = vadd.f32 0.0, %v1918
        %v1920 = vpop.f32.mrf.mxu0
        %1921 = vdwg.mxu0
        %v1923 = vsel %vm1742, %v1774, 0
        %v1926 = vsel %vm1742, %v1775, 0
        %v1929 = vsel %vm1742, %v1776, 0
        %v1932 = vsel %vm1742, %v1777, 0
        %v1935 = vsel %vm1742, %v1778, 0
        %v1938 = vsel %vm1742, %v1779, 0
        %v1941 = vsel %vm1742, %v1780, 0
        %v1944 = vsel %vm1742, %v1781, 0
        %1946 = vmatprep.subr.mxu0 0.0
        %1947 = vmatpush1.msra.mxu0 0.0
        %1948 = vmatprep.subr.mxu0 0.0
        %1949 = vmatpush1.msra.mxu0 0.0
        %1950 = vmatprep.subr.mxu0 0.0
        %1951 = vmatpush1.msra.mxu0 0.0
        %1952 = vmatprep.subr.mxu0 0.0
        %1953 = vmatpush1.msra.mxu0 0.0
        %1954 = vmatprep.subr.mxu0 0.0
        %1955 = vmatpush1.msra.mxu0 0.0
        %1956 = vmatprep.subr.mxu0 0.0
        %1957 = vmatpush1.msra.mxu0 0.0
        %1958 = vmatprep.subr.mxu0 0.0
        %1959 = vmatpush1.msra.mxu0 0.0
        %1960 = vmatprep.subr.mxu0 0.0
        %1961 = vmatpush1.msra.mxu0 0.0
        %1962 = vmatprep.subr.mxu0 0.0
        %1963 = vmatpush1.msra.mxu0 0.0
        %1964 = vmatprep.subr.mxu0 0.0
        %1965 = vmatpush1.msra.mxu0 0.0
        %1966 = vmatprep.subr.mxu0 0.0
        %1967 = vmatpush1.msra.mxu0 0.0
        %1968 = vmatprep.subr.mxu0 0.0
        %1969 = vmatpush1.msra.mxu0 0.0
        %1970 = vmatprep.subr.mxu0 0.0
        %1971 = vmatpush1.msra.mxu0 0.0
        %1972 = vmatprep.subr.mxu0 0.0
        %1973 = vmatpush1.msra.mxu0 0.0
        %1974 = vmatprep.subr.mxu0 0.0
        %1975 = vmatpush1.msra.mxu0 0.0
        %1976 = vmatprep.subr.mxu0 0.0
        %1977 = vmatpush1.msra.mxu0 %v1782
        %1978 = vmatprep.subr.mxu0 0.0
        %1979 = vmatpush2.msra.mxu0 0.0
        %1980 = vmatprep.subr.mxu0 0.0
        %1981 = vmatpush2.msra.mxu0 0.0
        %1982 = vmatprep.subr.mxu0 0.0
        %1983 = vmatpush2.msra.mxu0 0.0
        %1984 = vmatprep.subr.mxu0 0.0
        %1985 = vmatpush2.msra.mxu0 0.0
        %1986 = vmatprep.subr.mxu0 0.0
        %1987 = vmatpush2.msra.mxu0 0.0
        %1988 = vmatprep.subr.mxu0 0.0
        %1989 = vmatpush2.msra.mxu0 0.0
        %1990 = vmatprep.subr.mxu0 0.0
        %1991 = vmatpush2.msra.mxu0 0.0
        %1992 = vmatprep.subr.mxu0 0.0
        %1993 = vmatpush2.msra.mxu0 0.0
        %1994 = vmatprep.subr.mxu0 0.0
        %1995 = vmatpush2.msra.mxu0 0.0
        %1996 = vmatprep.subr.mxu0 0.0
        %1997 = vmatpush2.msra.mxu0 0.0
        %1998 = vmatprep.subr.mxu0 0.0
        %1999 = vmatpush2.msra.mxu0 0.0
        %2000 = vmatprep.subr.mxu0 0.0
        %2001 = vmatpush2.msra.mxu0 0.0
        %2002 = vmatprep.subr.mxu0 0.0
        %2003 = vmatpush2.msra.mxu0 0.0
        %2004 = vmatprep.subr.mxu0 0.0
        %2005 = vmatpush2.msra.mxu0 0.0
        %2006 = vmatprep.subr.mxu0 0.0
        %2007 = vmatpush2.msra.mxu0 0.0
        %2008 = vmatprep.subr.mxu0 0.0
        %2009 = vmatpush2.msra.mxu0 0.0
        %2010 = vmatprep.mubr.f32.mxu0 0.0
        %2011 = vmatmul.mubr.f32.gmra.mxu0 %v1923
        %v2012 = vpop.f32.mrf.mxu0
        %v2013 = vadd.f32 %v1884, %v2012
        %v2014 = vpop.f32.mrf.mxu0
        %2015 = vmatprep.mubr.f32.mxu0 0.0
        %2016 = vmatmul.mubr.f32.gmra.mxu0 %v1926
        %v2017 = vpop.f32.mrf.mxu0
        %v2018 = vadd.f32 %v1889, %v2017
        %v2019 = vpop.f32.mrf.mxu0
        %2020 = vmatprep.mubr.f32.mxu0 0.0
        %2021 = vmatmul.mubr.f32.gmra.mxu0 %v1929
        %v2022 = vpop.f32.mrf.mxu0
        %v2023 = vadd.f32 %v1894, %v2022
        %v2024 = vpop.f32.mrf.mxu0
        %2025 = vmatprep.mubr.f32.mxu0 0.0
        %2026 = vmatmul.mubr.f32.gmra.mxu0 %v1932
        %v2027 = vpop.f32.mrf.mxu0
        %v2028 = vadd.f32 %v1899, %v2027
        %v2029 = vpop.f32.mrf.mxu0
        %2030 = vmatprep.mubr.f32.mxu0 0.0
        %2031 = vmatmul.mubr.f32.gmra.mxu0 %v1935
        %v2032 = vpop.f32.mrf.mxu0
        %v2033 = vadd.f32 %v1904, %v2032
        %v2034 = vpop.f32.mrf.mxu0
        %2035 = vmatprep.mubr.f32.mxu0 0.0
        %2036 = vmatmul.mubr.f32.gmra.mxu0 %v1938
        %v2037 = vpop.f32.mrf.mxu0
        %v2038 = vadd.f32 %v1909, %v2037
        %v2039 = vpop.f32.mrf.mxu0
        %2040 = vmatprep.mubr.f32.mxu0 0.0
        %2041 = vmatmul.mubr.f32.gmra.mxu0 %v1941
        %v2042 = vpop.f32.mrf.mxu0
        %v2043 = vadd.f32 %v1914, %v2042
        %v2044 = vpop.f32.mrf.mxu0
        %2045 = vmatprep.mubr.f32.mxu0 0.0
        %2046 = vmatmul.mubr.f32.gmra.mxu0 %v1944
        %v2047 = vpop.f32.mrf.mxu0
        %v2048 = vadd.f32 %v1919, %v2047
        %v2049 = vpop.f32.mrf.mxu0
        %2050 = vdwg.mxu0
        %v2051 = vld [vmem:[#allocation3 + $0x2] sm:$0xff]
        %v2052 = vld [vmem:[#allocation3 + $0x12] sm:$0xff]
        %v2053 = vld [vmem:[#allocation3 + $0x22] sm:$0xff]
        %v2054 = vld [vmem:[#allocation3 + $0x32] sm:$0xff]
        %v2055 = vld [vmem:[#allocation3 + $0x42] sm:$0xff]
        %v2056 = vld [vmem:[#allocation3 + $0x52] sm:$0xff]
        %v2057 = vld [vmem:[#allocation3 + $0x62] sm:$0xff]
        %v2058 = vld [vmem:[#allocation3 + $0x72] sm:$0xff]
        %s2059 = scalar_lea.vmem %s3, 16
        %v2060 = vld [vmem:[%s2059] sm:$0xff]
        %v2062 = vsel %vm1742, %v2051, 0
        %v2065 = vsel %vm1742, %v2052, 0
        %v2068 = vsel %vm1742, %v2053, 0
        %v2071 = vsel %vm1742, %v2054, 0
        %v2074 = vsel %vm1742, %v2055, 0
        %v2077 = vsel %vm1742, %v2056, 0
        %v2080 = vsel %vm1742, %v2057, 0
        %v2083 = vsel %vm1742, %v2058, 0
        %2085 = vmatprep.subr.mxu0 0.0
        %2086 = vmatpush1.msra.mxu0 0.0
        %2087 = vmatprep.subr.mxu0 0.0
        %2088 = vmatpush1.msra.mxu0 0.0
        %2089 = vmatprep.subr.mxu0 0.0
        %2090 = vmatpush1.msra.mxu0 0.0
        %2091 = vmatprep.subr.mxu0 0.0
        %2092 = vmatpush1.msra.mxu0 0.0
        %2093 = vmatprep.subr.mxu0 0.0
        %2094 = vmatpush1.msra.mxu0 0.0
        %2095 = vmatprep.subr.mxu0 0.0
        %2096 = vmatpush1.msra.mxu0 0.0
        %2097 = vmatprep.subr.mxu0 0.0
        %2098 = vmatpush1.msra.mxu0 0.0
        %2099 = vmatprep.subr.mxu0 0.0
        %2100 = vmatpush1.msra.mxu0 0.0
        %2101 = vmatprep.subr.mxu0 0.0
        %2102 = vmatpush1.msra.mxu0 0.0
        %2103 = vmatprep.subr.mxu0 0.0
        %2104 = vmatpush1.msra.mxu0 0.0
        %2105 = vmatprep.subr.mxu0 0.0
        %2106 = vmatpush1.msra.mxu0 0.0
        %2107 = vmatprep.subr.mxu0 0.0
        %2108 = vmatpush1.msra.mxu0 0.0
        %2109 = vmatprep.subr.mxu0 0.0
        %2110 = vmatpush1.msra.mxu0 0.0
        %2111 = vmatprep.subr.mxu0 0.0
        %2112 = vmatpush1.msra.mxu0 0.0
        %2113 = vmatprep.subr.mxu0 0.0
        %2114 = vmatpush1.msra.mxu0 0.0
        %2115 = vmatprep.subr.mxu0 0.0
        %2116 = vmatpush1.msra.mxu0 %v2060
        %2117 = vmatprep.subr.mxu0 0.0
        %2118 = vmatpush2.msra.mxu0 0.0
        %2119 = vmatprep.subr.mxu0 0.0
        %2120 = vmatpush2.msra.mxu0 0.0
        %2121 = vmatprep.subr.mxu0 0.0
        %2122 = vmatpush2.msra.mxu0 0.0
        %2123 = vmatprep.subr.mxu0 0.0
        %2124 = vmatpush2.msra.mxu0 0.0
        %2125 = vmatprep.subr.mxu0 0.0
        %2126 = vmatpush2.msra.mxu0 0.0
        %2127 = vmatprep.subr.mxu0 0.0
        %2128 = vmatpush2.msra.mxu0 0.0
        %2129 = vmatprep.subr.mxu0 0.0
        %2130 = vmatpush2.msra.mxu0 0.0
        %2131 = vmatprep.subr.mxu0 0.0
        %2132 = vmatpush2.msra.mxu0 0.0
        %2133 = vmatprep.subr.mxu0 0.0
        %2134 = vmatpush2.msra.mxu0 0.0
        %2135 = vmatprep.subr.mxu0 0.0
        %2136 = vmatpush2.msra.mxu0 0.0
        %2137 = vmatprep.subr.mxu0 0.0
        %2138 = vmatpush2.msra.mxu0 0.0
        %2139 = vmatprep.subr.mxu0 0.0
        %2140 = vmatpush2.msra.mxu0 0.0
        %2141 = vmatprep.subr.mxu0 0.0
        %2142 = vmatpush2.msra.mxu0 0.0
        %2143 = vmatprep.subr.mxu0 0.0
        %2144 = vmatpush2.msra.mxu0 0.0
        %2145 = vmatprep.subr.mxu0 0.0
        %2146 = vmatpush2.msra.mxu0 0.0
        %2147 = vmatprep.subr.mxu0 0.0
        %2148 = vmatpush2.msra.mxu0 0.0
        %2149 = vmatprep.mubr.f32.mxu0 0.0
        %2150 = vmatmul.mubr.f32.gmra.mxu0 %v2062
        %v2151 = vpop.f32.mrf.mxu0
        %v2152 = vadd.f32 0.0, %v2151
        %v2153 = vpop.f32.mrf.mxu0
        %2154 = vmatprep.mubr.f32.mxu0 0.0
        %2155 = vmatmul.mubr.f32.gmra.mxu0 %v2065
        %v2156 = vpop.f32.mrf.mxu0
        %v2157 = vadd.f32 0.0, %v2156
        %v2158 = vpop.f32.mrf.mxu0
        %2159 = vmatprep.mubr.f32.mxu0 0.0
        %2160 = vmatmul.mubr.f32.gmra.mxu0 %v2068
        %v2161 = vpop.f32.mrf.mxu0
        %v2162 = vadd.f32 0.0, %v2161
        %v2163 = vpop.f32.mrf.mxu0
        %2164 = vmatprep.mubr.f32.mxu0 0.0
        %2165 = vmatmul.mubr.f32.gmra.mxu0 %v2071
        %v2166 = vpop.f32.mrf.mxu0
        %v2167 = vadd.f32 0.0, %v2166
        %v2168 = vpop.f32.mrf.mxu0
        %2169 = vmatprep.mubr.f32.mxu0 0.0
        %2170 = vmatmul.mubr.f32.gmra.mxu0 %v2074
        %v2171 = vpop.f32.mrf.mxu0
        %v2172 = vadd.f32 0.0, %v2171
        %v2173 = vpop.f32.mrf.mxu0
        %2174 = vmatprep.mubr.f32.mxu0 0.0
        %2175 = vmatmul.mubr.f32.gmra.mxu0 %v2077
        %v2176 = vpop.f32.mrf.mxu0
        %v2177 = vadd.f32 0.0, %v2176
        %v2178 = vpop.f32.mrf.mxu0
        %2179 = vmatprep.mubr.f32.mxu0 0.0
        %2180 = vmatmul.mubr.f32.gmra.mxu0 %v2080
        %v2181 = vpop.f32.mrf.mxu0
        %v2182 = vadd.f32 0.0, %v2181
        %v2183 = vpop.f32.mrf.mxu0
        %2184 = vmatprep.mubr.f32.mxu0 0.0
        %2185 = vmatmul.mubr.f32.gmra.mxu0 %v2083
        %v2186 = vpop.f32.mrf.mxu0
        %v2187 = vadd.f32 0.0, %v2186
        %v2188 = vpop.f32.mrf.mxu0
        %2189 = vdwg.mxu0
        %v2190 = vadd.f32 %v2013, %v2152
        %v2191 = vadd.f32 %v2018, %v2157
        %v2192 = vadd.f32 %v2023, %v2162
        %v2193 = vadd.f32 %v2028, %v2167
        %v2194 = vadd.f32 %v2033, %v2172
        %v2195 = vadd.f32 %v2038, %v2177
        %v2196 = vadd.f32 %v2043, %v2182
        %v2197 = vadd.f32 %v2048, %v2187
        %v2198 = vld [vmem:[%s1764] sm:$0xff]
        %v2199 = vld [vmem:[%s1764 + $0x10] sm:$0xff]
        %v2200 = vld [vmem:[%s1764 + $0x20] sm:$0xff]
        %v2201 = vld [vmem:[%s1764 + $0x30] sm:$0xff]
        %v2202 = vld [vmem:[%s1764 + $0x40] sm:$0xff]
        %v2203 = vld [vmem:[%s1764 + $0x50] sm:$0xff]
        %v2204 = vld [vmem:[%s1764 + $0x60] sm:$0xff]
        %v2205 = vld [vmem:[%s1764 + $0x70] sm:$0xff]
        %s2206 = scalar_lea.vmem %s3, 24
        %v2207 = vld [vmem:[%s2206] sm:$0xff]
        %v2209 = vsel %vm1742, %v2198, 0
        %v2212 = vsel %vm1742, %v2199, 0
        %v2215 = vsel %vm1742, %v2200, 0
        %v2218 = vsel %vm1742, %v2201, 0
        %v2221 = vsel %vm1742, %v2202, 0
        %v2224 = vsel %vm1742, %v2203, 0
        %v2227 = vsel %vm1742, %v2204, 0
        %v2230 = vsel %vm1742, %v2205, 0
        %2232 = vmatprep.subr.mxu0 0.0
        %2233 = vmatpush1.msra.mxu0 0.0
        %2234 = vmatprep.subr.mxu0 0.0
        %2235 = vmatpush1.msra.mxu0 0.0
        %2236 = vmatprep.subr.mxu0 0.0
        %2237 = vmatpush1.msra.mxu0 0.0
        %2238 = vmatprep.subr.mxu0 0.0
        %2239 = vmatpush1.msra.mxu0 0.0
        %2240 = vmatprep.subr.mxu0 0.0
        %2241 = vmatpush1.msra.mxu0 0.0
        %2242 = vmatprep.subr.mxu0 0.0
        %2243 = vmatpush1.msra.mxu0 0.0
        %2244 = vmatprep.subr.mxu0 0.0
        %2245 = vmatpush1.msra.mxu0 0.0
        %2246 = vmatprep.subr.mxu0 0.0
        %2247 = vmatpush1.msra.mxu0 0.0
        %2248 = vmatprep.subr.mxu0 0.0
        %2249 = vmatpush1.msra.mxu0 0.0
        %2250 = vmatprep.subr.mxu0 0.0
        %2251 = vmatpush1.msra.mxu0 0.0
        %2252 = vmatprep.subr.mxu0 0.0
        %2253 = vmatpush1.msra.mxu0 0.0
        %2254 = vmatprep.subr.mxu0 0.0
        %2255 = vmatpush1.msra.mxu0 0.0
        %2256 = vmatprep.subr.mxu0 0.0
        %2257 = vmatpush1.msra.mxu0 0.0
        %2258 = vmatprep.subr.mxu0 0.0
        %2259 = vmatpush1.msra.mxu0 0.0
        %2260 = vmatprep.subr.mxu0 0.0
        %2261 = vmatpush1.msra.mxu0 0.0
        %2262 = vmatprep.subr.mxu0 0.0
        %2263 = vmatpush1.msra.mxu0 %v2207
        %2264 = vmatprep.subr.mxu0 0.0
        %2265 = vmatpush2.msra.mxu0 0.0
        %2266 = vmatprep.subr.mxu0 0.0
        %2267 = vmatpush2.msra.mxu0 0.0
        %2268 = vmatprep.subr.mxu0 0.0
        %2269 = vmatpush2.msra.mxu0 0.0
        %2270 = vmatprep.subr.mxu0 0.0
        %2271 = vmatpush2.msra.mxu0 0.0
        %2272 = vmatprep.subr.mxu0 0.0
        %2273 = vmatpush2.msra.mxu0 0.0
        %2274 = vmatprep.subr.mxu0 0.0
        %2275 = vmatpush2.msra.mxu0 0.0
        %2276 = vmatprep.subr.mxu0 0.0
        %2277 = vmatpush2.msra.mxu0 0.0
        %2278 = vmatprep.subr.mxu0 0.0
        %2279 = vmatpush2.msra.mxu0 0.0
        %2280 = vmatprep.subr.mxu0 0.0
        %2281 = vmatpush2.msra.mxu0 0.0
        %2282 = vmatprep.subr.mxu0 0.0
        %2283 = vmatpush2.msra.mxu0 0.0
        %2284 = vmatprep.subr.mxu0 0.0
        %2285 = vmatpush2.msra.mxu0 0.0
        %2286 = vmatprep.subr.mxu0 0.0
        %2287 = vmatpush2.msra.mxu0 0.0
        %2288 = vmatprep.subr.mxu0 0.0
        %2289 = vmatpush2.msra.mxu0 0.0
        %2290 = vmatprep.subr.mxu0 0.0
        %2291 = vmatpush2.msra.mxu0 0.0
        %2292 = vmatprep.subr.mxu0 0.0
        %2293 = vmatpush2.msra.mxu0 0.0
        %2294 = vmatprep.subr.mxu0 0.0
        %2295 = vmatpush2.msra.mxu0 0.0
        %2296 = vmatprep.mubr.f32.mxu0 0.0
        %2297 = vmatmul.mubr.f32.gmra.mxu0 %v2209
        %v2298 = vpop.f32.mrf.mxu0
        %v2299 = vadd.f32 0.0, %v2298
        %v2300 = vpop.f32.mrf.mxu0
        %2301 = vmatprep.mubr.f32.mxu0 0.0
        %2302 = vmatmul.mubr.f32.gmra.mxu0 %v2212
        %v2303 = vpop.f32.mrf.mxu0
        %v2304 = vadd.f32 0.0, %v2303
        %v2305 = vpop.f32.mrf.mxu0
        %2306 = vmatprep.mubr.f32.mxu0 0.0
        %2307 = vmatmul.mubr.f32.gmra.mxu0 %v2215
        %v2308 = vpop.f32.mrf.mxu0
        %v2309 = vadd.f32 0.0, %v2308
        %v2310 = vpop.f32.mrf.mxu0
        %2311 = vmatprep.mubr.f32.mxu0 0.0
        %2312 = vmatmul.mubr.f32.gmra.mxu0 %v2218
        %v2313 = vpop.f32.mrf.mxu0
        %v2314 = vadd.f32 0.0, %v2313
        %v2315 = vpop.f32.mrf.mxu0
        %2316 = vmatprep.mubr.f32.mxu0 0.0
        %2317 = vmatmul.mubr.f32.gmra.mxu0 %v2221
        %v2318 = vpop.f32.mrf.mxu0
        %v2319 = vadd.f32 0.0, %v2318
        %v2320 = vpop.f32.mrf.mxu0
        %2321 = vmatprep.mubr.f32.mxu0 0.0
        %2322 = vmatmul.mubr.f32.gmra.mxu0 %v2224
        %v2323 = vpop.f32.mrf.mxu0
        %v2324 = vadd.f32 0.0, %v2323
        %v2325 = vpop.f32.mrf.mxu0
        %2326 = vmatprep.mubr.f32.mxu0 0.0
        %2327 = vmatmul.mubr.f32.gmra.mxu0 %v2227
        %v2328 = vpop.f32.mrf.mxu0
        %v2329 = vadd.f32 0.0, %v2328
        %v2330 = vpop.f32.mrf.mxu0
        %2331 = vmatprep.mubr.f32.mxu0 0.0
        %2332 = vmatmul.mubr.f32.gmra.mxu0 %v2230
        %v2333 = vpop.f32.mrf.mxu0
        %v2334 = vadd.f32 0.0, %v2333
        %v2335 = vpop.f32.mrf.mxu0
        %2336 = vdwg.mxu0
        %v2337 = vadd.f32 %v2190, %v2299
        %v2338 = vadd.f32 %v2191, %v2304
        %v2339 = vadd.f32 %v2192, %v2309
        %v2340 = vadd.f32 %v2193, %v2314
        %v2341 = vadd.f32 %v2194, %v2319
        %v2342 = vadd.f32 %v2195, %v2324
        %v2343 = vadd.f32 %v2196, %v2329
        %v2344 = vadd.f32 %v2197, %v2334
        %v2345 = vld [vmem:[%s1764 + $0x1] sm:$0xff]
        %v2346 = vld [vmem:[%s1764 + $0x11] sm:$0xff]
        %v2347 = vld [vmem:[%s1764 + $0x21] sm:$0xff]
        %v2348 = vld [vmem:[%s1764 + $0x31] sm:$0xff]
        %v2349 = vld [vmem:[%s1764 + $0x41] sm:$0xff]
        %v2350 = vld [vmem:[%s1764 + $0x51] sm:$0xff]
        %v2351 = vld [vmem:[%s1764 + $0x61] sm:$0xff]
        %v2352 = vld [vmem:[%s1764 + $0x71] sm:$0xff]
        %s2353 = scalar_lea.vmem %s3, 32
        %v2354 = vld [vmem:[%s2353] sm:$0xff]
        %v2356 = vsel %vm1742, %v2345, 0
        %v2359 = vsel %vm1742, %v2346, 0
        %v2362 = vsel %vm1742, %v2347, 0
        %v2365 = vsel %vm1742, %v2348, 0
        %v2368 = vsel %vm1742, %v2349, 0
        %v2371 = vsel %vm1742, %v2350, 0
        %v2374 = vsel %vm1742, %v2351, 0
        %v2377 = vsel %vm1742, %v2352, 0
        %2379 = vmatprep.subr.mxu0 0.0
        %2380 = vmatpush1.msra.mxu0 0.0
        %2381 = vmatprep.subr.mxu0 0.0
        %2382 = vmatpush1.msra.mxu0 0.0
        %2383 = vmatprep.subr.mxu0 0.0
        %2384 = vmatpush1.msra.mxu0 0.0
        %2385 = vmatprep.subr.mxu0 0.0
        %2386 = vmatpush1.msra.mxu0 0.0
        %2387 = vmatprep.subr.mxu0 0.0
        %2388 = vmatpush1.msra.mxu0 0.0
        %2389 = vmatprep.subr.mxu0 0.0
        %2390 = vmatpush1.msra.mxu0 0.0
        %2391 = vmatprep.subr.mxu0 0.0
        %2392 = vmatpush1.msra.mxu0 0.0
        %2393 = vmatprep.subr.mxu0 0.0
        %2394 = vmatpush1.msra.mxu0 0.0
        %2395 = vmatprep.subr.mxu0 0.0
        %2396 = vmatpush1.msra.mxu0 0.0
        %2397 = vmatprep.subr.mxu0 0.0
        %2398 = vmatpush1.msra.mxu0 0.0
        %2399 = vmatprep.subr.mxu0 0.0
        %2400 = vmatpush1.msra.mxu0 0.0
        %2401 = vmatprep.subr.mxu0 0.0
        %2402 = vmatpush1.msra.mxu0 0.0
        %2403 = vmatprep.subr.mxu0 0.0
        %2404 = vmatpush1.msra.mxu0 0.0
        %2405 = vmatprep.subr.mxu0 0.0
        %2406 = vmatpush1.msra.mxu0 0.0
        %2407 = vmatprep.subr.mxu0 0.0
        %2408 = vmatpush1.msra.mxu0 0.0
        %2409 = vmatprep.subr.mxu0 0.0
        %2410 = vmatpush1.msra.mxu0 %v2354
        %2411 = vmatprep.subr.mxu0 0.0
        %2412 = vmatpush2.msra.mxu0 0.0
        %2413 = vmatprep.subr.mxu0 0.0
        %2414 = vmatpush2.msra.mxu0 0.0
        %2415 = vmatprep.subr.mxu0 0.0
        %2416 = vmatpush2.msra.mxu0 0.0
        %2417 = vmatprep.subr.mxu0 0.0
        %2418 = vmatpush2.msra.mxu0 0.0
        %2419 = vmatprep.subr.mxu0 0.0
        %2420 = vmatpush2.msra.mxu0 0.0
        %2421 = vmatprep.subr.mxu0 0.0
        %2422 = vmatpush2.msra.mxu0 0.0
        %2423 = vmatprep.subr.mxu0 0.0
        %2424 = vmatpush2.msra.mxu0 0.0
        %2425 = vmatprep.subr.mxu0 0.0
        %2426 = vmatpush2.msra.mxu0 0.0
        %2427 = vmatprep.subr.mxu0 0.0
        %2428 = vmatpush2.msra.mxu0 0.0
        %2429 = vmatprep.subr.mxu0 0.0
        %2430 = vmatpush2.msra.mxu0 0.0
        %2431 = vmatprep.subr.mxu0 0.0
        %2432 = vmatpush2.msra.mxu0 0.0
        %2433 = vmatprep.subr.mxu0 0.0
        %2434 = vmatpush2.msra.mxu0 0.0
        %2435 = vmatprep.subr.mxu0 0.0
        %2436 = vmatpush2.msra.mxu0 0.0
        %2437 = vmatprep.subr.mxu0 0.0
        %2438 = vmatpush2.msra.mxu0 0.0
        %2439 = vmatprep.subr.mxu0 0.0
        %2440 = vmatpush2.msra.mxu0 0.0
        %2441 = vmatprep.subr.mxu0 0.0
        %2442 = vmatpush2.msra.mxu0 0.0
        %2443 = vmatprep.mubr.f32.mxu0 0.0
        %2444 = vmatmul.mubr.f32.gmra.mxu0 %v2356
        %v2445 = vpop.f32.mrf.mxu0
        %v2446 = vadd.f32 0.0, %v2445
        %v2447 = vpop.f32.mrf.mxu0
        %2448 = vmatprep.mubr.f32.mxu0 0.0
        %2449 = vmatmul.mubr.f32.gmra.mxu0 %v2359
        %v2450 = vpop.f32.mrf.mxu0
        %v2451 = vadd.f32 0.0, %v2450
        %v2452 = vpop.f32.mrf.mxu0
        %2453 = vmatprep.mubr.f32.mxu0 0.0
        %2454 = vmatmul.mubr.f32.gmra.mxu0 %v2362
        %v2455 = vpop.f32.mrf.mxu0
        %v2456 = vadd.f32 0.0, %v2455
        %v2457 = vpop.f32.mrf.mxu0
        %2458 = vmatprep.mubr.f32.mxu0 0.0
        %2459 = vmatmul.mubr.f32.gmra.mxu0 %v2365
        %v2460 = vpop.f32.mrf.mxu0
        %v2461 = vadd.f32 0.0, %v2460
        %v2462 = vpop.f32.mrf.mxu0
        %2463 = vmatprep.mubr.f32.mxu0 0.0
        %2464 = vmatmul.mubr.f32.gmra.mxu0 %v2368
        %v2465 = vpop.f32.mrf.mxu0
        %v2466 = vadd.f32 0.0, %v2465
        %v2467 = vpop.f32.mrf.mxu0
        %2468 = vmatprep.mubr.f32.mxu0 0.0
        %2469 = vmatmul.mubr.f32.gmra.mxu0 %v2371
        %v2470 = vpop.f32.mrf.mxu0
        %v2471 = vadd.f32 0.0, %v2470
        %v2472 = vpop.f32.mrf.mxu0
        %2473 = vmatprep.mubr.f32.mxu0 0.0
        %2474 = vmatmul.mubr.f32.gmra.mxu0 %v2374
        %v2475 = vpop.f32.mrf.mxu0
        %v2476 = vadd.f32 0.0, %v2475
        %v2477 = vpop.f32.mrf.mxu0
        %2478 = vmatprep.mubr.f32.mxu0 0.0
        %2479 = vmatmul.mubr.f32.gmra.mxu0 %v2377
        %v2480 = vpop.f32.mrf.mxu0
        %v2481 = vadd.f32 0.0, %v2480
        %v2482 = vpop.f32.mrf.mxu0
        %2483 = vdwg.mxu0
        %v2484 = vadd.f32 %v2337, %v2446
        %v2485 = vadd.f32 %v2338, %v2451
        %v2486 = vadd.f32 %v2339, %v2456
        %v2487 = vadd.f32 %v2340, %v2461
        %v2488 = vadd.f32 %v2341, %v2466
        %v2489 = vadd.f32 %v2342, %v2471
        %v2490 = vadd.f32 %v2343, %v2476
        %v2491 = vadd.f32 %v2344, %v2481
        %v2492 = vld [vmem:[%s1764 + $0x2] sm:$0xff]
        %v2493 = vld [vmem:[%s1764 + $0x12] sm:$0xff]
        %v2494 = vld [vmem:[%s1764 + $0x22] sm:$0xff]
        %v2495 = vld [vmem:[%s1764 + $0x32] sm:$0xff]
        %v2496 = vld [vmem:[%s1764 + $0x42] sm:$0xff]
        %v2497 = vld [vmem:[%s1764 + $0x52] sm:$0xff]
        %v2498 = vld [vmem:[%s1764 + $0x62] sm:$0xff]
        %v2499 = vld [vmem:[%s1764 + $0x72] sm:$0xff]
        %s2500 = scalar_lea.vmem %s3, 40
        %v2501 = vld [vmem:[%s2500] sm:$0xff]
        %v2503 = vsel %vm1742, %v2492, 0
        %v2506 = vsel %vm1742, %v2493, 0
        %v2509 = vsel %vm1742, %v2494, 0
        %v2512 = vsel %vm1742, %v2495, 0
        %v2515 = vsel %vm1742, %v2496, 0
        %v2518 = vsel %vm1742, %v2497, 0
        %v2521 = vsel %vm1742, %v2498, 0
        %v2524 = vsel %vm1742, %v2499, 0
        %2526 = vmatprep.subr.mxu0 0.0
        %2527 = vmatpush1.msra.mxu0 0.0
        %2528 = vmatprep.subr.mxu0 0.0
        %2529 = vmatpush1.msra.mxu0 0.0
        %2530 = vmatprep.subr.mxu0 0.0
        %2531 = vmatpush1.msra.mxu0 0.0
        %2532 = vmatprep.subr.mxu0 0.0
        %2533 = vmatpush1.msra.mxu0 0.0
        %2534 = vmatprep.subr.mxu0 0.0
        %2535 = vmatpush1.msra.mxu0 0.0
        %2536 = vmatprep.subr.mxu0 0.0
        %2537 = vmatpush1.msra.mxu0 0.0
        %2538 = vmatprep.subr.mxu0 0.0
        %2539 = vmatpush1.msra.mxu0 0.0
        %2540 = vmatprep.subr.mxu0 0.0
        %2541 = vmatpush1.msra.mxu0 0.0
        %2542 = vmatprep.subr.mxu0 0.0
        %2543 = vmatpush1.msra.mxu0 0.0
        %2544 = vmatprep.subr.mxu0 0.0
        %2545 = vmatpush1.msra.mxu0 0.0
        %2546 = vmatprep.subr.mxu0 0.0
        %2547 = vmatpush1.msra.mxu0 0.0
        %2548 = vmatprep.subr.mxu0 0.0
        %2549 = vmatpush1.msra.mxu0 0.0
        %2550 = vmatprep.subr.mxu0 0.0
        %2551 = vmatpush1.msra.mxu0 0.0
        %2552 = vmatprep.subr.mxu0 0.0
        %2553 = vmatpush1.msra.mxu0 0.0
        %2554 = vmatprep.subr.mxu0 0.0
        %2555 = vmatpush1.msra.mxu0 0.0
        %2556 = vmatprep.subr.mxu0 0.0
        %2557 = vmatpush1.msra.mxu0 %v2501
        %2558 = vmatprep.subr.mxu0 0.0
        %2559 = vmatpush2.msra.mxu0 0.0
        %2560 = vmatprep.subr.mxu0 0.0
        %2561 = vmatpush2.msra.mxu0 0.0
        %2562 = vmatprep.subr.mxu0 0.0
        %2563 = vmatpush2.msra.mxu0 0.0
        %2564 = vmatprep.subr.mxu0 0.0
        %2565 = vmatpush2.msra.mxu0 0.0
        %2566 = vmatprep.subr.mxu0 0.0
        %2567 = vmatpush2.msra.mxu0 0.0
        %2568 = vmatprep.subr.mxu0 0.0
        %2569 = vmatpush2.msra.mxu0 0.0
        %2570 = vmatprep.subr.mxu0 0.0
        %2571 = vmatpush2.msra.mxu0 0.0
        %2572 = vmatprep.subr.mxu0 0.0
        %2573 = vmatpush2.msra.mxu0 0.0
        %2574 = vmatprep.subr.mxu0 0.0
        %2575 = vmatpush2.msra.mxu0 0.0
        %2576 = vmatprep.subr.mxu0 0.0
        %2577 = vmatpush2.msra.mxu0 0.0
        %2578 = vmatprep.subr.mxu0 0.0
        %2579 = vmatpush2.msra.mxu0 0.0
        %2580 = vmatprep.subr.mxu0 0.0
        %2581 = vmatpush2.msra.mxu0 0.0
        %2582 = vmatprep.subr.mxu0 0.0
        %2583 = vmatpush2.msra.mxu0 0.0
        %2584 = vmatprep.subr.mxu0 0.0
        %2585 = vmatpush2.msra.mxu0 0.0
        %2586 = vmatprep.subr.mxu0 0.0
        %2587 = vmatpush2.msra.mxu0 0.0
        %2588 = vmatprep.subr.mxu0 0.0
        %2589 = vmatpush2.msra.mxu0 0.0
        %2590 = vmatprep.mubr.f32.mxu0 0.0
        %2591 = vmatmul.mubr.f32.gmra.mxu0 %v2503
        %v2592 = vpop.f32.mrf.mxu0
        %v2593 = vadd.f32 0.0, %v2592
        %v2594 = vpop.f32.mrf.mxu0
        %2595 = vmatprep.mubr.f32.mxu0 0.0
        %2596 = vmatmul.mubr.f32.gmra.mxu0 %v2506
        %v2597 = vpop.f32.mrf.mxu0
        %v2598 = vadd.f32 0.0, %v2597
        %v2599 = vpop.f32.mrf.mxu0
        %2600 = vmatprep.mubr.f32.mxu0 0.0
        %2601 = vmatmul.mubr.f32.gmra.mxu0 %v2509
        %v2602 = vpop.f32.mrf.mxu0
        %v2603 = vadd.f32 0.0, %v2602
        %v2604 = vpop.f32.mrf.mxu0
        %2605 = vmatprep.mubr.f32.mxu0 0.0
        %2606 = vmatmul.mubr.f32.gmra.mxu0 %v2512
        %v2607 = vpop.f32.mrf.mxu0
        %v2608 = vadd.f32 0.0, %v2607
        %v2609 = vpop.f32.mrf.mxu0
        %2610 = vmatprep.mubr.f32.mxu0 0.0
        %2611 = vmatmul.mubr.f32.gmra.mxu0 %v2515
        %v2612 = vpop.f32.mrf.mxu0
        %v2613 = vadd.f32 0.0, %v2612
        %v2614 = vpop.f32.mrf.mxu0
        %2615 = vmatprep.mubr.f32.mxu0 0.0
        %2616 = vmatmul.mubr.f32.gmra.mxu0 %v2518
        %v2617 = vpop.f32.mrf.mxu0
        %v2618 = vadd.f32 0.0, %v2617
        %v2619 = vpop.f32.mrf.mxu0
        %2620 = vmatprep.mubr.f32.mxu0 0.0
        %2621 = vmatmul.mubr.f32.gmra.mxu0 %v2521
        %v2622 = vpop.f32.mrf.mxu0
        %v2623 = vadd.f32 0.0, %v2622
        %v2624 = vpop.f32.mrf.mxu0
        %2625 = vmatprep.mubr.f32.mxu0 0.0
        %2626 = vmatmul.mubr.f32.gmra.mxu0 %v2524
        %v2627 = vpop.f32.mrf.mxu0
        %v2628 = vadd.f32 0.0, %v2627
        %v2629 = vpop.f32.mrf.mxu0
        %2630 = vdwg.mxu0
        %v2631 = vadd.f32 %v2484, %v2593
        %v2632 = vadd.f32 %v2485, %v2598
        %v2633 = vadd.f32 %v2486, %v2603
        %v2634 = vadd.f32 %v2487, %v2608
        %v2635 = vadd.f32 %v2488, %v2613
        %v2636 = vadd.f32 %v2489, %v2618
        %v2637 = vadd.f32 %v2490, %v2623
        %v2638 = vadd.f32 %v2491, %v2628
        %s2639 = scalar_lea.vmem [#allocation3], 32
        %v2640 = vld [vmem:[%s2639] sm:$0xff]
        %v2641 = vld [vmem:[%s2639 + $0x10] sm:$0xff]
        %v2642 = vld [vmem:[%s2639 + $0x20] sm:$0xff]
        %v2643 = vld [vmem:[%s2639 + $0x30] sm:$0xff]
        %v2644 = vld [vmem:[%s2639 + $0x40] sm:$0xff]
        %v2645 = vld [vmem:[%s2639 + $0x50] sm:$0xff]
        %v2646 = vld [vmem:[%s2639 + $0x60] sm:$0xff]
        %v2647 = vld [vmem:[%s2639 + $0x70] sm:$0xff]
        %s2648 = scalar_lea.vmem %s3, 48
        %v2649 = vld [vmem:[%s2648] sm:$0xff]
        %v2651 = vsel %vm1742, %v2640, 0
        %v2654 = vsel %vm1742, %v2641, 0
        %v2657 = vsel %vm1742, %v2642, 0
        %v2660 = vsel %vm1742, %v2643, 0
        %v2663 = vsel %vm1742, %v2644, 0
        %v2666 = vsel %vm1742, %v2645, 0
        %v2669 = vsel %vm1742, %v2646, 0
        %v2672 = vsel %vm1742, %v2647, 0
        %2674 = vmatprep.subr.mxu0 0.0
        %2675 = vmatpush1.msra.mxu0 0.0
        %2676 = vmatprep.subr.mxu0 0.0
        %2677 = vmatpush1.msra.mxu0 0.0
        %2678 = vmatprep.subr.mxu0 0.0
        %2679 = vmatpush1.msra.mxu0 0.0
        %2680 = vmatprep.subr.mxu0 0.0
        %2681 = vmatpush1.msra.mxu0 0.0
        %2682 = vmatprep.subr.mxu0 0.0
        %2683 = vmatpush1.msra.mxu0 0.0
        %2684 = vmatprep.subr.mxu0 0.0
        %2685 = vmatpush1.msra.mxu0 0.0
        %2686 = vmatprep.subr.mxu0 0.0
        %2687 = vmatpush1.msra.mxu0 0.0
        %2688 = vmatprep.subr.mxu0 0.0
        %2689 = vmatpush1.msra.mxu0 0.0
        %2690 = vmatprep.subr.mxu0 0.0
        %2691 = vmatpush1.msra.mxu0 0.0
        %2692 = vmatprep.subr.mxu0 0.0
        %2693 = vmatpush1.msra.mxu0 0.0
        %2694 = vmatprep.subr.mxu0 0.0
        %2695 = vmatpush1.msra.mxu0 0.0
        %2696 = vmatprep.subr.mxu0 0.0
        %2697 = vmatpush1.msra.mxu0 0.0
        %2698 = vmatprep.subr.mxu0 0.0
        %2699 = vmatpush1.msra.mxu0 0.0
        %2700 = vmatprep.subr.mxu0 0.0
        %2701 = vmatpush1.msra.mxu0 0.0
        %2702 = vmatprep.subr.mxu0 0.0
        %2703 = vmatpush1.msra.mxu0 0.0
        %2704 = vmatprep.subr.mxu0 0.0
        %2705 = vmatpush1.msra.mxu0 %v2649
        %2706 = vmatprep.subr.mxu0 0.0
        %2707 = vmatpush2.msra.mxu0 0.0
        %2708 = vmatprep.subr.mxu0 0.0
        %2709 = vmatpush2.msra.mxu0 0.0
        %2710 = vmatprep.subr.mxu0 0.0
        %2711 = vmatpush2.msra.mxu0 0.0
        %2712 = vmatprep.subr.mxu0 0.0
        %2713 = vmatpush2.msra.mxu0 0.0
        %2714 = vmatprep.subr.mxu0 0.0
        %2715 = vmatpush2.msra.mxu0 0.0
        %2716 = vmatprep.subr.mxu0 0.0
        %2717 = vmatpush2.msra.mxu0 0.0
        %2718 = vmatprep.subr.mxu0 0.0
        %2719 = vmatpush2.msra.mxu0 0.0
        %2720 = vmatprep.subr.mxu0 0.0
        %2721 = vmatpush2.msra.mxu0 0.0
        %2722 = vmatprep.subr.mxu0 0.0
        %2723 = vmatpush2.msra.mxu0 0.0
        %2724 = vmatprep.subr.mxu0 0.0
        %2725 = vmatpush2.msra.mxu0 0.0
        %2726 = vmatprep.subr.mxu0 0.0
        %2727 = vmatpush2.msra.mxu0 0.0
        %2728 = vmatprep.subr.mxu0 0.0
        %2729 = vmatpush2.msra.mxu0 0.0
        %2730 = vmatprep.subr.mxu0 0.0
        %2731 = vmatpush2.msra.mxu0 0.0
        %2732 = vmatprep.subr.mxu0 0.0
        %2733 = vmatpush2.msra.mxu0 0.0
        %2734 = vmatprep.subr.mxu0 0.0
        %2735 = vmatpush2.msra.mxu0 0.0
        %2736 = vmatprep.subr.mxu0 0.0
        %2737 = vmatpush2.msra.mxu0 0.0
        %2738 = vmatprep.mubr.f32.mxu0 0.0
        %2739 = vmatmul.mubr.f32.gmra.mxu0 %v2651
        %v2740 = vpop.f32.mrf.mxu0
        %v2741 = vadd.f32 0.0, %v2740
        %v2742 = vpop.f32.mrf.mxu0
        %2743 = vmatprep.mubr.f32.mxu0 0.0
        %2744 = vmatmul.mubr.f32.gmra.mxu0 %v2654
        %v2745 = vpop.f32.mrf.mxu0
        %v2746 = vadd.f32 0.0, %v2745
        %v2747 = vpop.f32.mrf.mxu0
        %2748 = vmatprep.mubr.f32.mxu0 0.0
        %2749 = vmatmul.mubr.f32.gmra.mxu0 %v2657
        %v2750 = vpop.f32.mrf.mxu0
        %v2751 = vadd.f32 0.0, %v2750
        %v2752 = vpop.f32.mrf.mxu0
        %2753 = vmatprep.mubr.f32.mxu0 0.0
        %2754 = vmatmul.mubr.f32.gmra.mxu0 %v2660
        %v2755 = vpop.f32.mrf.mxu0
        %v2756 = vadd.f32 0.0, %v2755
        %v2757 = vpop.f32.mrf.mxu0
        %2758 = vmatprep.mubr.f32.mxu0 0.0
        %2759 = vmatmul.mubr.f32.gmra.mxu0 %v2663
        %v2760 = vpop.f32.mrf.mxu0
        %v2761 = vadd.f32 0.0, %v2760
        %v2762 = vpop.f32.mrf.mxu0
        %2763 = vmatprep.mubr.f32.mxu0 0.0
        %2764 = vmatmul.mubr.f32.gmra.mxu0 %v2666
        %v2765 = vpop.f32.mrf.mxu0
        %v2766 = vadd.f32 0.0, %v2765
        %v2767 = vpop.f32.mrf.mxu0
        %2768 = vmatprep.mubr.f32.mxu0 0.0
        %2769 = vmatmul.mubr.f32.gmra.mxu0 %v2669
        %v2770 = vpop.f32.mrf.mxu0
        %v2771 = vadd.f32 0.0, %v2770
        %v2772 = vpop.f32.mrf.mxu0
        %2773 = vmatprep.mubr.f32.mxu0 0.0
        %2774 = vmatmul.mubr.f32.gmra.mxu0 %v2672
        %v2775 = vpop.f32.mrf.mxu0
        %v2776 = vadd.f32 0.0, %v2775
        %v2777 = vpop.f32.mrf.mxu0
        %2778 = vdwg.mxu0
        %v2779 = vadd.f32 %v2631, %v2741
        %v2780 = vadd.f32 %v2632, %v2746
        %v2781 = vadd.f32 %v2633, %v2751
        %v2782 = vadd.f32 %v2634, %v2756
        %v2783 = vadd.f32 %v2635, %v2761
        %v2784 = vadd.f32 %v2636, %v2766
        %v2785 = vadd.f32 %v2637, %v2771
        %v2786 = vadd.f32 %v2638, %v2776
        %v2787 = vld [vmem:[%s2639 + $0x1] sm:$0xff]
        %v2788 = vld [vmem:[%s2639 + $0x11] sm:$0xff]
        %v2789 = vld [vmem:[%s2639 + $0x21] sm:$0xff]
        %v2790 = vld [vmem:[%s2639 + $0x31] sm:$0xff]
        %v2791 = vld [vmem:[%s2639 + $0x41] sm:$0xff]
        %v2792 = vld [vmem:[%s2639 + $0x51] sm:$0xff]
        %v2793 = vld [vmem:[%s2639 + $0x61] sm:$0xff]
        %v2794 = vld [vmem:[%s2639 + $0x71] sm:$0xff]
        %s2795 = scalar_lea.vmem %s3, 56
        %v2796 = vld [vmem:[%s2795] sm:$0xff]
        %v2798 = vsel %vm1742, %v2787, 0
        %v2801 = vsel %vm1742, %v2788, 0
        %v2804 = vsel %vm1742, %v2789, 0
        %v2807 = vsel %vm1742, %v2790, 0
        %v2810 = vsel %vm1742, %v2791, 0
        %v2813 = vsel %vm1742, %v2792, 0
        %v2816 = vsel %vm1742, %v2793, 0
        %v2819 = vsel %vm1742, %v2794, 0
        %2821 = vmatprep.subr.mxu0 0.0
        %2822 = vmatpush1.msra.mxu0 0.0
        %2823 = vmatprep.subr.mxu0 0.0
        %2824 = vmatpush1.msra.mxu0 0.0
        %2825 = vmatprep.subr.mxu0 0.0
        %2826 = vmatpush1.msra.mxu0 0.0
        %2827 = vmatprep.subr.mxu0 0.0
        %2828 = vmatpush1.msra.mxu0 0.0
        %2829 = vmatprep.subr.mxu0 0.0
        %2830 = vmatpush1.msra.mxu0 0.0
        %2831 = vmatprep.subr.mxu0 0.0
        %2832 = vmatpush1.msra.mxu0 0.0
        %2833 = vmatprep.subr.mxu0 0.0
        %2834 = vmatpush1.msra.mxu0 0.0
        %2835 = vmatprep.subr.mxu0 0.0
        %2836 = vmatpush1.msra.mxu0 0.0
        %2837 = vmatprep.subr.mxu0 0.0
        %2838 = vmatpush1.msra.mxu0 0.0
        %2839 = vmatprep.subr.mxu0 0.0
        %2840 = vmatpush1.msra.mxu0 0.0
        %2841 = vmatprep.subr.mxu0 0.0
        %2842 = vmatpush1.msra.mxu0 0.0
        %2843 = vmatprep.subr.mxu0 0.0
        %2844 = vmatpush1.msra.mxu0 0.0
        %2845 = vmatprep.subr.mxu0 0.0
        %2846 = vmatpush1.msra.mxu0 0.0
        %2847 = vmatprep.subr.mxu0 0.0
        %2848 = vmatpush1.msra.mxu0 0.0
        %2849 = vmatprep.subr.mxu0 0.0
        %2850 = vmatpush1.msra.mxu0 0.0
        %2851 = vmatprep.subr.mxu0 0.0
        %2852 = vmatpush1.msra.mxu0 %v2796
        %2853 = vmatprep.subr.mxu0 0.0
        %2854 = vmatpush2.msra.mxu0 0.0
        %2855 = vmatprep.subr.mxu0 0.0
        %2856 = vmatpush2.msra.mxu0 0.0
        %2857 = vmatprep.subr.mxu0 0.0
        %2858 = vmatpush2.msra.mxu0 0.0
        %2859 = vmatprep.subr.mxu0 0.0
        %2860 = vmatpush2.msra.mxu0 0.0
        %2861 = vmatprep.subr.mxu0 0.0
        %2862 = vmatpush2.msra.mxu0 0.0
        %2863 = vmatprep.subr.mxu0 0.0
        %2864 = vmatpush2.msra.mxu0 0.0
        %2865 = vmatprep.subr.mxu0 0.0
        %2866 = vmatpush2.msra.mxu0 0.0
        %2867 = vmatprep.subr.mxu0 0.0
        %2868 = vmatpush2.msra.mxu0 0.0
        %2869 = vmatprep.subr.mxu0 0.0
        %2870 = vmatpush2.msra.mxu0 0.0
        %2871 = vmatprep.subr.mxu0 0.0
        %2872 = vmatpush2.msra.mxu0 0.0
        %2873 = vmatprep.subr.mxu0 0.0
        %2874 = vmatpush2.msra.mxu0 0.0
        %2875 = vmatprep.subr.mxu0 0.0
        %2876 = vmatpush2.msra.mxu0 0.0
        %2877 = vmatprep.subr.mxu0 0.0
        %2878 = vmatpush2.msra.mxu0 0.0
        %2879 = vmatprep.subr.mxu0 0.0
        %2880 = vmatpush2.msra.mxu0 0.0
        %2881 = vmatprep.subr.mxu0 0.0
        %2882 = vmatpush2.msra.mxu0 0.0
        %2883 = vmatprep.subr.mxu0 0.0
        %2884 = vmatpush2.msra.mxu0 0.0
        %2885 = vmatprep.mubr.f32.mxu0 0.0
        %2886 = vmatmul.mubr.f32.gmra.mxu0 %v2798
        %v2887 = vpop.f32.mrf.mxu0
        %v2888 = vadd.f32 0.0, %v2887
        %v2889 = vpop.f32.mrf.mxu0
        %2890 = vmatprep.mubr.f32.mxu0 0.0
        %2891 = vmatmul.mubr.f32.gmra.mxu0 %v2801
        %v2892 = vpop.f32.mrf.mxu0
        %v2893 = vadd.f32 0.0, %v2892
        %v2894 = vpop.f32.mrf.mxu0
        %2895 = vmatprep.mubr.f32.mxu0 0.0
        %2896 = vmatmul.mubr.f32.gmra.mxu0 %v2804
        %v2897 = vpop.f32.mrf.mxu0
        %v2898 = vadd.f32 0.0, %v2897
        %v2899 = vpop.f32.mrf.mxu0
        %2900 = vmatprep.mubr.f32.mxu0 0.0
        %2901 = vmatmul.mubr.f32.gmra.mxu0 %v2807
        %v2902 = vpop.f32.mrf.mxu0
        %v2903 = vadd.f32 0.0, %v2902
        %v2904 = vpop.f32.mrf.mxu0
        %2905 = vmatprep.mubr.f32.mxu0 0.0
        %2906 = vmatmul.mubr.f32.gmra.mxu0 %v2810
        %v2907 = vpop.f32.mrf.mxu0
        %v2908 = vadd.f32 0.0, %v2907
        %v2909 = vpop.f32.mrf.mxu0
        %2910 = vmatprep.mubr.f32.mxu0 0.0
        %2911 = vmatmul.mubr.f32.gmra.mxu0 %v2813
        %v2912 = vpop.f32.mrf.mxu0
        %v2913 = vadd.f32 0.0, %v2912
        %v2914 = vpop.f32.mrf.mxu0
        %2915 = vmatprep.mubr.f32.mxu0 0.0
        %2916 = vmatmul.mubr.f32.gmra.mxu0 %v2816
        %v2917 = vpop.f32.mrf.mxu0
        %v2918 = vadd.f32 0.0, %v2917
        %v2919 = vpop.f32.mrf.mxu0
        %2920 = vmatprep.mubr.f32.mxu0 0.0
        %2921 = vmatmul.mubr.f32.gmra.mxu0 %v2819
        %v2922 = vpop.f32.mrf.mxu0
        %v2923 = vadd.f32 0.0, %v2922
        %v2924 = vpop.f32.mrf.mxu0
        %2925 = vdwg.mxu0
        %v2926 = vadd.f32 %v2779, %v2888
        %v2927 = vadd.f32 %v2780, %v2893
        %v2928 = vadd.f32 %v2781, %v2898
        %v2929 = vadd.f32 %v2782, %v2903
        %v2930 = vadd.f32 %v2783, %v2908
        %v2931 = vadd.f32 %v2784, %v2913
        %v2932 = vadd.f32 %v2785, %v2918
        %v2933 = vadd.f32 %v2786, %v2923
        %v2934 = vld [vmem:[%s2639 + $0x2] sm:$0xff]
        %v2935 = vld [vmem:[%s2639 + $0x12] sm:$0xff]
        %v2936 = vld [vmem:[%s2639 + $0x22] sm:$0xff]
        %v2937 = vld [vmem:[%s2639 + $0x32] sm:$0xff]
        %v2938 = vld [vmem:[%s2639 + $0x42] sm:$0xff]
        %v2939 = vld [vmem:[%s2639 + $0x52] sm:$0xff]
        %v2940 = vld [vmem:[%s2639 + $0x62] sm:$0xff]
        %v2941 = vld [vmem:[%s2639 + $0x72] sm:$0xff]
        %s2942 = scalar_lea.vmem %s3, 64
        %v2943 = vld [vmem:[%s2942] sm:$0xff]
        %v2945 = vsel %vm1742, %v2934, 0
        %v2948 = vsel %vm1742, %v2935, 0
        %v2951 = vsel %vm1742, %v2936, 0
        %v2954 = vsel %vm1742, %v2937, 0
        %v2957 = vsel %vm1742, %v2938, 0
        %v2960 = vsel %vm1742, %v2939, 0
        %v2963 = vsel %vm1742, %v2940, 0
        %v2966 = vsel %vm1742, %v2941, 0
        %2968 = vmatprep.subr.mxu0 0.0
        %2969 = vmatpush1.msra.mxu0 0.0
        %2970 = vmatprep.subr.mxu0 0.0
        %2971 = vmatpush1.msra.mxu0 0.0
        %2972 = vmatprep.subr.mxu0 0.0
        %2973 = vmatpush1.msra.mxu0 0.0
        %2974 = vmatprep.subr.mxu0 0.0
        %2975 = vmatpush1.msra.mxu0 0.0
        %2976 = vmatprep.subr.mxu0 0.0
        %2977 = vmatpush1.msra.mxu0 0.0
        %2978 = vmatprep.subr.mxu0 0.0
        %2979 = vmatpush1.msra.mxu0 0.0
        %2980 = vmatprep.subr.mxu0 0.0
        %2981 = vmatpush1.msra.mxu0 0.0
        %2982 = vmatprep.subr.mxu0 0.0
        %2983 = vmatpush1.msra.mxu0 0.0
        %2984 = vmatprep.subr.mxu0 0.0
        %2985 = vmatpush1.msra.mxu0 0.0
        %2986 = vmatprep.subr.mxu0 0.0
        %2987 = vmatpush1.msra.mxu0 0.0
        %2988 = vmatprep.subr.mxu0 0.0
        %2989 = vmatpush1.msra.mxu0 0.0
        %2990 = vmatprep.subr.mxu0 0.0
        %2991 = vmatpush1.msra.mxu0 0.0
        %2992 = vmatprep.subr.mxu0 0.0
        %2993 = vmatpush1.msra.mxu0 0.0
        %2994 = vmatprep.subr.mxu0 0.0
        %2995 = vmatpush1.msra.mxu0 0.0
        %2996 = vmatprep.subr.mxu0 0.0
        %2997 = vmatpush1.msra.mxu0 0.0
        %2998 = vmatprep.subr.mxu0 0.0
        %2999 = vmatpush1.msra.mxu0 %v2943
        %3000 = vmatprep.subr.mxu0 0.0
        %3001 = vmatpush2.msra.mxu0 0.0
        %3002 = vmatprep.subr.mxu0 0.0
        %3003 = vmatpush2.msra.mxu0 0.0
        %3004 = vmatprep.subr.mxu0 0.0
        %3005 = vmatpush2.msra.mxu0 0.0
        %3006 = vmatprep.subr.mxu0 0.0
        %3007 = vmatpush2.msra.mxu0 0.0
        %3008 = vmatprep.subr.mxu0 0.0
        %3009 = vmatpush2.msra.mxu0 0.0
        %3010 = vmatprep.subr.mxu0 0.0
        %3011 = vmatpush2.msra.mxu0 0.0
        %3012 = vmatprep.subr.mxu0 0.0
        %3013 = vmatpush2.msra.mxu0 0.0
        %3014 = vmatprep.subr.mxu0 0.0
        %3015 = vmatpush2.msra.mxu0 0.0
        %3016 = vmatprep.subr.mxu0 0.0
        %3017 = vmatpush2.msra.mxu0 0.0
        %3018 = vmatprep.subr.mxu0 0.0
        %3019 = vmatpush2.msra.mxu0 0.0
        %3020 = vmatprep.subr.mxu0 0.0
        %3021 = vmatpush2.msra.mxu0 0.0
        %3022 = vmatprep.subr.mxu0 0.0
        %3023 = vmatpush2.msra.mxu0 0.0
        %3024 = vmatprep.subr.mxu0 0.0
        %3025 = vmatpush2.msra.mxu0 0.0
        %3026 = vmatprep.subr.mxu0 0.0
        %3027 = vmatpush2.msra.mxu0 0.0
        %3028 = vmatprep.subr.mxu0 0.0
        %3029 = vmatpush2.msra.mxu0 0.0
        %3030 = vmatprep.subr.mxu0 0.0
        %3031 = vmatpush2.msra.mxu0 0.0
        %3032 = vmatprep.mubr.f32.mxu0 0.0
        %3033 = vmatmul.mubr.f32.gmra.mxu0 %v2945
        %v3034 = vpop.f32.mrf.mxu0
        %v3035 = vadd.f32 0.0, %v3034
        %v3036 = vpop.f32.mrf.mxu0
        %3037 = vmatprep.mubr.f32.mxu0 0.0
        %3038 = vmatmul.mubr.f32.gmra.mxu0 %v2948
        %v3039 = vpop.f32.mrf.mxu0
        %v3040 = vadd.f32 0.0, %v3039
        %v3041 = vpop.f32.mrf.mxu0
        %3042 = vmatprep.mubr.f32.mxu0 0.0
        %3043 = vmatmul.mubr.f32.gmra.mxu0 %v2951
        %v3044 = vpop.f32.mrf.mxu0
        %v3045 = vadd.f32 0.0, %v3044
        %v3046 = vpop.f32.mrf.mxu0
        %3047 = vmatprep.mubr.f32.mxu0 0.0
        %3048 = vmatmul.mubr.f32.gmra.mxu0 %v2954
        %v3049 = vpop.f32.mrf.mxu0
        %v3050 = vadd.f32 0.0, %v3049
        %v3051 = vpop.f32.mrf.mxu0
        %3052 = vmatprep.mubr.f32.mxu0 0.0
        %3053 = vmatmul.mubr.f32.gmra.mxu0 %v2957
        %v3054 = vpop.f32.mrf.mxu0
        %v3055 = vadd.f32 0.0, %v3054
        %v3056 = vpop.f32.mrf.mxu0
        %3057 = vmatprep.mubr.f32.mxu0 0.0
        %3058 = vmatmul.mubr.f32.gmra.mxu0 %v2960
        %v3059 = vpop.f32.mrf.mxu0
        %v3060 = vadd.f32 0.0, %v3059
        %v3061 = vpop.f32.mrf.mxu0
        %3062 = vmatprep.mubr.f32.mxu0 0.0
        %3063 = vmatmul.mubr.f32.gmra.mxu0 %v2963
        %v3064 = vpop.f32.mrf.mxu0
        %v3065 = vadd.f32 0.0, %v3064
        %v3066 = vpop.f32.mrf.mxu0
        %3067 = vmatprep.mubr.f32.mxu0 0.0
        %3068 = vmatmul.mubr.f32.gmra.mxu0 %v2966
        %v3069 = vpop.f32.mrf.mxu0
        %v3070 = vadd.f32 0.0, %v3069
        %v3071 = vpop.f32.mrf.mxu0
        %3072 = vdwg.mxu0
        %v3073 = vadd.f32 %v2926, %v3035
        %v3074 = vadd.f32 %v2927, %v3040
        %v3075 = vadd.f32 %v2928, %v3045
        %v3076 = vadd.f32 %v2929, %v3050
        %v3077 = vadd.f32 %v2930, %v3055
        %v3078 = vadd.f32 %v2931, %v3060
        %v3079 = vadd.f32 %v2932, %v3065
        %v3080 = vadd.f32 %v2933, %v3070
        %v3082 = vlaneseq
        %v3083 = vshrl.u32 %v3082, 7
        %v3084 = vsub.s32 0, %v3083
        %v3085 = vrot.slane %v1773, %v3084
        %v3087 = vadd.f32 %v3073, %v3085
        %v3088 = vadd.f32 %v3074, %v3085
        %v3089 = vadd.f32 %v3075, %v3085
        %v3090 = vadd.f32 %v3076, %v3085
        %v3091 = vadd.f32 %v3077, %v3085
        %v3092 = vadd.f32 %v3078, %v3085
        %v3093 = vadd.f32 %v3079, %v3085
        %v3094 = vadd.f32 %v3080, %v3085
        %v3095 = vmax.f32 %v3087, 0.0
        %v3096 = vmax.f32 %v3088, 0.0
        %v3097 = vmax.f32 %v3089, 0.0
        %v3098 = vmax.f32 %v3090, 0.0
        %v3099 = vmax.f32 %v3091, 0.0
        %v3100 = vmax.f32 %v3092, 0.0
        %v3101 = vmax.f32 %v3093, 0.0
        %v3102 = vmax.f32 %v3094, 0.0
        %3103 = vst.msk [vmem:[#allocation4] sm:$0xff] %vm1742, 0.0
        %3104 = vst.msk [vmem:[#allocation4 + $0x8] sm:$0x3] %vm1744, 0.0
        %3105 = vst.msk [vmem:[#allocation4 + $0x10] sm:$0xff] %vm1742, 0.0
        %3106 = vst.msk [vmem:[#allocation4 + $0x18] sm:$0x3] %vm1744, 0.0
        %3107 = vst.msk [vmem:[#allocation4 + $0x20] sm:$0xff] %vm1742, 0.0
        %3108 = vst.msk [vmem:[#allocation4 + $0x28] sm:$0x3] %vm1744, 0.0
        %3109 = vst.msk [vmem:[#allocation4 + $0x30] sm:$0xff] %vm1742, 0.0
        %3110 = vst.msk [vmem:[#allocation4 + $0x38] sm:$0x3] %vm1744, 0.0
        %3111 = vst.msk [vmem:[#allocation4 + $0x40] sm:$0xff] %vm1742, 0.0
        %3112 = vst.msk [vmem:[#allocation4 + $0x48] sm:$0x3] %vm1744, 0.0
        %3113 = vst.msk [vmem:[#allocation4 + $0x50] sm:$0xff] %vm1742, 0.0
        %3114 = vst.msk [vmem:[#allocation4 + $0x58] sm:$0x3] %vm1744, 0.0
        %3115 = vst.msk [vmem:[#allocation4 + $0x60] sm:$0xff] %vm1742, 0.0
        %3116 = vst.msk [vmem:[#allocation4 + $0x68] sm:$0x3] %vm1744, 0.0
        %3117 = vst.msk [vmem:[#allocation4 + $0x70] sm:$0xff] %vm1742, 0.0
        %3118 = vst.msk [vmem:[#allocation4 + $0x78] sm:$0x3] %vm1744, 0.0
        %3119 = vst.msk [vmem:[#allocation4 + $0x80] sm:$0xff] %vm1742, 0.0
        %3120 = vst.msk [vmem:[#allocation4 + $0x88] sm:$0x3] %vm1744, 0.0
        %3121 = vst.msk [vmem:[#allocation4 + $0x90] sm:$0xff] %vm1742, 0.0
        %3122 = vst.msk [vmem:[#allocation4 + $0x98] sm:$0x3] %vm1744, 0.0
        %s3123 = scalar_lea.vmem [#allocation4], 16
        %3124 = vst.msk [vmem:[%s3123 + $0x1] sm:$0xff] %vm1742, %v3095
        %3125 = vst.msk [vmem:[%s3123 + $0x11] sm:$0xff] %vm1742, %v3096
        %3126 = vst.msk [vmem:[%s3123 + $0x21] sm:$0xff] %vm1742, %v3097
        %3127 = vst.msk [vmem:[%s3123 + $0x31] sm:$0xff] %vm1742, %v3098
        %3128 = vst.msk [vmem:[%s3123 + $0x41] sm:$0xff] %vm1742, %v3099
        %3129 = vst.msk [vmem:[%s3123 + $0x51] sm:$0xff] %vm1742, %v3100
        %3130 = vst.msk [vmem:[%s3123 + $0x61] sm:$0xff] %vm1742, %v3101
        %3131 = vst.msk [vmem:[%s3123 + $0x71] sm:$0xff] %vm1742, %v3102
        %v3132 = vld [vmem:[#allocation4] sm:$0xff]
        %v3133 = vld [vmem:[#allocation4 + $0x10] sm:$0xff]
        %v3134 = vld [vmem:[#allocation4 + $0x20] sm:$0xff]
        %v3135 = vld [vmem:[#allocation4 + $0x30] sm:$0xff]
        %v3136 = vld [vmem:[#allocation4 + $0x40] sm:$0xff]
        %v3137 = vld [vmem:[#allocation4 + $0x50] sm:$0xff]
        %v3138 = vld [vmem:[#allocation4 + $0x60] sm:$0xff]
        %v3139 = vld [vmem:[#allocation4 + $0x70] sm:$0xff]
        %v3140 = vld [vmem:[%s5] sm:$0x1]
        %v3141 = vlaneseq
        %v3142 = vshrl.u32 %v3141, 7
        %v3143 = vsub.s32 0, %v3142
        %v3144 = vrot.slane %v3140, %v3143
        %v3145 = vmul.f32 %v3132, %v3144
        %v3146 = vmul.f32 %v3133, %v3144
        %v3147 = vmul.f32 %v3134, %v3144
        %v3148 = vmul.f32 %v3135, %v3144
        %v3149 = vmul.f32 %v3136, %v3144
        %v3150 = vmul.f32 %v3137, %v3144
        %v3151 = vmul.f32 %v3138, %v3144
        %v3152 = vmul.f32 %v3139, %v3144
        %v3153 = vsel %vm1742, %v3145, 0.0
        %3154 = vadd.xlane.f32.xlu0 %v3153
        %v3155 = vpop.xlane.xlu0 %3154
        %v3156 = vsel %vm1742, %v3146, 0.0
        %3157 = vadd.xlane.f32.xlu0 %v3156
        %v3158 = vpop.xlane.xlu0 %3157
        %v3159 = vsel %vm1742, %v3147, 0.0
        %3160 = vadd.xlane.f32.xlu0 %v3159
        %v3161 = vpop.xlane.xlu0 %3160
        %v3162 = vsel %vm1742, %v3148, 0.0
        %3163 = vadd.xlane.f32.xlu0 %v3162
        %v3164 = vpop.xlane.xlu0 %3163
        %v3165 = vsel %vm1742, %v3149, 0.0
        %3166 = vadd.xlane.f32.xlu0 %v3165
        %v3167 = vpop.xlane.xlu0 %3166
        %v3168 = vsel %vm1742, %v3150, 0.0
        %3169 = vadd.xlane.f32.xlu0 %v3168
        %v3170 = vpop.xlane.xlu0 %3169
        %v3171 = vsel %vm1742, %v3151, 0.0
        %3172 = vadd.xlane.f32.xlu0 %v3171
        %v3173 = vpop.xlane.xlu0 %3172
        %v3174 = vsel %vm1742, %v3152, 0.0
        %3175 = vadd.xlane.f32.xlu0 %v3174
        %v3176 = vpop.xlane.xlu0 %3175
        %v3177 = vadd.f32 %v3155, 0.0
        %v3178 = vadd.f32 %v3158, 0.0
        %v3179 = vadd.f32 %v3161, 0.0
        %v3180 = vadd.f32 %v3164, 0.0
        %v3181 = vadd.f32 %v3167, 0.0
        %v3182 = vadd.f32 %v3170, 0.0
        %v3183 = vadd.f32 %v3173, 0.0
        %v3184 = vadd.f32 %v3176, 0.0
        %v3185 = vld [vmem:[#allocation4 + $0x1] sm:$0xff]
        %v3186 = vld [vmem:[#allocation4 + $0x11] sm:$0xff]
        %v3187 = vld [vmem:[#allocation4 + $0x21] sm:$0xff]
        %v3188 = vld [vmem:[#allocation4 + $0x31] sm:$0xff]
        %v3189 = vld [vmem:[#allocation4 + $0x41] sm:$0xff]
        %v3190 = vld [vmem:[#allocation4 + $0x51] sm:$0xff]
        %v3191 = vld [vmem:[#allocation4 + $0x61] sm:$0xff]
        %v3192 = vld [vmem:[#allocation4 + $0x71] sm:$0xff]
        %v3193 = vld [vmem:[%s5 + $0x1] sm:$0x1]
        %v3194 = vlaneseq
        %v3195 = vshrl.u32 %v3194, 7
        %v3196 = vsub.s32 0, %v3195
        %v3197 = vrot.slane %v3193, %v3196
        %v3198 = vmul.f32 %v3185, %v3197
        %v3199 = vmul.f32 %v3186, %v3197
        %v3200 = vmul.f32 %v3187, %v3197
        %v3201 = vmul.f32 %v3188, %v3197
        %v3202 = vmul.f32 %v3189, %v3197
        %v3203 = vmul.f32 %v3190, %v3197
        %v3204 = vmul.f32 %v3191, %v3197
        %v3205 = vmul.f32 %v3192, %v3197
        %v3206 = vsel %vm1742, %v3198, 0.0
        %3207 = vadd.xlane.f32.xlu0 %v3206
        %v3208 = vpop.xlane.xlu0 %3207
        %v3209 = vsel %vm1742, %v3199, 0.0
        %3210 = vadd.xlane.f32.xlu0 %v3209
        %v3211 = vpop.xlane.xlu0 %3210
        %v3212 = vsel %vm1742, %v3200, 0.0
        %3213 = vadd.xlane.f32.xlu0 %v3212
        %v3214 = vpop.xlane.xlu0 %3213
        %v3215 = vsel %vm1742, %v3201, 0.0
        %3216 = vadd.xlane.f32.xlu0 %v3215
        %v3217 = vpop.xlane.xlu0 %3216
        %v3218 = vsel %vm1742, %v3202, 0.0
        %3219 = vadd.xlane.f32.xlu0 %v3218
        %v3220 = vpop.xlane.xlu0 %3219
        %v3221 = vsel %vm1742, %v3203, 0.0
        %3222 = vadd.xlane.f32.xlu0 %v3221
        %v3223 = vpop.xlane.xlu0 %3222
        %v3224 = vsel %vm1742, %v3204, 0.0
        %3225 = vadd.xlane.f32.xlu0 %v3224
        %v3226 = vpop.xlane.xlu0 %3225
        %v3227 = vsel %vm1742, %v3205, 0.0
        %3228 = vadd.xlane.f32.xlu0 %v3227
        %v3229 = vpop.xlane.xlu0 %3228
        %v3230 = vadd.f32 %v3177, %v3208
        %v3231 = vadd.f32 %v3178, %v3211
        %v3232 = vadd.f32 %v3179, %v3214
        %v3233 = vadd.f32 %v3180, %v3217
        %v3234 = vadd.f32 %v3181, %v3220
        %v3235 = vadd.f32 %v3182, %v3223
        %v3236 = vadd.f32 %v3183, %v3226
        %v3237 = vadd.f32 %v3184, %v3229
        %v3238 = vld [vmem:[#allocation4 + $0x2] sm:$0xff]
        %v3239 = vld [vmem:[#allocation4 + $0x12] sm:$0xff]
        %v3240 = vld [vmem:[#allocation4 + $0x22] sm:$0xff]
        %v3241 = vld [vmem:[#allocation4 + $0x32] sm:$0xff]
        %v3242 = vld [vmem:[#allocation4 + $0x42] sm:$0xff]
        %v3243 = vld [vmem:[#allocation4 + $0x52] sm:$0xff]
        %v3244 = vld [vmem:[#allocation4 + $0x62] sm:$0xff]
        %v3245 = vld [vmem:[#allocation4 + $0x72] sm:$0xff]
        %v3246 = vld [vmem:[%s5 + $0x2] sm:$0x1]
        %v3247 = vlaneseq
        %v3248 = vshrl.u32 %v3247, 7
        %v3249 = vsub.s32 0, %v3248
        %v3250 = vrot.slane %v3246, %v3249
        %v3251 = vmul.f32 %v3238, %v3250
        %v3252 = vmul.f32 %v3239, %v3250
        %v3253 = vmul.f32 %v3240, %v3250
        %v3254 = vmul.f32 %v3241, %v3250
        %v3255 = vmul.f32 %v3242, %v3250
        %v3256 = vmul.f32 %v3243, %v3250
        %v3257 = vmul.f32 %v3244, %v3250
        %v3258 = vmul.f32 %v3245, %v3250
        %v3259 = vsel %vm1742, %v3251, 0.0
        %3260 = vadd.xlane.f32.xlu0 %v3259
        %v3261 = vpop.xlane.xlu0 %3260
        %v3262 = vsel %vm1742, %v3252, 0.0
        %3263 = vadd.xlane.f32.xlu0 %v3262
        %v3264 = vpop.xlane.xlu0 %3263
        %v3265 = vsel %vm1742, %v3253, 0.0
        %3266 = vadd.xlane.f32.xlu0 %v3265
        %v3267 = vpop.xlane.xlu0 %3266
        %v3268 = vsel %vm1742, %v3254, 0.0
        %3269 = vadd.xlane.f32.xlu0 %v3268
        %v3270 = vpop.xlane.xlu0 %3269
        %v3271 = vsel %vm1742, %v3255, 0.0
        %3272 = vadd.xlane.f32.xlu0 %v3271
        %v3273 = vpop.xlane.xlu0 %3272
        %v3274 = vsel %vm1742, %v3256, 0.0
        %3275 = vadd.xlane.f32.xlu0 %v3274
        %v3276 = vpop.xlane.xlu0 %3275
        %v3277 = vsel %vm1742, %v3257, 0.0
        %3278 = vadd.xlane.f32.xlu0 %v3277
        %v3279 = vpop.xlane.xlu0 %3278
        %v3280 = vsel %vm1742, %v3258, 0.0
        %3281 = vadd.xlane.f32.xlu0 %v3280
        %v3282 = vpop.xlane.xlu0 %3281
        %v3283 = vadd.f32 %v3230, %v3261
        %v3284 = vadd.f32 %v3231, %v3264
        %v3285 = vadd.f32 %v3232, %v3267
        %v3286 = vadd.f32 %v3233, %v3270
        %v3287 = vadd.f32 %v3234, %v3273
        %v3288 = vadd.f32 %v3235, %v3276
        %v3289 = vadd.f32 %v3236, %v3279
        %v3290 = vadd.f32 %v3237, %v3282
        %v3291 = vld [vmem:[%s3123] sm:$0xff]
        %v3292 = vld [vmem:[%s3123 + $0x10] sm:$0xff]
        %v3293 = vld [vmem:[%s3123 + $0x20] sm:$0xff]
        %v3294 = vld [vmem:[%s3123 + $0x30] sm:$0xff]
        %v3295 = vld [vmem:[%s3123 + $0x40] sm:$0xff]
        %v3296 = vld [vmem:[%s3123 + $0x50] sm:$0xff]
        %v3297 = vld [vmem:[%s3123 + $0x60] sm:$0xff]
        %v3298 = vld [vmem:[%s3123 + $0x70] sm:$0xff]
        %v3299 = vld [vmem:[%s5 + $0x3] sm:$0x1]
        %v3300 = vlaneseq
        %v3301 = vshrl.u32 %v3300, 7
        %v3302 = vsub.s32 0, %v3301
        %v3303 = vrot.slane %v3299, %v3302
        %v3304 = vmul.f32 %v3291, %v3303
        %v3305 = vmul.f32 %v3292, %v3303
        %v3306 = vmul.f32 %v3293, %v3303
        %v3307 = vmul.f32 %v3294, %v3303
        %v3308 = vmul.f32 %v3295, %v3303
        %v3309 = vmul.f32 %v3296, %v3303
        %v3310 = vmul.f32 %v3297, %v3303
        %v3311 = vmul.f32 %v3298, %v3303
        %v3312 = vsel %vm1742, %v3304, 0.0
        %3313 = vadd.xlane.f32.xlu0 %v3312
        %v3314 = vpop.xlane.xlu0 %3313
        %v3315 = vsel %vm1742, %v3305, 0.0
        %3316 = vadd.xlane.f32.xlu0 %v3315
        %v3317 = vpop.xlane.xlu0 %3316
        %v3318 = vsel %vm1742, %v3306, 0.0
        %3319 = vadd.xlane.f32.xlu0 %v3318
        %v3320 = vpop.xlane.xlu0 %3319
        %v3321 = vsel %vm1742, %v3307, 0.0
        %3322 = vadd.xlane.f32.xlu0 %v3321
        %v3323 = vpop.xlane.xlu0 %3322
        %v3324 = vsel %vm1742, %v3308, 0.0
        %3325 = vadd.xlane.f32.xlu0 %v3324
        %v3326 = vpop.xlane.xlu0 %3325
        %v3327 = vsel %vm1742, %v3309, 0.0
        %3328 = vadd.xlane.f32.xlu0 %v3327
        %v3329 = vpop.xlane.xlu0 %3328
        %v3330 = vsel %vm1742, %v3310, 0.0
        %3331 = vadd.xlane.f32.xlu0 %v3330
        %v3332 = vpop.xlane.xlu0 %3331
        %v3333 = vsel %vm1742, %v3311, 0.0
        %3334 = vadd.xlane.f32.xlu0 %v3333
        %v3335 = vpop.xlane.xlu0 %3334
        %v3336 = vadd.f32 %v3283, %v3314
        %v3337 = vadd.f32 %v3284, %v3317
        %v3338 = vadd.f32 %v3285, %v3320
        %v3339 = vadd.f32 %v3286, %v3323
        %v3340 = vadd.f32 %v3287, %v3326
        %v3341 = vadd.f32 %v3288, %v3329
        %v3342 = vadd.f32 %v3289, %v3332
        %v3343 = vadd.f32 %v3290, %v3335
        %v3344 = vld [vmem:[%s3123 + $0x1] sm:$0xff]
        %v3345 = vld [vmem:[%s3123 + $0x11] sm:$0xff]
        %v3346 = vld [vmem:[%s3123 + $0x21] sm:$0xff]
        %v3347 = vld [vmem:[%s3123 + $0x31] sm:$0xff]
        %v3348 = vld [vmem:[%s3123 + $0x41] sm:$0xff]
        %v3349 = vld [vmem:[%s3123 + $0x51] sm:$0xff]
        %v3350 = vld [vmem:[%s3123 + $0x61] sm:$0xff]
        %v3351 = vld [vmem:[%s3123 + $0x71] sm:$0xff]
        %v3352 = vld [vmem:[%s5 + $0x4] sm:$0x1]
        %v3353 = vlaneseq
        %v3354 = vshrl.u32 %v3353, 7
        %v3355 = vsub.s32 0, %v3354
        %v3356 = vrot.slane %v3352, %v3355
        %v3357 = vmul.f32 %v3344, %v3356
        %v3358 = vmul.f32 %v3345, %v3356
        %v3359 = vmul.f32 %v3346, %v3356
        %v3360 = vmul.f32 %v3347, %v3356
        %v3361 = vmul.f32 %v3348, %v3356
        %v3362 = vmul.f32 %v3349, %v3356
        %v3363 = vmul.f32 %v3350, %v3356
        %v3364 = vmul.f32 %v3351, %v3356
        %v3365 = vsel %vm1742, %v3357, 0.0
        %3366 = vadd.xlane.f32.xlu0 %v3365
        %v3367 = vpop.xlane.xlu0 %3366
        %v3368 = vsel %vm1742, %v3358, 0.0
        %3369 = vadd.xlane.f32.xlu0 %v3368
        %v3370 = vpop.xlane.xlu0 %3369
        %v3371 = vsel %vm1742, %v3359, 0.0
        %3372 = vadd.xlane.f32.xlu0 %v3371
        %v3373 = vpop.xlane.xlu0 %3372
        %v3374 = vsel %vm1742, %v3360, 0.0
        %3375 = vadd.xlane.f32.xlu0 %v3374
        %v3376 = vpop.xlane.xlu0 %3375
        %v3377 = vsel %vm1742, %v3361, 0.0
        %3378 = vadd.xlane.f32.xlu0 %v3377
        %v3379 = vpop.xlane.xlu0 %3378
        %v3380 = vsel %vm1742, %v3362, 0.0
        %3381 = vadd.xlane.f32.xlu0 %v3380
        %v3382 = vpop.xlane.xlu0 %3381
        %v3383 = vsel %vm1742, %v3363, 0.0
        %3384 = vadd.xlane.f32.xlu0 %v3383
        %v3385 = vpop.xlane.xlu0 %3384
        %v3386 = vsel %vm1742, %v3364, 0.0
        %3387 = vadd.xlane.f32.xlu0 %v3386
        %v3388 = vpop.xlane.xlu0 %3387
        %v3389 = vadd.f32 %v3336, %v3367
        %v3390 = vadd.f32 %v3337, %v3370
        %v3391 = vadd.f32 %v3338, %v3373
        %v3392 = vadd.f32 %v3339, %v3376
        %v3393 = vadd.f32 %v3340, %v3379
        %v3394 = vadd.f32 %v3341, %v3382
        %v3395 = vadd.f32 %v3342, %v3385
        %v3396 = vadd.f32 %v3343, %v3388
        %v3397 = vld [vmem:[%s3123 + $0x2] sm:$0xff]
        %v3398 = vld [vmem:[%s3123 + $0x12] sm:$0xff]
        %v3399 = vld [vmem:[%s3123 + $0x22] sm:$0xff]
        %v3400 = vld [vmem:[%s3123 + $0x32] sm:$0xff]
        %v3401 = vld [vmem:[%s3123 + $0x42] sm:$0xff]
        %v3402 = vld [vmem:[%s3123 + $0x52] sm:$0xff]
        %v3403 = vld [vmem:[%s3123 + $0x62] sm:$0xff]
        %v3404 = vld [vmem:[%s3123 + $0x72] sm:$0xff]
        %v3405 = vld [vmem:[%s5 + $0x5] sm:$0x1]
        %v3406 = vlaneseq
        %v3407 = vshrl.u32 %v3406, 7
        %v3408 = vsub.s32 0, %v3407
        %v3409 = vrot.slane %v3405, %v3408
        %v3410 = vmul.f32 %v3397, %v3409
        %v3411 = vmul.f32 %v3398, %v3409
        %v3412 = vmul.f32 %v3399, %v3409
        %v3413 = vmul.f32 %v3400, %v3409
        %v3414 = vmul.f32 %v3401, %v3409
        %v3415 = vmul.f32 %v3402, %v3409
        %v3416 = vmul.f32 %v3403, %v3409
        %v3417 = vmul.f32 %v3404, %v3409
        %v3418 = vsel %vm1742, %v3410, 0.0
        %3419 = vadd.xlane.f32.xlu0 %v3418
        %v3420 = vpop.xlane.xlu0 %3419
        %v3421 = vsel %vm1742, %v3411, 0.0
        %3422 = vadd.xlane.f32.xlu0 %v3421
        %v3423 = vpop.xlane.xlu0 %3422
        %v3424 = vsel %vm1742, %v3412, 0.0
        %3425 = vadd.xlane.f32.xlu0 %v3424
        %v3426 = vpop.xlane.xlu0 %3425
        %v3427 = vsel %vm1742, %v3413, 0.0
        %3428 = vadd.xlane.f32.xlu0 %v3427
        %v3429 = vpop.xlane.xlu0 %3428
        %v3430 = vsel %vm1742, %v3414, 0.0
        %3431 = vadd.xlane.f32.xlu0 %v3430
        %v3432 = vpop.xlane.xlu0 %3431
        %v3433 = vsel %vm1742, %v3415, 0.0
        %3434 = vadd.xlane.f32.xlu0 %v3433
        %v3435 = vpop.xlane.xlu0 %3434
        %v3436 = vsel %vm1742, %v3416, 0.0
        %3437 = vadd.xlane.f32.xlu0 %v3436
        %v3438 = vpop.xlane.xlu0 %3437
        %v3439 = vsel %vm1742, %v3417, 0.0
        %3440 = vadd.xlane.f32.xlu0 %v3439
        %v3441 = vpop.xlane.xlu0 %3440
        %v3442 = vadd.f32 %v3389, %v3420
        %v3443 = vadd.f32 %v3390, %v3423
        %v3444 = vadd.f32 %v3391, %v3426
        %v3445 = vadd.f32 %v3392, %v3429
        %v3446 = vadd.f32 %v3393, %v3432
        %v3447 = vadd.f32 %v3394, %v3435
        %v3448 = vadd.f32 %v3395, %v3438
        %v3449 = vadd.f32 %v3396, %v3441
        %s3450 = scalar_lea.vmem [#allocation4], 32
        %v3451 = vld [vmem:[%s3450] sm:$0xff]
        %v3452 = vld [vmem:[%s3450 + $0x10] sm:$0xff]
        %v3453 = vld [vmem:[%s3450 + $0x20] sm:$0xff]
        %v3454 = vld [vmem:[%s3450 + $0x30] sm:$0xff]
        %v3455 = vld [vmem:[%s3450 + $0x40] sm:$0xff]
        %v3456 = vld [vmem:[%s3450 + $0x50] sm:$0xff]
        %v3457 = vld [vmem:[%s3450 + $0x60] sm:$0xff]
        %v3458 = vld [vmem:[%s3450 + $0x70] sm:$0xff]
        %v3459 = vld [vmem:[%s5 + $0x6] sm:$0x1]
        %v3460 = vlaneseq
        %v3461 = vshrl.u32 %v3460, 7
        %v3462 = vsub.s32 0, %v3461
        %v3463 = vrot.slane %v3459, %v3462
        %v3464 = vmul.f32 %v3451, %v3463
        %v3465 = vmul.f32 %v3452, %v3463
        %v3466 = vmul.f32 %v3453, %v3463
        %v3467 = vmul.f32 %v3454, %v3463
        %v3468 = vmul.f32 %v3455, %v3463
        %v3469 = vmul.f32 %v3456, %v3463
        %v3470 = vmul.f32 %v3457, %v3463
        %v3471 = vmul.f32 %v3458, %v3463
        %v3472 = vsel %vm1742, %v3464, 0.0
        %3473 = vadd.xlane.f32.xlu0 %v3472
        %v3474 = vpop.xlane.xlu0 %3473
        %v3475 = vsel %vm1742, %v3465, 0.0
        %3476 = vadd.xlane.f32.xlu0 %v3475
        %v3477 = vpop.xlane.xlu0 %3476
        %v3478 = vsel %vm1742, %v3466, 0.0
        %3479 = vadd.xlane.f32.xlu0 %v3478
        %v3480 = vpop.xlane.xlu0 %3479
        %v3481 = vsel %vm1742, %v3467, 0.0
        %3482 = vadd.xlane.f32.xlu0 %v3481
        %v3483 = vpop.xlane.xlu0 %3482
        %v3484 = vsel %vm1742, %v3468, 0.0
        %3485 = vadd.xlane.f32.xlu0 %v3484
        %v3486 = vpop.xlane.xlu0 %3485
        %v3487 = vsel %vm1742, %v3469, 0.0
        %3488 = vadd.xlane.f32.xlu0 %v3487
        %v3489 = vpop.xlane.xlu0 %3488
        %v3490 = vsel %vm1742, %v3470, 0.0
        %3491 = vadd.xlane.f32.xlu0 %v3490
        %v3492 = vpop.xlane.xlu0 %3491
        %v3493 = vsel %vm1742, %v3471, 0.0
        %3494 = vadd.xlane.f32.xlu0 %v3493
        %v3495 = vpop.xlane.xlu0 %3494
        %v3496 = vadd.f32 %v3442, %v3474
        %v3497 = vadd.f32 %v3443, %v3477
        %v3498 = vadd.f32 %v3444, %v3480
        %v3499 = vadd.f32 %v3445, %v3483
        %v3500 = vadd.f32 %v3446, %v3486
        %v3501 = vadd.f32 %v3447, %v3489
        %v3502 = vadd.f32 %v3448, %v3492
        %v3503 = vadd.f32 %v3449, %v3495
        %v3504 = vld [vmem:[%s3450 + $0x1] sm:$0xff]
        %v3505 = vld [vmem:[%s3450 + $0x11] sm:$0xff]
        %v3506 = vld [vmem:[%s3450 + $0x21] sm:$0xff]
        %v3507 = vld [vmem:[%s3450 + $0x31] sm:$0xff]
        %v3508 = vld [vmem:[%s3450 + $0x41] sm:$0xff]
        %v3509 = vld [vmem:[%s3450 + $0x51] sm:$0xff]
        %v3510 = vld [vmem:[%s3450 + $0x61] sm:$0xff]
        %v3511 = vld [vmem:[%s3450 + $0x71] sm:$0xff]
        %v3512 = vld [vmem:[%s5 + $0x7] sm:$0x1]
        %v3513 = vlaneseq
        %v3514 = vshrl.u32 %v3513, 7
        %v3515 = vsub.s32 0, %v3514
        %v3516 = vrot.slane %v3512, %v3515
        %v3517 = vmul.f32 %v3504, %v3516
        %v3518 = vmul.f32 %v3505, %v3516
        %v3519 = vmul.f32 %v3506, %v3516
        %v3520 = vmul.f32 %v3507, %v3516
        %v3521 = vmul.f32 %v3508, %v3516
        %v3522 = vmul.f32 %v3509, %v3516
        %v3523 = vmul.f32 %v3510, %v3516
        %v3524 = vmul.f32 %v3511, %v3516
        %v3525 = vsel %vm1742, %v3517, 0.0
        %3526 = vadd.xlane.f32.xlu0 %v3525
        %v3527 = vpop.xlane.xlu0 %3526
        %v3528 = vsel %vm1742, %v3518, 0.0
        %3529 = vadd.xlane.f32.xlu0 %v3528
        %v3530 = vpop.xlane.xlu0 %3529
        %v3531 = vsel %vm1742, %v3519, 0.0
        %3532 = vadd.xlane.f32.xlu0 %v3531
        %v3533 = vpop.xlane.xlu0 %3532
        %v3534 = vsel %vm1742, %v3520, 0.0
        %3535 = vadd.xlane.f32.xlu0 %v3534
        %v3536 = vpop.xlane.xlu0 %3535
        %v3537 = vsel %vm1742, %v3521, 0.0
        %3538 = vadd.xlane.f32.xlu0 %v3537
        %v3539 = vpop.xlane.xlu0 %3538
        %v3540 = vsel %vm1742, %v3522, 0.0
        %3541 = vadd.xlane.f32.xlu0 %v3540
        %v3542 = vpop.xlane.xlu0 %3541
        %v3543 = vsel %vm1742, %v3523, 0.0
        %3544 = vadd.xlane.f32.xlu0 %v3543
        %v3545 = vpop.xlane.xlu0 %3544
        %v3546 = vsel %vm1742, %v3524, 0.0
        %3547 = vadd.xlane.f32.xlu0 %v3546
        %v3548 = vpop.xlane.xlu0 %3547
        %v3549 = vadd.f32 %v3496, %v3527
        %v3550 = vadd.f32 %v3497, %v3530
        %v3551 = vadd.f32 %v3498, %v3533
        %v3552 = vadd.f32 %v3499, %v3536
        %v3553 = vadd.f32 %v3500, %v3539
        %v3554 = vadd.f32 %v3501, %v3542
        %v3555 = vadd.f32 %v3502, %v3545
        %v3556 = vadd.f32 %v3503, %v3548
        %v3557 = vld [vmem:[%s3450 + $0x2] sm:$0xff]
        %v3558 = vld [vmem:[%s3450 + $0x12] sm:$0xff]
        %v3559 = vld [vmem:[%s3450 + $0x22] sm:$0xff]
        %v3560 = vld [vmem:[%s3450 + $0x32] sm:$0xff]
        %v3561 = vld [vmem:[%s3450 + $0x42] sm:$0xff]
        %v3562 = vld [vmem:[%s3450 + $0x52] sm:$0xff]
        %v3563 = vld [vmem:[%s3450 + $0x62] sm:$0xff]
        %v3564 = vld [vmem:[%s3450 + $0x72] sm:$0xff]
        %v3565 = vld [vmem:[%s5 + $0x8] sm:$0x1]
        %v3566 = vlaneseq
        %v3567 = vshrl.u32 %v3566, 7
        %v3568 = vsub.s32 0, %v3567
        %v3569 = vrot.slane %v3565, %v3568
        %v3570 = vmul.f32 %v3557, %v3569
        %v3571 = vmul.f32 %v3558, %v3569
        %v3572 = vmul.f32 %v3559, %v3569
        %v3573 = vmul.f32 %v3560, %v3569
        %v3574 = vmul.f32 %v3561, %v3569
        %v3575 = vmul.f32 %v3562, %v3569
        %v3576 = vmul.f32 %v3563, %v3569
        %v3577 = vmul.f32 %v3564, %v3569
        %v3578 = vsel %vm1742, %v3570, 0.0
        %3579 = vadd.xlane.f32.xlu0 %v3578
        %v3580 = vpop.xlane.xlu0 %3579
        %v3581 = vsel %vm1742, %v3571, 0.0
        %3582 = vadd.xlane.f32.xlu0 %v3581
        %v3583 = vpop.xlane.xlu0 %3582
        %v3584 = vsel %vm1742, %v3572, 0.0
        %3585 = vadd.xlane.f32.xlu0 %v3584
        %v3586 = vpop.xlane.xlu0 %3585
        %v3587 = vsel %vm1742, %v3573, 0.0
        %3588 = vadd.xlane.f32.xlu0 %v3587
        %v3589 = vpop.xlane.xlu0 %3588
        %v3590 = vsel %vm1742, %v3574, 0.0
        %3591 = vadd.xlane.f32.xlu0 %v3590
        %v3592 = vpop.xlane.xlu0 %3591
        %v3593 = vsel %vm1742, %v3575, 0.0
        %3594 = vadd.xlane.f32.xlu0 %v3593
        %v3595 = vpop.xlane.xlu0 %3594
        %v3596 = vsel %vm1742, %v3576, 0.0
        %3597 = vadd.xlane.f32.xlu0 %v3596
        %v3598 = vpop.xlane.xlu0 %3597
        %v3599 = vsel %vm1742, %v3577, 0.0
        %3600 = vadd.xlane.f32.xlu0 %v3599
        %v3601 = vpop.xlane.xlu0 %3600
        %v3602 = vadd.f32 %v3549, %v3580
        %v3603 = vadd.f32 %v3550, %v3583
        %v3604 = vadd.f32 %v3551, %v3586
        %v3605 = vadd.f32 %v3552, %v3589
        %v3606 = vadd.f32 %v3553, %v3592
        %v3607 = vadd.f32 %v3554, %v3595
        %v3608 = vadd.f32 %v3555, %v3598
        %v3609 = vadd.f32 %v3556, %v3601
        %s3610 = sld [smem:[#allocation5]]
        %v3611 = vstv %s3610
        %v3612 = vadd.f32 %v3602, %v3611
        %v3613 = vadd.f32 %v3603, %v3611
        %v3614 = vadd.f32 %v3604, %v3611
        %v3615 = vadd.f32 %v3605, %v3611
        %v3616 = vadd.f32 %v3606, %v3611
        %v3617 = vadd.f32 %v3607, %v3611
        %v3618 = vadd.f32 %v3608, %v3611
        %v3619 = vadd.f32 %v3609, %v3611
        %v3620 = vld [vmem:[%s6] sm:$0xff]
        %v3621 = vld [vmem:[%s6 + $0x8] sm:$0xff]
        %v3622 = vld [vmem:[%s6 + $0x10] sm:$0xff]
        %v3623 = vld [vmem:[%s6 + $0x18] sm:$0xff]
        %v3624 = vld [vmem:[%s6 + $0x20] sm:$0xff]
        %v3625 = vld [vmem:[%s6 + $0x28] sm:$0xff]
        %v3626 = vld [vmem:[%s6 + $0x30] sm:$0xff]
        %v3627 = vld [vmem:[%s6 + $0x38] sm:$0xff]
        %v3628 = vld [vmem:[%s6 + $0x40] sm:$0xff]
        %v3629 = vld [vmem:[%s6 + $0x48] sm:$0xff]
        %v3630 = vld [vmem:[%s6 + $0x50] sm:$0xff]
        %v3631 = vld [vmem:[%s6 + $0x58] sm:$0xff]
        %v3632 = vld [vmem:[%s6 + $0x60] sm:$0xff]
        %v3633 = vld [vmem:[%s6 + $0x68] sm:$0xff]
        %v3634 = vld [vmem:[%s6 + $0x70] sm:$0xff]
        %v3635 = vld [vmem:[%s6 + $0x78] sm:$0xff]
        %v3644 = vlaneseq
        %v3645 = vand.u32 %v3644, 127
        %v3646 = vlaneseq
        %v3647 = vshrl.u32 %v3646, 7
        %v3648 = vsub.s32 %v3645, %v3647
        %v3649 = vrot.slane %v3612, %v3648
        %v3650 = vlaneseq
        %v3651 = vshrl.u32 %v3650, 7
        %v3652 = vsub.s32 %v3645, %v3651
        %v3653 = vrot.slane %v3613, %v3652
        %v3654 = vlaneseq
        %v3655 = vshrl.u32 %v3654, 7
        %v3656 = vsub.s32 %v3645, %v3655
        %v3657 = vrot.slane %v3614, %v3656
        %v3658 = vlaneseq
        %v3659 = vshrl.u32 %v3658, 7
        %v3660 = vsub.s32 %v3645, %v3659
        %v3661 = vrot.slane %v3615, %v3660
        %v3662 = vlaneseq
        %v3663 = vshrl.u32 %v3662, 7
        %v3664 = vsub.s32 %v3645, %v3663
        %v3665 = vrot.slane %v3616, %v3664
        %v3666 = vlaneseq
        %v3667 = vshrl.u32 %v3666, 7
        %v3668 = vsub.s32 %v3645, %v3667
        %v3669 = vrot.slane %v3617, %v3668
        %v3670 = vlaneseq
        %v3671 = vshrl.u32 %v3670, 7
        %v3672 = vsub.s32 %v3645, %v3671
        %v3673 = vrot.slane %v3618, %v3672
        %v3674 = vlaneseq
        %v3675 = vshrl.u32 %v3674, 7
        %v3676 = vsub.s32 %v3645, %v3675
        %v3677 = vrot.slane %v3619, %v3676
        %vm3678 = vcmask 1041409
        %v3679 = vsel %vm3678, %v3653, %v3649
        %vm3680 = vcmask 1042434
        %v3681 = vsel %vm3680, %v3657, %v3679
        %vm3682 = vcmask 1043459
        %v3683 = vsel %vm3682, %v3661, %v3681
        %vm3684 = vcmask 1044484
        %v3685 = vsel %vm3684, %v3665, %v3683
        %vm3686 = vcmask 1045509
        %v3687 = vsel %vm3686, %v3669, %v3685
        %vm3688 = vcmask 1046534
        %v3689 = vsel %vm3688, %v3673, %v3687
        %vm3690 = vcmask 1047559
        %v3691 = vsel %vm3690, %v3677, %v3689
        %v3694 = vsel %vm1742, %v3620, 0
        %v3697 = vsel %vm1742, %v3621, 0
        %v3700 = vsel %vm1742, %v3622, 0
        %v3703 = vsel %vm1742, %v3623, 0
        %v3706 = vsel %vm1742, %v3624, 0
        %v3709 = vsel %vm1742, %v3625, 0
        %v3712 = vsel %vm1742, %v3626, 0
        %v3715 = vsel %vm1742, %v3627, 0
        %v3718 = vsel %vm1742, %v3628, 0
        %v3721 = vsel %vm1742, %v3629, 0
        %v3724 = vsel %vm1742, %v3630, 0
        %v3727 = vsel %vm1742, %v3631, 0
        %v3730 = vsel %vm1742, %v3632, 0
        %v3733 = vsel %vm1742, %v3633, 0
        %v3736 = vsel %vm1742, %v3634, 0
        %v3739 = vsel %vm1742, %v3635, 0
        %3741 = vmatprep.subr.mxu0 0.0
        %3742 = vmatpush1.msra.mxu0 0.0
        %3743 = vmatprep.subr.mxu0 0.0
        %3744 = vmatpush1.msra.mxu0 0.0
        %3745 = vmatprep.subr.mxu0 0.0
        %3746 = vmatpush1.msra.mxu0 0.0
        %3747 = vmatprep.subr.mxu0 0.0
        %3748 = vmatpush1.msra.mxu0 0.0
        %3749 = vmatprep.subr.mxu0 0.0
        %3750 = vmatpush1.msra.mxu0 0.0
        %3751 = vmatprep.subr.mxu0 0.0
        %3752 = vmatpush1.msra.mxu0 0.0
        %3753 = vmatprep.subr.mxu0 0.0
        %3754 = vmatpush1.msra.mxu0 0.0
        %3755 = vmatprep.subr.mxu0 0.0
        %3756 = vmatpush1.msra.mxu0 0.0
        %3757 = vmatprep.subr.mxu0 0.0
        %3758 = vmatpush1.msra.mxu0 0.0
        %3759 = vmatprep.subr.mxu0 0.0
        %3760 = vmatpush1.msra.mxu0 0.0
        %3761 = vmatprep.subr.mxu0 0.0
        %3762 = vmatpush1.msra.mxu0 0.0
        %3763 = vmatprep.subr.mxu0 0.0
        %3764 = vmatpush1.msra.mxu0 0.0
        %3765 = vmatprep.subr.mxu0 0.0
        %3766 = vmatpush1.msra.mxu0 0.0
        %3767 = vmatprep.subr.mxu0 0.0
        %3768 = vmatpush1.msra.mxu0 0.0
        %3769 = vmatprep.subr.mxu0 0.0
        %3770 = vmatpush1.msra.mxu0 0.0
        %3771 = vmatprep.subr.mxu0 0.0
        %3772 = vmatpush1.msra.mxu0 %v3691
        %3773 = vmatprep.subr.mxu0 0.0
        %3774 = vmatpush2.msra.mxu0 0.0
        %3775 = vmatprep.subr.mxu0 0.0
        %3776 = vmatpush2.msra.mxu0 0.0
        %3777 = vmatprep.subr.mxu0 0.0
        %3778 = vmatpush2.msra.mxu0 0.0
        %3779 = vmatprep.subr.mxu0 0.0
        %3780 = vmatpush2.msra.mxu0 0.0
        %3781 = vmatprep.subr.mxu0 0.0
        %3782 = vmatpush2.msra.mxu0 0.0
        %3783 = vmatprep.subr.mxu0 0.0
        %3784 = vmatpush2.msra.mxu0 0.0
        %3785 = vmatprep.subr.mxu0 0.0
        %3786 = vmatpush2.msra.mxu0 0.0
        %3787 = vmatprep.subr.mxu0 0.0
        %3788 = vmatpush2.msra.mxu0 0.0
        %3789 = vmatprep.subr.mxu0 0.0
        %3790 = vmatpush2.msra.mxu0 0.0
        %3791 = vmatprep.subr.mxu0 0.0
        %3792 = vmatpush2.msra.mxu0 0.0
        %3793 = vmatprep.subr.mxu0 0.0
        %3794 = vmatpush2.msra.mxu0 0.0
        %3795 = vmatprep.subr.mxu0 0.0
        %3796 = vmatpush2.msra.mxu0 0.0
        %3797 = vmatprep.subr.mxu0 0.0
        %3798 = vmatpush2.msra.mxu0 0.0
        %3799 = vmatprep.subr.mxu0 0.0
        %3800 = vmatpush2.msra.mxu0 0.0
        %3801 = vmatprep.subr.mxu0 0.0
        %3802 = vmatpush2.msra.mxu0 0.0
        %3803 = vmatprep.subr.mxu0 0.0
        %3804 = vmatpush2.msra.mxu0 0.0
        %3805 = vmatprep.mubr.f32.mxu0 0.0
        %3806 = vmatmul.mubr.f32.gmra.mxu0 %v3694
        %v3807 = vpop.f32.mrf.mxu0
        %v3808 = vadd.f32 0.0, %v3807
        %v3809 = vpop.f32.mrf.mxu0
        %3810 = vmatprep.mubr.f32.mxu0 0.0
        %3811 = vmatmul.mubr.f32.gmra.mxu0 %v3697
        %v3812 = vpop.f32.mrf.mxu0
        %v3813 = vadd.f32 0.0, %v3812
        %v3814 = vpop.f32.mrf.mxu0
        %3815 = vmatprep.mubr.f32.mxu0 0.0
        %3816 = vmatmul.mubr.f32.gmra.mxu0 %v3700
        %v3817 = vpop.f32.mrf.mxu0
        %v3818 = vadd.f32 0.0, %v3817
        %v3819 = vpop.f32.mrf.mxu0
        %3820 = vmatprep.mubr.f32.mxu0 0.0
        %3821 = vmatmul.mubr.f32.gmra.mxu0 %v3703
        %v3822 = vpop.f32.mrf.mxu0
        %v3823 = vadd.f32 0.0, %v3822
        %v3824 = vpop.f32.mrf.mxu0
        %3825 = vmatprep.mubr.f32.mxu0 0.0
        %3826 = vmatmul.mubr.f32.gmra.mxu0 %v3706
        %v3827 = vpop.f32.mrf.mxu0
        %v3828 = vadd.f32 0.0, %v3827
        %v3829 = vpop.f32.mrf.mxu0
        %3830 = vmatprep.mubr.f32.mxu0 0.0
        %3831 = vmatmul.mubr.f32.gmra.mxu0 %v3709
        %v3832 = vpop.f32.mrf.mxu0
        %v3833 = vadd.f32 0.0, %v3832
        %v3834 = vpop.f32.mrf.mxu0
        %3835 = vmatprep.mubr.f32.mxu0 0.0
        %3836 = vmatmul.mubr.f32.gmra.mxu0 %v3712
        %v3837 = vpop.f32.mrf.mxu0
        %v3838 = vadd.f32 0.0, %v3837
        %v3839 = vpop.f32.mrf.mxu0
        %3840 = vmatprep.mubr.f32.mxu0 0.0
        %3841 = vmatmul.mubr.f32.gmra.mxu0 %v3715
        %v3842 = vpop.f32.mrf.mxu0
        %v3843 = vadd.f32 0.0, %v3842
        %v3844 = vpop.f32.mrf.mxu0
        %3845 = vmatprep.mubr.f32.mxu0 0.0
        %3846 = vmatmul.mubr.f32.gmra.mxu0 %v3718
        %v3847 = vpop.f32.mrf.mxu0
        %v3848 = vadd.f32 0.0, %v3847
        %v3849 = vpop.f32.mrf.mxu0
        %3850 = vmatprep.mubr.f32.mxu0 0.0
        %3851 = vmatmul.mubr.f32.gmra.mxu0 %v3721
        %v3852 = vpop.f32.mrf.mxu0
        %v3853 = vadd.f32 0.0, %v3852
        %v3854 = vpop.f32.mrf.mxu0
        %3855 = vmatprep.mubr.f32.mxu0 0.0
        %3856 = vmatmul.mubr.f32.gmra.mxu0 %v3724
        %v3857 = vpop.f32.mrf.mxu0
        %v3858 = vadd.f32 0.0, %v3857
        %v3859 = vpop.f32.mrf.mxu0
        %3860 = vmatprep.mubr.f32.mxu0 0.0
        %3861 = vmatmul.mubr.f32.gmra.mxu0 %v3727
        %v3862 = vpop.f32.mrf.mxu0
        %v3863 = vadd.f32 0.0, %v3862
        %v3864 = vpop.f32.mrf.mxu0
        %3865 = vmatprep.mubr.f32.mxu0 0.0
        %3866 = vmatmul.mubr.f32.gmra.mxu0 %v3730
        %v3867 = vpop.f32.mrf.mxu0
        %v3868 = vadd.f32 0.0, %v3867
        %v3869 = vpop.f32.mrf.mxu0
        %3870 = vmatprep.mubr.f32.mxu0 0.0
        %3871 = vmatmul.mubr.f32.gmra.mxu0 %v3733
        %v3872 = vpop.f32.mrf.mxu0
        %v3873 = vadd.f32 0.0, %v3872
        %v3874 = vpop.f32.mrf.mxu0
        %3875 = vmatprep.mubr.f32.mxu0 0.0
        %3876 = vmatmul.mubr.f32.gmra.mxu0 %v3736
        %v3877 = vpop.f32.mrf.mxu0
        %v3878 = vadd.f32 0.0, %v3877
        %v3879 = vpop.f32.mrf.mxu0
        %3880 = vmatprep.mubr.f32.mxu0 0.0
        %3881 = vmatmul.mubr.f32.gmra.mxu0 %v3739
        %v3882 = vpop.f32.mrf.mxu0
        %v3883 = vadd.f32 0.0, %v3882
        %v3884 = vpop.f32.mrf.mxu0
        %3885 = vdwg.mxu0
        %v3886 = vld [vmem:[%s7] sm:$0xff]
        %s3887 = scalar_lea.vmem %s6, 128
        %v3888 = vld [vmem:[%s3887] sm:$0xff]
        %v3889 = vld [vmem:[%s3887 + $0x8] sm:$0xff]
        %v3890 = vld [vmem:[%s3887 + $0x10] sm:$0xff]
        %v3891 = vld [vmem:[%s3887 + $0x18] sm:$0xff]
        %v3892 = vld [vmem:[%s3887 + $0x20] sm:$0xff]
        %v3893 = vld [vmem:[%s3887 + $0x28] sm:$0xff]
        %v3894 = vld [vmem:[%s3887 + $0x30] sm:$0xff]
        %v3895 = vld [vmem:[%s3887 + $0x38] sm:$0xff]
        %v3896 = vld [vmem:[%s3887 + $0x40] sm:$0xff]
        %v3897 = vld [vmem:[%s3887 + $0x48] sm:$0xff]
        %v3898 = vld [vmem:[%s3887 + $0x50] sm:$0xff]
        %v3899 = vld [vmem:[%s3887 + $0x58] sm:$0xff]
        %v3900 = vld [vmem:[%s3887 + $0x60] sm:$0xff]
        %v3901 = vld [vmem:[%s3887 + $0x68] sm:$0xff]
        %v3902 = vld [vmem:[%s3887 + $0x70] sm:$0xff]
        %v3903 = vld [vmem:[%s3887 + $0x78] sm:$0xff]
        %v3905 = vsel %vm1742, %v3888, 0
        %v3908 = vsel %vm1742, %v3889, 0
        %v3911 = vsel %vm1742, %v3890, 0
        %v3914 = vsel %vm1742, %v3891, 0
        %v3917 = vsel %vm1742, %v3892, 0
        %v3920 = vsel %vm1742, %v3893, 0
        %v3923 = vsel %vm1742, %v3894, 0
        %v3926 = vsel %vm1742, %v3895, 0
        %v3929 = vsel %vm1742, %v3896, 0
        %v3932 = vsel %vm1742, %v3897, 0
        %v3935 = vsel %vm1742, %v3898, 0
        %v3938 = vsel %vm1742, %v3899, 0
        %v3941 = vsel %vm1742, %v3900, 0
        %v3944 = vsel %vm1742, %v3901, 0
        %v3947 = vsel %vm1742, %v3902, 0
        %v3950 = vsel %vm1742, %v3903, 0
        %3952 = vmatprep.subr.mxu0 0.0
        %3953 = vmatpush1.msra.mxu0 0.0
        %3954 = vmatprep.subr.mxu0 0.0
        %3955 = vmatpush1.msra.mxu0 0.0
        %3956 = vmatprep.subr.mxu0 0.0
        %3957 = vmatpush1.msra.mxu0 0.0
        %3958 = vmatprep.subr.mxu0 0.0
        %3959 = vmatpush1.msra.mxu0 0.0
        %3960 = vmatprep.subr.mxu0 0.0
        %3961 = vmatpush1.msra.mxu0 0.0
        %3962 = vmatprep.subr.mxu0 0.0
        %3963 = vmatpush1.msra.mxu0 0.0
        %3964 = vmatprep.subr.mxu0 0.0
        %3965 = vmatpush1.msra.mxu0 0.0
        %3966 = vmatprep.subr.mxu0 0.0
        %3967 = vmatpush1.msra.mxu0 0.0
        %3968 = vmatprep.subr.mxu0 0.0
        %3969 = vmatpush1.msra.mxu0 0.0
        %3970 = vmatprep.subr.mxu0 0.0
        %3971 = vmatpush1.msra.mxu0 0.0
        %3972 = vmatprep.subr.mxu0 0.0
        %3973 = vmatpush1.msra.mxu0 0.0
        %3974 = vmatprep.subr.mxu0 0.0
        %3975 = vmatpush1.msra.mxu0 0.0
        %3976 = vmatprep.subr.mxu0 0.0
        %3977 = vmatpush1.msra.mxu0 0.0
        %3978 = vmatprep.subr.mxu0 0.0
        %3979 = vmatpush1.msra.mxu0 0.0
        %3980 = vmatprep.subr.mxu0 0.0
        %3981 = vmatpush1.msra.mxu0 0.0
        %3982 = vmatprep.subr.mxu0 0.0
        %3983 = vmatpush1.msra.mxu0 %v3691
        %3984 = vmatprep.subr.mxu0 0.0
        %3985 = vmatpush2.msra.mxu0 0.0
        %3986 = vmatprep.subr.mxu0 0.0
        %3987 = vmatpush2.msra.mxu0 0.0
        %3988 = vmatprep.subr.mxu0 0.0
        %3989 = vmatpush2.msra.mxu0 0.0
        %3990 = vmatprep.subr.mxu0 0.0
        %3991 = vmatpush2.msra.mxu0 0.0
        %3992 = vmatprep.subr.mxu0 0.0
        %3993 = vmatpush2.msra.mxu0 0.0
        %3994 = vmatprep.subr.mxu0 0.0
        %3995 = vmatpush2.msra.mxu0 0.0
        %3996 = vmatprep.subr.mxu0 0.0
        %3997 = vmatpush2.msra.mxu0 0.0
        %3998 = vmatprep.subr.mxu0 0.0
        %3999 = vmatpush2.msra.mxu0 0.0
        %4000 = vmatprep.subr.mxu0 0.0
        %4001 = vmatpush2.msra.mxu0 0.0
        %4002 = vmatprep.subr.mxu0 0.0
        %4003 = vmatpush2.msra.mxu0 0.0
        %4004 = vmatprep.subr.mxu0 0.0
        %4005 = vmatpush2.msra.mxu0 0.0
        %4006 = vmatprep.subr.mxu0 0.0
        %4007 = vmatpush2.msra.mxu0 0.0
        %4008 = vmatprep.subr.mxu0 0.0
        %4009 = vmatpush2.msra.mxu0 0.0
        %4010 = vmatprep.subr.mxu0 0.0
        %4011 = vmatpush2.msra.mxu0 0.0
        %4012 = vmatprep.subr.mxu0 0.0
        %4013 = vmatpush2.msra.mxu0 0.0
        %4014 = vmatprep.subr.mxu0 0.0
        %4015 = vmatpush2.msra.mxu0 0.0
        %4016 = vmatprep.mubr.f32.mxu0 0.0
        %4017 = vmatmul.mubr.f32.gmra.mxu0 %v3905
        %v4018 = vpop.f32.mrf.mxu0
        %v4019 = vadd.f32 0.0, %v4018
        %v4020 = vpop.f32.mrf.mxu0
        %4021 = vmatprep.mubr.f32.mxu0 0.0
        %4022 = vmatmul.mubr.f32.gmra.mxu0 %v3908
        %v4023 = vpop.f32.mrf.mxu0
        %v4024 = vadd.f32 0.0, %v4023
        %v4025 = vpop.f32.mrf.mxu0
        %4026 = vmatprep.mubr.f32.mxu0 0.0
        %4027 = vmatmul.mubr.f32.gmra.mxu0 %v3911
        %v4028 = vpop.f32.mrf.mxu0
        %v4029 = vadd.f32 0.0, %v4028
        %v4030 = vpop.f32.mrf.mxu0
        %4031 = vmatprep.mubr.f32.mxu0 0.0
        %4032 = vmatmul.mubr.f32.gmra.mxu0 %v3914
        %v4033 = vpop.f32.mrf.mxu0
        %v4034 = vadd.f32 0.0, %v4033
        %v4035 = vpop.f32.mrf.mxu0
        %4036 = vmatprep.mubr.f32.mxu0 0.0
        %4037 = vmatmul.mubr.f32.gmra.mxu0 %v3917
        %v4038 = vpop.f32.mrf.mxu0
        %v4039 = vadd.f32 0.0, %v4038
        %v4040 = vpop.f32.mrf.mxu0
        %4041 = vmatprep.mubr.f32.mxu0 0.0
        %4042 = vmatmul.mubr.f32.gmra.mxu0 %v3920
        %v4043 = vpop.f32.mrf.mxu0
        %v4044 = vadd.f32 0.0, %v4043
        %v4045 = vpop.f32.mrf.mxu0
        %4046 = vmatprep.mubr.f32.mxu0 0.0
        %4047 = vmatmul.mubr.f32.gmra.mxu0 %v3923
        %v4048 = vpop.f32.mrf.mxu0
        %v4049 = vadd.f32 0.0, %v4048
        %v4050 = vpop.f32.mrf.mxu0
        %4051 = vmatprep.mubr.f32.mxu0 0.0
        %4052 = vmatmul.mubr.f32.gmra.mxu0 %v3926
        %v4053 = vpop.f32.mrf.mxu0
        %v4054 = vadd.f32 0.0, %v4053
        %v4055 = vpop.f32.mrf.mxu0
        %4056 = vmatprep.mubr.f32.mxu0 0.0
        %4057 = vmatmul.mubr.f32.gmra.mxu0 %v3929
        %v4058 = vpop.f32.mrf.mxu0
        %v4059 = vadd.f32 0.0, %v4058
        %v4060 = vpop.f32.mrf.mxu0
        %4061 = vmatprep.mubr.f32.mxu0 0.0
        %4062 = vmatmul.mubr.f32.gmra.mxu0 %v3932
        %v4063 = vpop.f32.mrf.mxu0
        %v4064 = vadd.f32 0.0, %v4063
        %v4065 = vpop.f32.mrf.mxu0
        %4066 = vmatprep.mubr.f32.mxu0 0.0
        %4067 = vmatmul.mubr.f32.gmra.mxu0 %v3935
        %v4068 = vpop.f32.mrf.mxu0
        %v4069 = vadd.f32 0.0, %v4068
        %v4070 = vpop.f32.mrf.mxu0
        %4071 = vmatprep.mubr.f32.mxu0 0.0
        %4072 = vmatmul.mubr.f32.gmra.mxu0 %v3938
        %v4073 = vpop.f32.mrf.mxu0
        %v4074 = vadd.f32 0.0, %v4073
        %v4075 = vpop.f32.mrf.mxu0
        %4076 = vmatprep.mubr.f32.mxu0 0.0
        %4077 = vmatmul.mubr.f32.gmra.mxu0 %v3941
        %v4078 = vpop.f32.mrf.mxu0
        %v4079 = vadd.f32 0.0, %v4078
        %v4080 = vpop.f32.mrf.mxu0
        %4081 = vmatprep.mubr.f32.mxu0 0.0
        %4082 = vmatmul.mubr.f32.gmra.mxu0 %v3944
        %v4083 = vpop.f32.mrf.mxu0
        %v4084 = vadd.f32 0.0, %v4083
        %v4085 = vpop.f32.mrf.mxu0
        %4086 = vmatprep.mubr.f32.mxu0 0.0
        %4087 = vmatmul.mubr.f32.gmra.mxu0 %v3947
        %v4088 = vpop.f32.mrf.mxu0
        %v4089 = vadd.f32 0.0, %v4088
        %v4090 = vpop.f32.mrf.mxu0
        %4091 = vmatprep.mubr.f32.mxu0 0.0
        %4092 = vmatmul.mubr.f32.gmra.mxu0 %v3950
        %v4093 = vpop.f32.mrf.mxu0
        %v4094 = vadd.f32 0.0, %v4093
        %v4095 = vpop.f32.mrf.mxu0
        %4096 = vdwg.mxu0
        %s4097 = scalar_lea.vmem %s7, 8
        %v4098 = vld [vmem:[%s4097] sm:$0xff]
        %v4100 = vsel %vm1742, %v4019, 0
        %v4103 = vsel %vm1742, %v4024, 0
        %v4106 = vsel %vm1742, %v4029, 0
        %v4109 = vsel %vm1742, %v4034, 0
        %v4112 = vsel %vm1742, %v4039, 0
        %v4115 = vsel %vm1742, %v4044, 0
        %v4118 = vsel %vm1742, %v4049, 0
        %v4121 = vsel %vm1742, %v4054, 0
        %v4124 = vsel %vm1742, %v4059, 0
        %v4127 = vsel %vm1742, %v4064, 0
        %v4130 = vsel %vm1742, %v4069, 0
        %v4133 = vsel %vm1742, %v4074, 0
        %v4136 = vsel %vm1742, %v4079, 0
        %v4139 = vsel %vm1742, %v4084, 0
        %v4142 = vsel %vm1742, %v4089, 0
        %v4145 = vsel %vm1742, %v4094, 0
        %4147 = vmatprep.subr.mxu0 0.0
        %4148 = vmatpush1.msra.mxu0 0.0
        %4149 = vmatprep.subr.mxu0 0.0
        %4150 = vmatpush1.msra.mxu0 0.0
        %4151 = vmatprep.subr.mxu0 0.0
        %4152 = vmatpush1.msra.mxu0 0.0
        %4153 = vmatprep.subr.mxu0 0.0
        %4154 = vmatpush1.msra.mxu0 0.0
        %4155 = vmatprep.subr.mxu0 0.0
        %4156 = vmatpush1.msra.mxu0 0.0
        %4157 = vmatprep.subr.mxu0 0.0
        %4158 = vmatpush1.msra.mxu0 0.0
        %4159 = vmatprep.subr.mxu0 0.0
        %4160 = vmatpush1.msra.mxu0 0.0
        %4161 = vmatprep.subr.mxu0 0.0
        %4162 = vmatpush1.msra.mxu0 0.0
        %4163 = vmatprep.subr.mxu0 0.0
        %4164 = vmatpush1.msra.mxu0 0.0
        %4165 = vmatprep.subr.mxu0 0.0
        %4166 = vmatpush1.msra.mxu0 0.0
        %4167 = vmatprep.subr.mxu0 0.0
        %4168 = vmatpush1.msra.mxu0 0.0
        %4169 = vmatprep.subr.mxu0 0.0
        %4170 = vmatpush1.msra.mxu0 0.0
        %4171 = vmatprep.subr.mxu0 0.0
        %4172 = vmatpush1.msra.mxu0 0.0
        %4173 = vmatprep.subr.mxu0 0.0
        %4174 = vmatpush1.msra.mxu0 0.0
        %4175 = vmatprep.subr.mxu0 0.0
        %4176 = vmatpush1.msra.mxu0 0.0
        %4177 = vmatprep.subr.mxu0 0.0
        %4178 = vmatpush1.msra.mxu0 %v4098
        %4179 = vmatprep.subr.mxu0 0.0
        %4180 = vmatpush2.msra.mxu0 0.0
        %4181 = vmatprep.subr.mxu0 0.0
        %4182 = vmatpush2.msra.mxu0 0.0
        %4183 = vmatprep.subr.mxu0 0.0
        %4184 = vmatpush2.msra.mxu0 0.0
        %4185 = vmatprep.subr.mxu0 0.0
        %4186 = vmatpush2.msra.mxu0 0.0
        %4187 = vmatprep.subr.mxu0 0.0
        %4188 = vmatpush2.msra.mxu0 0.0
        %4189 = vmatprep.subr.mxu0 0.0
        %4190 = vmatpush2.msra.mxu0 0.0
        %4191 = vmatprep.subr.mxu0 0.0
        %4192 = vmatpush2.msra.mxu0 0.0
        %4193 = vmatprep.subr.mxu0 0.0
        %4194 = vmatpush2.msra.mxu0 0.0
        %4195 = vmatprep.subr.mxu0 0.0
        %4196 = vmatpush2.msra.mxu0 0.0
        %4197 = vmatprep.subr.mxu0 0.0
        %4198 = vmatpush2.msra.mxu0 0.0
        %4199 = vmatprep.subr.mxu0 0.0
        %4200 = vmatpush2.msra.mxu0 0.0
        %4201 = vmatprep.subr.mxu0 0.0
        %4202 = vmatpush2.msra.mxu0 0.0
        %4203 = vmatprep.subr.mxu0 0.0
        %4204 = vmatpush2.msra.mxu0 0.0
        %4205 = vmatprep.subr.mxu0 0.0
        %4206 = vmatpush2.msra.mxu0 0.0
        %4207 = vmatprep.subr.mxu0 0.0
        %4208 = vmatpush2.msra.mxu0 0.0
        %4209 = vmatprep.subr.mxu0 0.0
        %4210 = vmatpush2.msra.mxu0 0.0
        %4211 = vmatprep.mubr.f32.mxu0 0.0
        %4212 = vmatmul.mubr.f32.gmra.mxu0 %v4100
        %v4213 = vpop.f32.mrf.mxu0
        %v4214 = vadd.f32 0.0, %v4213
        %v4215 = vpop.f32.mrf.mxu0
        %4216 = vmatprep.mubr.f32.mxu0 0.0
        %4217 = vmatmul.mubr.f32.gmra.mxu0 %v4103
        %v4218 = vpop.f32.mrf.mxu0
        %v4219 = vadd.f32 0.0, %v4218
        %v4220 = vpop.f32.mrf.mxu0
        %4221 = vmatprep.mubr.f32.mxu0 0.0
        %4222 = vmatmul.mubr.f32.gmra.mxu0 %v4106
        %v4223 = vpop.f32.mrf.mxu0
        %v4224 = vadd.f32 0.0, %v4223
        %v4225 = vpop.f32.mrf.mxu0
        %4226 = vmatprep.mubr.f32.mxu0 0.0
        %4227 = vmatmul.mubr.f32.gmra.mxu0 %v4109
        %v4228 = vpop.f32.mrf.mxu0
        %v4229 = vadd.f32 0.0, %v4228
        %v4230 = vpop.f32.mrf.mxu0
        %4231 = vmatprep.mubr.f32.mxu0 0.0
        %4232 = vmatmul.mubr.f32.gmra.mxu0 %v4112
        %v4233 = vpop.f32.mrf.mxu0
        %v4234 = vadd.f32 0.0, %v4233
        %v4235 = vpop.f32.mrf.mxu0
        %4236 = vmatprep.mubr.f32.mxu0 0.0
        %4237 = vmatmul.mubr.f32.gmra.mxu0 %v4115
        %v4238 = vpop.f32.mrf.mxu0
        %v4239 = vadd.f32 0.0, %v4238
        %v4240 = vpop.f32.mrf.mxu0
        %4241 = vmatprep.mubr.f32.mxu0 0.0
        %4242 = vmatmul.mubr.f32.gmra.mxu0 %v4118
        %v4243 = vpop.f32.mrf.mxu0
        %v4244 = vadd.f32 0.0, %v4243
        %v4245 = vpop.f32.mrf.mxu0
        %4246 = vmatprep.mubr.f32.mxu0 0.0
        %4247 = vmatmul.mubr.f32.gmra.mxu0 %v4121
        %v4248 = vpop.f32.mrf.mxu0
        %v4249 = vadd.f32 0.0, %v4248
        %v4250 = vpop.f32.mrf.mxu0
        %4251 = vmatprep.mubr.f32.mxu0 0.0
        %4252 = vmatmul.mubr.f32.gmra.mxu0 %v4124
        %v4253 = vpop.f32.mrf.mxu0
        %v4254 = vadd.f32 0.0, %v4253
        %v4255 = vpop.f32.mrf.mxu0
        %4256 = vmatprep.mubr.f32.mxu0 0.0
        %4257 = vmatmul.mubr.f32.gmra.mxu0 %v4127
        %v4258 = vpop.f32.mrf.mxu0
        %v4259 = vadd.f32 0.0, %v4258
        %v4260 = vpop.f32.mrf.mxu0
        %4261 = vmatprep.mubr.f32.mxu0 0.0
        %4262 = vmatmul.mubr.f32.gmra.mxu0 %v4130
        %v4263 = vpop.f32.mrf.mxu0
        %v4264 = vadd.f32 0.0, %v4263
        %v4265 = vpop.f32.mrf.mxu0
        %4266 = vmatprep.mubr.f32.mxu0 0.0
        %4267 = vmatmul.mubr.f32.gmra.mxu0 %v4133
        %v4268 = vpop.f32.mrf.mxu0
        %v4269 = vadd.f32 0.0, %v4268
        %v4270 = vpop.f32.mrf.mxu0
        %4271 = vmatprep.mubr.f32.mxu0 0.0
        %4272 = vmatmul.mubr.f32.gmra.mxu0 %v4136
        %v4273 = vpop.f32.mrf.mxu0
        %v4274 = vadd.f32 0.0, %v4273
        %v4275 = vpop.f32.mrf.mxu0
        %4276 = vmatprep.mubr.f32.mxu0 0.0
        %4277 = vmatmul.mubr.f32.gmra.mxu0 %v4139
        %v4278 = vpop.f32.mrf.mxu0
        %v4279 = vadd.f32 0.0, %v4278
        %v4280 = vpop.f32.mrf.mxu0
        %4281 = vmatprep.mubr.f32.mxu0 0.0
        %4282 = vmatmul.mubr.f32.gmra.mxu0 %v4142
        %v4283 = vpop.f32.mrf.mxu0
        %v4284 = vadd.f32 0.0, %v4283
        %v4285 = vpop.f32.mrf.mxu0
        %4286 = vmatprep.mubr.f32.mxu0 0.0
        %4287 = vmatmul.mubr.f32.gmra.mxu0 %v4145
        %v4288 = vpop.f32.mrf.mxu0
        %v4289 = vadd.f32 0.0, %v4288
        %v4290 = vpop.f32.mrf.mxu0
        %4291 = vdwg.mxu0
        %v4293 = vsel %vm1742, %v3808, 0
        %v4296 = vsel %vm1742, %v3813, 0
        %v4299 = vsel %vm1742, %v3818, 0
        %v4302 = vsel %vm1742, %v3823, 0
        %v4305 = vsel %vm1742, %v3828, 0
        %v4308 = vsel %vm1742, %v3833, 0
        %v4311 = vsel %vm1742, %v3838, 0
        %v4314 = vsel %vm1742, %v3843, 0
        %v4317 = vsel %vm1742, %v3848, 0
        %v4320 = vsel %vm1742, %v3853, 0
        %v4323 = vsel %vm1742, %v3858, 0
        %v4326 = vsel %vm1742, %v3863, 0
        %v4329 = vsel %vm1742, %v3868, 0
        %v4332 = vsel %vm1742, %v3873, 0
        %v4335 = vsel %vm1742, %v3878, 0
        %v4338 = vsel %vm1742, %v3883, 0
        %4340 = vmatprep.subr.mxu0 0.0
        %4341 = vmatpush1.msra.mxu0 0.0
        %4342 = vmatprep.subr.mxu0 0.0
        %4343 = vmatpush1.msra.mxu0 0.0
        %4344 = vmatprep.subr.mxu0 0.0
        %4345 = vmatpush1.msra.mxu0 0.0
        %4346 = vmatprep.subr.mxu0 0.0
        %4347 = vmatpush1.msra.mxu0 0.0
        %4348 = vmatprep.subr.mxu0 0.0
        %4349 = vmatpush1.msra.mxu0 0.0
        %4350 = vmatprep.subr.mxu0 0.0
        %4351 = vmatpush1.msra.mxu0 0.0
        %4352 = vmatprep.subr.mxu0 0.0
        %4353 = vmatpush1.msra.mxu0 0.0
        %4354 = vmatprep.subr.mxu0 0.0
        %4355 = vmatpush1.msra.mxu0 0.0
        %4356 = vmatprep.subr.mxu0 0.0
        %4357 = vmatpush1.msra.mxu0 0.0
        %4358 = vmatprep.subr.mxu0 0.0
        %4359 = vmatpush1.msra.mxu0 0.0
        %4360 = vmatprep.subr.mxu0 0.0
        %4361 = vmatpush1.msra.mxu0 0.0
        %4362 = vmatprep.subr.mxu0 0.0
        %4363 = vmatpush1.msra.mxu0 0.0
        %4364 = vmatprep.subr.mxu0 0.0
        %4365 = vmatpush1.msra.mxu0 0.0
        %4366 = vmatprep.subr.mxu0 0.0
        %4367 = vmatpush1.msra.mxu0 0.0
        %4368 = vmatprep.subr.mxu0 0.0
        %4369 = vmatpush1.msra.mxu0 0.0
        %4370 = vmatprep.subr.mxu0 0.0
        %4371 = vmatpush1.msra.mxu0 %v3886
        %4372 = vmatprep.subr.mxu0 0.0
        %4373 = vmatpush2.msra.mxu0 0.0
        %4374 = vmatprep.subr.mxu0 0.0
        %4375 = vmatpush2.msra.mxu0 0.0
        %4376 = vmatprep.subr.mxu0 0.0
        %4377 = vmatpush2.msra.mxu0 0.0
        %4378 = vmatprep.subr.mxu0 0.0
        %4379 = vmatpush2.msra.mxu0 0.0
        %4380 = vmatprep.subr.mxu0 0.0
        %4381 = vmatpush2.msra.mxu0 0.0
        %4382 = vmatprep.subr.mxu0 0.0
        %4383 = vmatpush2.msra.mxu0 0.0
        %4384 = vmatprep.subr.mxu0 0.0
        %4385 = vmatpush2.msra.mxu0 0.0
        %4386 = vmatprep.subr.mxu0 0.0
        %4387 = vmatpush2.msra.mxu0 0.0
        %4388 = vmatprep.subr.mxu0 0.0
        %4389 = vmatpush2.msra.mxu0 0.0
        %4390 = vmatprep.subr.mxu0 0.0
        %4391 = vmatpush2.msra.mxu0 0.0
        %4392 = vmatprep.subr.mxu0 0.0
        %4393 = vmatpush2.msra.mxu0 0.0
        %4394 = vmatprep.subr.mxu0 0.0
        %4395 = vmatpush2.msra.mxu0 0.0
        %4396 = vmatprep.subr.mxu0 0.0
        %4397 = vmatpush2.msra.mxu0 0.0
        %4398 = vmatprep.subr.mxu0 0.0
        %4399 = vmatpush2.msra.mxu0 0.0
        %4400 = vmatprep.subr.mxu0 0.0
        %4401 = vmatpush2.msra.mxu0 0.0
        %4402 = vmatprep.subr.mxu0 0.0
        %4403 = vmatpush2.msra.mxu0 0.0
        %4404 = vmatprep.mubr.f32.mxu0 0.0
        %4405 = vmatmul.mubr.f32.gmra.mxu0 %v4293
        %v4406 = vpop.f32.mrf.mxu0
        %v4407 = vadd.f32 %v4214, %v4406
        %v4408 = vpop.f32.mrf.mxu0
        %4409 = vmatprep.mubr.f32.mxu0 0.0
        %4410 = vmatmul.mubr.f32.gmra.mxu0 %v4296
        %v4411 = vpop.f32.mrf.mxu0
        %v4412 = vadd.f32 %v4219, %v4411
        %v4413 = vpop.f32.mrf.mxu0
        %4414 = vmatprep.mubr.f32.mxu0 0.0
        %4415 = vmatmul.mubr.f32.gmra.mxu0 %v4299
        %v4416 = vpop.f32.mrf.mxu0
        %v4417 = vadd.f32 %v4224, %v4416
        %v4418 = vpop.f32.mrf.mxu0
        %4419 = vmatprep.mubr.f32.mxu0 0.0
        %4420 = vmatmul.mubr.f32.gmra.mxu0 %v4302
        %v4421 = vpop.f32.mrf.mxu0
        %v4422 = vadd.f32 %v4229, %v4421
        %v4423 = vpop.f32.mrf.mxu0
        %4424 = vmatprep.mubr.f32.mxu0 0.0
        %4425 = vmatmul.mubr.f32.gmra.mxu0 %v4305
        %v4426 = vpop.f32.mrf.mxu0
        %v4427 = vadd.f32 %v4234, %v4426
        %v4428 = vpop.f32.mrf.mxu0
        %4429 = vmatprep.mubr.f32.mxu0 0.0
        %4430 = vmatmul.mubr.f32.gmra.mxu0 %v4308
        %v4431 = vpop.f32.mrf.mxu0
        %v4432 = vadd.f32 %v4239, %v4431
        %v4433 = vpop.f32.mrf.mxu0
        %4434 = vmatprep.mubr.f32.mxu0 0.0
        %4435 = vmatmul.mubr.f32.gmra.mxu0 %v4311
        %v4436 = vpop.f32.mrf.mxu0
        %v4437 = vadd.f32 %v4244, %v4436
        %v4438 = vpop.f32.mrf.mxu0
        %4439 = vmatprep.mubr.f32.mxu0 0.0
        %4440 = vmatmul.mubr.f32.gmra.mxu0 %v4314
        %v4441 = vpop.f32.mrf.mxu0
        %v4442 = vadd.f32 %v4249, %v4441
        %v4443 = vpop.f32.mrf.mxu0
        %4444 = vmatprep.mubr.f32.mxu0 0.0
        %4445 = vmatmul.mubr.f32.gmra.mxu0 %v4317
        %v4446 = vpop.f32.mrf.mxu0
        %v4447 = vadd.f32 %v4254, %v4446
        %v4448 = vpop.f32.mrf.mxu0
        %4449 = vmatprep.mubr.f32.mxu0 0.0
        %4450 = vmatmul.mubr.f32.gmra.mxu0 %v4320
        %v4451 = vpop.f32.mrf.mxu0
        %v4452 = vadd.f32 %v4259, %v4451
        %v4453 = vpop.f32.mrf.mxu0
        %4454 = vmatprep.mubr.f32.mxu0 0.0
        %4455 = vmatmul.mubr.f32.gmra.mxu0 %v4323
        %v4456 = vpop.f32.mrf.mxu0
        %v4457 = vadd.f32 %v4264, %v4456
        %v4458 = vpop.f32.mrf.mxu0
        %4459 = vmatprep.mubr.f32.mxu0 0.0
        %4460 = vmatmul.mubr.f32.gmra.mxu0 %v4326
        %v4461 = vpop.f32.mrf.mxu0
        %v4462 = vadd.f32 %v4269, %v4461
        %v4463 = vpop.f32.mrf.mxu0
        %4464 = vmatprep.mubr.f32.mxu0 0.0
        %4465 = vmatmul.mubr.f32.gmra.mxu0 %v4329
        %v4466 = vpop.f32.mrf.mxu0
        %v4467 = vadd.f32 %v4274, %v4466
        %v4468 = vpop.f32.mrf.mxu0
        %4469 = vmatprep.mubr.f32.mxu0 0.0
        %4470 = vmatmul.mubr.f32.gmra.mxu0 %v4332
        %v4471 = vpop.f32.mrf.mxu0
        %v4472 = vadd.f32 %v4279, %v4471
        %v4473 = vpop.f32.mrf.mxu0
        %4474 = vmatprep.mubr.f32.mxu0 0.0
        %4475 = vmatmul.mubr.f32.gmra.mxu0 %v4335
        %v4476 = vpop.f32.mrf.mxu0
        %v4477 = vadd.f32 %v4284, %v4476
        %v4478 = vpop.f32.mrf.mxu0
        %4479 = vmatprep.mubr.f32.mxu0 0.0
        %4480 = vmatmul.mubr.f32.gmra.mxu0 %v4338
        %v4481 = vpop.f32.mrf.mxu0
        %v4482 = vadd.f32 %v4289, %v4481
        %v4483 = vpop.f32.mrf.mxu0
        %4484 = vdwg.mxu0
        %s4485 = scalar_lea.vmem %s6, 256
        %v4486 = vld [vmem:[%s4485] sm:$0xff]
        %v4487 = vld [vmem:[%s4485 + $0x8] sm:$0xff]
        %v4488 = vld [vmem:[%s4485 + $0x10] sm:$0xff]
        %v4489 = vld [vmem:[%s4485 + $0x18] sm:$0xff]
        %v4490 = vld [vmem:[%s4485 + $0x20] sm:$0xff]
        %v4491 = vld [vmem:[%s4485 + $0x28] sm:$0xff]
        %v4492 = vld [vmem:[%s4485 + $0x30] sm:$0xff]
        %v4493 = vld [vmem:[%s4485 + $0x38] sm:$0xff]
        %v4494 = vld [vmem:[%s4485 + $0x40] sm:$0xff]
        %v4495 = vld [vmem:[%s4485 + $0x48] sm:$0xff]
        %v4496 = vld [vmem:[%s4485 + $0x50] sm:$0xff]
        %v4497 = vld [vmem:[%s4485 + $0x58] sm:$0xff]
        %v4498 = vld [vmem:[%s4485 + $0x60] sm:$0xff]
        %v4499 = vld [vmem:[%s4485 + $0x68] sm:$0xff]
        %v4500 = vld [vmem:[%s4485 + $0x70] sm:$0xff]
        %v4501 = vld [vmem:[%s4485 + $0x78] sm:$0xff]
        %v4503 = vsel %vm1742, %v4486, 0
        %v4506 = vsel %vm1742, %v4487, 0
        %v4509 = vsel %vm1742, %v4488, 0
        %v4512 = vsel %vm1742, %v4489, 0
        %v4515 = vsel %vm1742, %v4490, 0
        %v4518 = vsel %vm1742, %v4491, 0
        %v4521 = vsel %vm1742, %v4492, 0
        %v4524 = vsel %vm1742, %v4493, 0
        %v4527 = vsel %vm1742, %v4494, 0
        %v4530 = vsel %vm1742, %v4495, 0
        %v4533 = vsel %vm1742, %v4496, 0
        %v4536 = vsel %vm1742, %v4497, 0
        %v4539 = vsel %vm1742, %v4498, 0
        %v4542 = vsel %vm1742, %v4499, 0
        %v4545 = vsel %vm1742, %v4500, 0
        %v4548 = vsel %vm1742, %v4501, 0
        %4550 = vmatprep.subr.mxu0 0.0
        %4551 = vmatpush1.msra.mxu0 0.0
        %4552 = vmatprep.subr.mxu0 0.0
        %4553 = vmatpush1.msra.mxu0 0.0
        %4554 = vmatprep.subr.mxu0 0.0
        %4555 = vmatpush1.msra.mxu0 0.0
        %4556 = vmatprep.subr.mxu0 0.0
        %4557 = vmatpush1.msra.mxu0 0.0
        %4558 = vmatprep.subr.mxu0 0.0
        %4559 = vmatpush1.msra.mxu0 0.0
        %4560 = vmatprep.subr.mxu0 0.0
        %4561 = vmatpush1.msra.mxu0 0.0
        %4562 = vmatprep.subr.mxu0 0.0
        %4563 = vmatpush1.msra.mxu0 0.0
        %4564 = vmatprep.subr.mxu0 0.0
        %4565 = vmatpush1.msra.mxu0 0.0
        %4566 = vmatprep.subr.mxu0 0.0
        %4567 = vmatpush1.msra.mxu0 0.0
        %4568 = vmatprep.subr.mxu0 0.0
        %4569 = vmatpush1.msra.mxu0 0.0
        %4570 = vmatprep.subr.mxu0 0.0
        %4571 = vmatpush1.msra.mxu0 0.0
        %4572 = vmatprep.subr.mxu0 0.0
        %4573 = vmatpush1.msra.mxu0 0.0
        %4574 = vmatprep.subr.mxu0 0.0
        %4575 = vmatpush1.msra.mxu0 0.0
        %4576 = vmatprep.subr.mxu0 0.0
        %4577 = vmatpush1.msra.mxu0 0.0
        %4578 = vmatprep.subr.mxu0 0.0
        %4579 = vmatpush1.msra.mxu0 0.0
        %4580 = vmatprep.subr.mxu0 0.0
        %4581 = vmatpush1.msra.mxu0 %v3691
        %4582 = vmatprep.subr.mxu0 0.0
        %4583 = vmatpush2.msra.mxu0 0.0
        %4584 = vmatprep.subr.mxu0 0.0
        %4585 = vmatpush2.msra.mxu0 0.0
        %4586 = vmatprep.subr.mxu0 0.0
        %4587 = vmatpush2.msra.mxu0 0.0
        %4588 = vmatprep.subr.mxu0 0.0
        %4589 = vmatpush2.msra.mxu0 0.0
        %4590 = vmatprep.subr.mxu0 0.0
        %4591 = vmatpush2.msra.mxu0 0.0
        %4592 = vmatprep.subr.mxu0 0.0
        %4593 = vmatpush2.msra.mxu0 0.0
        %4594 = vmatprep.subr.mxu0 0.0
        %4595 = vmatpush2.msra.mxu0 0.0
        %4596 = vmatprep.subr.mxu0 0.0
        %4597 = vmatpush2.msra.mxu0 0.0
        %4598 = vmatprep.subr.mxu0 0.0
        %4599 = vmatpush2.msra.mxu0 0.0
        %4600 = vmatprep.subr.mxu0 0.0
        %4601 = vmatpush2.msra.mxu0 0.0
        %4602 = vmatprep.subr.mxu0 0.0
        %4603 = vmatpush2.msra.mxu0 0.0
        %4604 = vmatprep.subr.mxu0 0.0
        %4605 = vmatpush2.msra.mxu0 0.0
        %4606 = vmatprep.subr.mxu0 0.0
        %4607 = vmatpush2.msra.mxu0 0.0
        %4608 = vmatprep.subr.mxu0 0.0
        %4609 = vmatpush2.msra.mxu0 0.0
        %4610 = vmatprep.subr.mxu0 0.0
        %4611 = vmatpush2.msra.mxu0 0.0
        %4612 = vmatprep.subr.mxu0 0.0
        %4613 = vmatpush2.msra.mxu0 0.0
        %4614 = vmatprep.mubr.f32.mxu0 0.0
        %4615 = vmatmul.mubr.f32.gmra.mxu0 %v4503
        %v4616 = vpop.f32.mrf.mxu0
        %v4617 = vadd.f32 0.0, %v4616
        %v4618 = vpop.f32.mrf.mxu0
        %4619 = vmatprep.mubr.f32.mxu0 0.0
        %4620 = vmatmul.mubr.f32.gmra.mxu0 %v4506
        %v4621 = vpop.f32.mrf.mxu0
        %v4622 = vadd.f32 0.0, %v4621
        %v4623 = vpop.f32.mrf.mxu0
        %4624 = vmatprep.mubr.f32.mxu0 0.0
        %4625 = vmatmul.mubr.f32.gmra.mxu0 %v4509
        %v4626 = vpop.f32.mrf.mxu0
        %v4627 = vadd.f32 0.0, %v4626
        %v4628 = vpop.f32.mrf.mxu0
        %4629 = vmatprep.mubr.f32.mxu0 0.0
        %4630 = vmatmul.mubr.f32.gmra.mxu0 %v4512
        %v4631 = vpop.f32.mrf.mxu0
        %v4632 = vadd.f32 0.0, %v4631
        %v4633 = vpop.f32.mrf.mxu0
        %4634 = vmatprep.mubr.f32.mxu0 0.0
        %4635 = vmatmul.mubr.f32.gmra.mxu0 %v4515
        %v4636 = vpop.f32.mrf.mxu0
        %v4637 = vadd.f32 0.0, %v4636
        %v4638 = vpop.f32.mrf.mxu0
        %4639 = vmatprep.mubr.f32.mxu0 0.0
        %4640 = vmatmul.mubr.f32.gmra.mxu0 %v4518
        %v4641 = vpop.f32.mrf.mxu0
        %v4642 = vadd.f32 0.0, %v4641
        %v4643 = vpop.f32.mrf.mxu0
        %4644 = vmatprep.mubr.f32.mxu0 0.0
        %4645 = vmatmul.mubr.f32.gmra.mxu0 %v4521
        %v4646 = vpop.f32.mrf.mxu0
        %v4647 = vadd.f32 0.0, %v4646
        %v4648 = vpop.f32.mrf.mxu0
        %4649 = vmatprep.mubr.f32.mxu0 0.0
        %4650 = vmatmul.mubr.f32.gmra.mxu0 %v4524
        %v4651 = vpop.f32.mrf.mxu0
        %v4652 = vadd.f32 0.0, %v4651
        %v4653 = vpop.f32.mrf.mxu0
        %4654 = vmatprep.mubr.f32.mxu0 0.0
        %4655 = vmatmul.mubr.f32.gmra.mxu0 %v4527
        %v4656 = vpop.f32.mrf.mxu0
        %v4657 = vadd.f32 0.0, %v4656
        %v4658 = vpop.f32.mrf.mxu0
        %4659 = vmatprep.mubr.f32.mxu0 0.0
        %4660 = vmatmul.mubr.f32.gmra.mxu0 %v4530
        %v4661 = vpop.f32.mrf.mxu0
        %v4662 = vadd.f32 0.0, %v4661
        %v4663 = vpop.f32.mrf.mxu0
        %4664 = vmatprep.mubr.f32.mxu0 0.0
        %4665 = vmatmul.mubr.f32.gmra.mxu0 %v4533
        %v4666 = vpop.f32.mrf.mxu0
        %v4667 = vadd.f32 0.0, %v4666
        %v4668 = vpop.f32.mrf.mxu0
        %4669 = vmatprep.mubr.f32.mxu0 0.0
        %4670 = vmatmul.mubr.f32.gmra.mxu0 %v4536
        %v4671 = vpop.f32.mrf.mxu0
        %v4672 = vadd.f32 0.0, %v4671
        %v4673 = vpop.f32.mrf.mxu0
        %4674 = vmatprep.mubr.f32.mxu0 0.0
        %4675 = vmatmul.mubr.f32.gmra.mxu0 %v4539
        %v4676 = vpop.f32.mrf.mxu0
        %v4677 = vadd.f32 0.0, %v4676
        %v4678 = vpop.f32.mrf.mxu0
        %4679 = vmatprep.mubr.f32.mxu0 0.0
        %4680 = vmatmul.mubr.f32.gmra.mxu0 %v4542
        %v4681 = vpop.f32.mrf.mxu0
        %v4682 = vadd.f32 0.0, %v4681
        %v4683 = vpop.f32.mrf.mxu0
        %4684 = vmatprep.mubr.f32.mxu0 0.0
        %4685 = vmatmul.mubr.f32.gmra.mxu0 %v4545
        %v4686 = vpop.f32.mrf.mxu0
        %v4687 = vadd.f32 0.0, %v4686
        %v4688 = vpop.f32.mrf.mxu0
        %4689 = vmatprep.mubr.f32.mxu0 0.0
        %4690 = vmatmul.mubr.f32.gmra.mxu0 %v4548
        %v4691 = vpop.f32.mrf.mxu0
        %v4692 = vadd.f32 0.0, %v4691
        %v4693 = vpop.f32.mrf.mxu0
        %4694 = vdwg.mxu0
        %s4695 = scalar_lea.vmem %s7, 16
        %v4696 = vld [vmem:[%s4695] sm:$0xff]
        %v4698 = vsel %vm1742, %v4617, 0
        %v4701 = vsel %vm1742, %v4622, 0
        %v4704 = vsel %vm1742, %v4627, 0
        %v4707 = vsel %vm1742, %v4632, 0
        %v4710 = vsel %vm1742, %v4637, 0
        %v4713 = vsel %vm1742, %v4642, 0
        %v4716 = vsel %vm1742, %v4647, 0
        %v4719 = vsel %vm1742, %v4652, 0
        %v4722 = vsel %vm1742, %v4657, 0
        %v4725 = vsel %vm1742, %v4662, 0
        %v4728 = vsel %vm1742, %v4667, 0
        %v4731 = vsel %vm1742, %v4672, 0
        %v4734 = vsel %vm1742, %v4677, 0
        %v4737 = vsel %vm1742, %v4682, 0
        %v4740 = vsel %vm1742, %v4687, 0
        %v4743 = vsel %vm1742, %v4692, 0
        %4745 = vmatprep.subr.mxu0 0.0
        %4746 = vmatpush1.msra.mxu0 0.0
        %4747 = vmatprep.subr.mxu0 0.0
        %4748 = vmatpush1.msra.mxu0 0.0
        %4749 = vmatprep.subr.mxu0 0.0
        %4750 = vmatpush1.msra.mxu0 0.0
        %4751 = vmatprep.subr.mxu0 0.0
        %4752 = vmatpush1.msra.mxu0 0.0
        %4753 = vmatprep.subr.mxu0 0.0
        %4754 = vmatpush1.msra.mxu0 0.0
        %4755 = vmatprep.subr.mxu0 0.0
        %4756 = vmatpush1.msra.mxu0 0.0
        %4757 = vmatprep.subr.mxu0 0.0
        %4758 = vmatpush1.msra.mxu0 0.0
        %4759 = vmatprep.subr.mxu0 0.0
        %4760 = vmatpush1.msra.mxu0 0.0
        %4761 = vmatprep.subr.mxu0 0.0
        %4762 = vmatpush1.msra.mxu0 0.0
        %4763 = vmatprep.subr.mxu0 0.0
        %4764 = vmatpush1.msra.mxu0 0.0
        %4765 = vmatprep.subr.mxu0 0.0
        %4766 = vmatpush1.msra.mxu0 0.0
        %4767 = vmatprep.subr.mxu0 0.0
        %4768 = vmatpush1.msra.mxu0 0.0
        %4769 = vmatprep.subr.mxu0 0.0
        %4770 = vmatpush1.msra.mxu0 0.0
        %4771 = vmatprep.subr.mxu0 0.0
        %4772 = vmatpush1.msra.mxu0 0.0
        %4773 = vmatprep.subr.mxu0 0.0
        %4774 = vmatpush1.msra.mxu0 0.0
        %4775 = vmatprep.subr.mxu0 0.0
        %4776 = vmatpush1.msra.mxu0 %v4696
        %4777 = vmatprep.subr.mxu0 0.0
        %4778 = vmatpush2.msra.mxu0 0.0
        %4779 = vmatprep.subr.mxu0 0.0
        %4780 = vmatpush2.msra.mxu0 0.0
        %4781 = vmatprep.subr.mxu0 0.0
        %4782 = vmatpush2.msra.mxu0 0.0
        %4783 = vmatprep.subr.mxu0 0.0
        %4784 = vmatpush2.msra.mxu0 0.0
        %4785 = vmatprep.subr.mxu0 0.0
        %4786 = vmatpush2.msra.mxu0 0.0
        %4787 = vmatprep.subr.mxu0 0.0
        %4788 = vmatpush2.msra.mxu0 0.0
        %4789 = vmatprep.subr.mxu0 0.0
        %4790 = vmatpush2.msra.mxu0 0.0
        %4791 = vmatprep.subr.mxu0 0.0
        %4792 = vmatpush2.msra.mxu0 0.0
        %4793 = vmatprep.subr.mxu0 0.0
        %4794 = vmatpush2.msra.mxu0 0.0
        %4795 = vmatprep.subr.mxu0 0.0
        %4796 = vmatpush2.msra.mxu0 0.0
        %4797 = vmatprep.subr.mxu0 0.0
        %4798 = vmatpush2.msra.mxu0 0.0
        %4799 = vmatprep.subr.mxu0 0.0
        %4800 = vmatpush2.msra.mxu0 0.0
        %4801 = vmatprep.subr.mxu0 0.0
        %4802 = vmatpush2.msra.mxu0 0.0
        %4803 = vmatprep.subr.mxu0 0.0
        %4804 = vmatpush2.msra.mxu0 0.0
        %4805 = vmatprep.subr.mxu0 0.0
        %4806 = vmatpush2.msra.mxu0 0.0
        %4807 = vmatprep.subr.mxu0 0.0
        %4808 = vmatpush2.msra.mxu0 0.0
        %4809 = vmatprep.mubr.f32.mxu0 0.0
        %4810 = vmatmul.mubr.f32.gmra.mxu0 %v4698
        %v4811 = vpop.f32.mrf.mxu0
        %v4812 = vadd.f32 0.0, %v4811
        %v4813 = vpop.f32.mrf.mxu0
        %4814 = vmatprep.mubr.f32.mxu0 0.0
        %4815 = vmatmul.mubr.f32.gmra.mxu0 %v4701
        %v4816 = vpop.f32.mrf.mxu0
        %v4817 = vadd.f32 0.0, %v4816
        %v4818 = vpop.f32.mrf.mxu0
        %4819 = vmatprep.mubr.f32.mxu0 0.0
        %4820 = vmatmul.mubr.f32.gmra.mxu0 %v4704
        %v4821 = vpop.f32.mrf.mxu0
        %v4822 = vadd.f32 0.0, %v4821
        %v4823 = vpop.f32.mrf.mxu0
        %4824 = vmatprep.mubr.f32.mxu0 0.0
        %4825 = vmatmul.mubr.f32.gmra.mxu0 %v4707
        %v4826 = vpop.f32.mrf.mxu0
        %v4827 = vadd.f32 0.0, %v4826
        %v4828 = vpop.f32.mrf.mxu0
        %4829 = vmatprep.mubr.f32.mxu0 0.0
        %4830 = vmatmul.mubr.f32.gmra.mxu0 %v4710
        %v4831 = vpop.f32.mrf.mxu0
        %v4832 = vadd.f32 0.0, %v4831
        %v4833 = vpop.f32.mrf.mxu0
        %4834 = vmatprep.mubr.f32.mxu0 0.0
        %4835 = vmatmul.mubr.f32.gmra.mxu0 %v4713
        %v4836 = vpop.f32.mrf.mxu0
        %v4837 = vadd.f32 0.0, %v4836
        %v4838 = vpop.f32.mrf.mxu0
        %4839 = vmatprep.mubr.f32.mxu0 0.0
        %4840 = vmatmul.mubr.f32.gmra.mxu0 %v4716
        %v4841 = vpop.f32.mrf.mxu0
        %v4842 = vadd.f32 0.0, %v4841
        %v4843 = vpop.f32.mrf.mxu0
        %4844 = vmatprep.mubr.f32.mxu0 0.0
        %4845 = vmatmul.mubr.f32.gmra.mxu0 %v4719
        %v4846 = vpop.f32.mrf.mxu0
        %v4847 = vadd.f32 0.0, %v4846
        %v4848 = vpop.f32.mrf.mxu0
        %4849 = vmatprep.mubr.f32.mxu0 0.0
        %4850 = vmatmul.mubr.f32.gmra.mxu0 %v4722
        %v4851 = vpop.f32.mrf.mxu0
        %v4852 = vadd.f32 0.0, %v4851
        %v4853 = vpop.f32.mrf.mxu0
        %4854 = vmatprep.mubr.f32.mxu0 0.0
        %4855 = vmatmul.mubr.f32.gmra.mxu0 %v4725
        %v4856 = vpop.f32.mrf.mxu0
        %v4857 = vadd.f32 0.0, %v4856
        %v4858 = vpop.f32.mrf.mxu0
        %4859 = vmatprep.mubr.f32.mxu0 0.0
        %4860 = vmatmul.mubr.f32.gmra.mxu0 %v4728
        %v4861 = vpop.f32.mrf.mxu0
        %v4862 = vadd.f32 0.0, %v4861
        %v4863 = vpop.f32.mrf.mxu0
        %4864 = vmatprep.mubr.f32.mxu0 0.0
        %4865 = vmatmul.mubr.f32.gmra.mxu0 %v4731
        %v4866 = vpop.f32.mrf.mxu0
        %v4867 = vadd.f32 0.0, %v4866
        %v4868 = vpop.f32.mrf.mxu0
        %4869 = vmatprep.mubr.f32.mxu0 0.0
        %4870 = vmatmul.mubr.f32.gmra.mxu0 %v4734
        %v4871 = vpop.f32.mrf.mxu0
        %v4872 = vadd.f32 0.0, %v4871
        %v4873 = vpop.f32.mrf.mxu0
        %4874 = vmatprep.mubr.f32.mxu0 0.0
        %4875 = vmatmul.mubr.f32.gmra.mxu0 %v4737
        %v4876 = vpop.f32.mrf.mxu0
        %v4877 = vadd.f32 0.0, %v4876
        %v4878 = vpop.f32.mrf.mxu0
        %4879 = vmatprep.mubr.f32.mxu0 0.0
        %4880 = vmatmul.mubr.f32.gmra.mxu0 %v4740
        %v4881 = vpop.f32.mrf.mxu0
        %v4882 = vadd.f32 0.0, %v4881
        %v4883 = vpop.f32.mrf.mxu0
        %4884 = vmatprep.mubr.f32.mxu0 0.0
        %4885 = vmatmul.mubr.f32.gmra.mxu0 %v4743
        %v4886 = vpop.f32.mrf.mxu0
        %v4887 = vadd.f32 0.0, %v4886
        %v4888 = vpop.f32.mrf.mxu0
        %4889 = vdwg.mxu0
        %v4890 = vadd.f32 %v4407, %v4812
        %v4891 = vadd.f32 %v4412, %v4817
        %v4892 = vadd.f32 %v4417, %v4822
        %v4893 = vadd.f32 %v4422, %v4827
        %v4894 = vadd.f32 %v4427, %v4832
        %v4895 = vadd.f32 %v4432, %v4837
        %v4896 = vadd.f32 %v4437, %v4842
        %v4897 = vadd.f32 %v4442, %v4847
        %v4898 = vadd.f32 %v4447, %v4852
        %v4899 = vadd.f32 %v4452, %v4857
        %v4900 = vadd.f32 %v4457, %v4862
        %v4901 = vadd.f32 %v4462, %v4867
        %v4902 = vadd.f32 %v4467, %v4872
        %v4903 = vadd.f32 %v4472, %v4877
        %v4904 = vadd.f32 %v4477, %v4882
        %v4905 = vadd.f32 %v4482, %v4887
        %s4906 = sld [smem:[#allocation5 + $0x1]]
        %v4907 = vstv %s4906
        %v4908 = vadd.f32 %v4890, %v4907
        %v4909 = vadd.f32 %v4891, %v4907
        %v4910 = vadd.f32 %v4892, %v4907
        %v4911 = vadd.f32 %v4893, %v4907
        %v4912 = vadd.f32 %v4894, %v4907
        %v4913 = vadd.f32 %v4895, %v4907
        %v4914 = vadd.f32 %v4896, %v4907
        %v4915 = vadd.f32 %v4897, %v4907
        %v4916 = vadd.f32 %v4898, %v4907
        %v4917 = vadd.f32 %v4899, %v4907
        %v4918 = vadd.f32 %v4900, %v4907
        %v4919 = vadd.f32 %v4901, %v4907
        %v4920 = vadd.f32 %v4902, %v4907
        %v4921 = vadd.f32 %v4903, %v4907
        %v4922 = vadd.f32 %v4904, %v4907
        %v4923 = vadd.f32 %v4905, %v4907
        %v4924 = vxor.u32 %v4908, 2147483648
        %v4925 = vxor.u32 %v4909, 2147483648
        %v4926 = vxor.u32 %v4910, 2147483648
        %v4927 = vxor.u32 %v4911, 2147483648
        %v4928 = vxor.u32 %v4912, 2147483648
        %v4929 = vxor.u32 %v4913, 2147483648
        %v4930 = vxor.u32 %v4914, 2147483648
        %v4931 = vxor.u32 %v4915, 2147483648
        %v4932 = vxor.u32 %v4916, 2147483648
        %v4933 = vxor.u32 %v4917, 2147483648
        %v4934 = vxor.u32 %v4918, 2147483648
        %v4935 = vxor.u32 %v4919, 2147483648
        %v4936 = vxor.u32 %v4920, 2147483648
        %v4937 = vxor.u32 %v4921, 2147483648
        %v4938 = vxor.u32 %v4922, 2147483648
        %v4939 = vxor.u32 %v4923, 2147483648
        %v4940 = vmul.f32 %v4924, 1.442695
        %v4941 = vpow.pop %v4940
        %v4942 = vmul.f32 %v4925, 1.442695
        %v4943 = vpow.pop %v4942
        %v4944 = vmul.f32 %v4926, 1.442695
        %v4945 = vpow.pop %v4944
        %v4946 = vmul.f32 %v4927, 1.442695
        %v4947 = vpow.pop %v4946
        %v4948 = vmul.f32 %v4928, 1.442695
        %v4949 = vpow.pop %v4948
        %v4950 = vmul.f32 %v4929, 1.442695
        %v4951 = vpow.pop %v4950
        %v4952 = vmul.f32 %v4930, 1.442695
        %v4953 = vpow.pop %v4952
        %v4954 = vmul.f32 %v4931, 1.442695
        %v4955 = vpow.pop %v4954
        %v4956 = vmul.f32 %v4932, 1.442695
        %v4957 = vpow.pop %v4956
        %v4958 = vmul.f32 %v4933, 1.442695
        %v4959 = vpow.pop %v4958
        %v4960 = vmul.f32 %v4934, 1.442695
        %v4961 = vpow.pop %v4960
        %v4962 = vmul.f32 %v4935, 1.442695
        %v4963 = vpow.pop %v4962
        %v4964 = vmul.f32 %v4936, 1.442695
        %v4965 = vpow.pop %v4964
        %v4966 = vmul.f32 %v4937, 1.442695
        %v4967 = vpow.pop %v4966
        %v4968 = vmul.f32 %v4938, 1.442695
        %v4969 = vpow.pop %v4968
        %v4970 = vmul.f32 %v4939, 1.442695
        %v4971 = vpow.pop %v4970
        %v4972 = vadd.f32 %v4941, 1.0
        %v4973 = vadd.f32 %v4943, 1.0
        %v4974 = vadd.f32 %v4945, 1.0
        %v4975 = vadd.f32 %v4947, 1.0
        %v4976 = vadd.f32 %v4949, 1.0
        %v4977 = vadd.f32 %v4951, 1.0
        %v4978 = vadd.f32 %v4953, 1.0
        %v4979 = vadd.f32 %v4955, 1.0
        %v4980 = vadd.f32 %v4957, 1.0
        %v4981 = vadd.f32 %v4959, 1.0
        %v4982 = vadd.f32 %v4961, 1.0
        %v4983 = vadd.f32 %v4963, 1.0
        %v4984 = vadd.f32 %v4965, 1.0
        %v4985 = vadd.f32 %v4967, 1.0
        %v4986 = vadd.f32 %v4969, 1.0
        %v4987 = vadd.f32 %v4971, 1.0
        %v4988 = vrcp.pop %v4972
        %v4989 = vmul.f32 1.0, %v4988
        %v4990 = vrcp.pop %v4973
        %v4991 = vmul.f32 1.0, %v4990
        %v4992 = vrcp.pop %v4974
        %v4993 = vmul.f32 1.0, %v4992
        %v4994 = vrcp.pop %v4975
        %v4995 = vmul.f32 1.0, %v4994
        %v4996 = vrcp.pop %v4976
        %v4997 = vmul.f32 1.0, %v4996
        %v4998 = vrcp.pop %v4977
        %v4999 = vmul.f32 1.0, %v4998
        %v5000 = vrcp.pop %v4978
        %v5001 = vmul.f32 1.0, %v5000
        %v5002 = vrcp.pop %v4979
        %v5003 = vmul.f32 1.0, %v5002
        %v5004 = vrcp.pop %v4980
        %v5005 = vmul.f32 1.0, %v5004
        %v5006 = vrcp.pop %v4981
        %v5007 = vmul.f32 1.0, %v5006
        %v5008 = vrcp.pop %v4982
        %v5009 = vmul.f32 1.0, %v5008
        %v5010 = vrcp.pop %v4983
        %v5011 = vmul.f32 1.0, %v5010
        %v5012 = vrcp.pop %v4984
        %v5013 = vmul.f32 1.0, %v5012
        %v5014 = vrcp.pop %v4985
        %v5015 = vmul.f32 1.0, %v5014
        %v5016 = vrcp.pop %v4986
        %v5017 = vmul.f32 1.0, %v5016
        %v5018 = vrcp.pop %v4987
        %v5019 = vmul.f32 1.0, %v5018
        %5020 = vst [vmem:[%s339] sm:$0xff] %v4989
        %5021 = vst [vmem:[%s339 + $0x8] sm:$0xff] %v4991
        %5022 = vst [vmem:[%s339 + $0x10] sm:$0xff] %v4993
        %5023 = vst [vmem:[%s339 + $0x18] sm:$0xff] %v4995
        %5024 = vst [vmem:[%s339 + $0x20] sm:$0xff] %v4997
        %5025 = vst [vmem:[%s339 + $0x28] sm:$0xff] %v4999
        %5026 = vst [vmem:[%s339 + $0x30] sm:$0xff] %v5001
        %5027 = vst [vmem:[%s339 + $0x38] sm:$0xff] %v5003
        %5028 = vst [vmem:[%s339 + $0x40] sm:$0xff] %v5005
        %5029 = vst [vmem:[%s339 + $0x48] sm:$0xff] %v5007
        %5030 = vst [vmem:[%s339 + $0x50] sm:$0xff] %v5009
        %5031 = vst [vmem:[%s339 + $0x58] sm:$0xff] %v5011
        %5032 = vst [vmem:[%s339 + $0x60] sm:$0xff] %v5013
        %5033 = vst [vmem:[%s339 + $0x68] sm:$0xff] %v5015
        %5034 = vst [vmem:[%s339 + $0x70] sm:$0xff] %v5017
        %5035 = vst [vmem:[%s339 + $0x78] sm:$0xff] %v5019
        %s5036 = sand.u32 %s226, 1
        %s5037 = scalar_lea.sflag [#allocation6], %s5036
        %s5038 = sand.u32 %s226, 1
        %s5039 = smul.addr %s5038, 128
        %s5040 = scalar_lea.vmem [#allocation8], %s5039
        // Predicated region
        $region61: #{attblock_v1_forward.1} parent=55 // pred_check
          %p5041 = pneg %p236
        $region62: #{attblock_v1_forward.1} parent=55 // pred_check_branch
          %5043 = sbr.rel (%p5041) target = $region64
        $region63: #{attblock_v1_forward.1} parent=55 // pred_region
          %s5045 = ssub.s32 2048, 2048
          %5046 = vsyncadd %s5037, %s5045
          %s5047 = smul.addr %s24, 16
          %s5048 = smul.addr %s5047, 128
          %s5049 = scalar_lea.hbm %s9, %s5048
          %s5050 = sshll.u32 %s5040, 4
          %s5051 = int_to_ptr.vmem [resolvable:$true] %s5050
          %5056 = dma.vmem_to_hbm [thread:$0]  %s5051, 2048, %s5049, %s5037, 128, 128, 8
        $region64: #{attblock_v1_forward.1} parent=55 // pred_fallthru
          _
      $region56: #{attblock_v1_forward.1} parent=5 // pred_fallthru
        _
      %p5057 = scmp.le.s32.totalorder 2, %s19
      // Predicated region
      $region65: #{attblock_v1_forward.1} parent=5 // pred_check
        %p5058 = pneg %p5057
      $region66: #{attblock_v1_forward.1} parent=5 // pred_check_branch
        %5060 = sbr.rel (%p5058) target = $region68
      $region67: #{attblock_v1_forward.1} parent=5 // pred_region
        %s5061 = ssub.s32 %s19, 2
        // Predicated region
        $region69: #{attblock_v1_forward.1} parent=67 // pred_check
          %p5062 = pneg %p242
        $region70: #{attblock_v1_forward.1} parent=67 // pred_check_branch
          %5064 = sbr.rel (%p5062) target = $region72
        $region71: #{attblock_v1_forward.1} parent=67 // pred_region
          %s5065 = sand.u32 %s227, 1
          %s5066 = scalar_lea.sflag [#allocation6], %s5065
          %s5067 = sand.u32 %s227, 1
          %s5068 = smul.addr %s5067, 128
          %s5069 = scalar_lea.vmem [#allocation8], %s5068
          %5070 = dma.done %s5066, 2048
        $region72: #{attblock_v1_forward.1} parent=67 // pred_fallthru
          _
      $region68: #{attblock_v1_forward.1} parent=5 // pred_fallthru
        _
    $region6: #{attblock_v1_forward.1} parent=1 // loop_footer
      %s23 = sadd.s32 1, %s19
    $region7: #{attblock_v1_forward.1} parent=1 // loop_footer_branch
      %18 = sbr.rel target = $region3
    $region8: #{attblock_v1_forward.1} parent=1 // loop_exit
      _
    %5071 = vsyncpa [#allocation6], 1
    %s5072 = scalar_lea.sflag [#allocation6], 1
    %5073 = vsyncpa %s5072, 1
    %5074 = vsyncpa [#allocation7], 1
    %s5075 = scalar_lea.sflag [#allocation7], 1
    %5076 = vsyncpa %s5075, 1

</llo_original>
